<compile_context>
chip_gen: v6e
topology: v6e:2x2x1
jax: 0.10.0
libtpu: 0.0.40
codegen_flags: <defaults>
</compile_context>

<pallas_src>
import math
import jax
import jax.numpy as jnp
from jax.experimental import pallas as pl
from jax.experimental.pallas import tpu as pltpu

# ----------------------------- configuration --------------------------------
B = 2          # batch
S = 4          # seq length (A.shape[1])
SKIP = 2       # skip
N_NODE = 16    # num_node (V)
R = 8          # num_reduce
T_RAW = 35     # raw time-series length fed to the TCN
HID = 32       # hidden_features
OUT = 16       # out_features

K_CONV = 7
STRIDE = 2
L1 = (T_RAW - K_CONV) // STRIDE + 1       # conv1 output length (15)
L2 = (L1 - K_CONV) // STRIDE + 1          # conv2 output length (5)
F_TCN = 16 * L2                           # per-node TCN feature dim (80)
STDV = 1.0 / math.sqrt(256)
NUM_P = S // SKIP
SKIP_OFF = S - NUM_P * SKIP

# padded (lane / sublane friendly) dims
T_PAD = 40
C1_PAD = 128                              # >= L1*8 = 120
F_PAD = 128                               # >= F_TCN = 80
OUT_PAD = 128                             # lane-dense output store

assert SKIP_OFF == 0, "skip path reuses kpt_bd; nonzero offset needs a sliced copy"
assert L1 * 8 <= C1_PAD and F_TCN <= F_PAD and T_RAW <= T_PAD

BR = B * R                 # rows per main timestep block (16)
SBR = SKIP * B * R         # rows per skip step block (32)


# ------------------------------ kernel body ----------------------------------
def _softplus_t(x):
    # torch.nn.functional.softplus with threshold=20
    return jnp.where(x > 20.0, x, jnp.log1p(jnp.exp(jnp.minimum(x, 20.0))))


def _make_kernel(offs):
    """Build the fused Layer kernel; `offs` maps name -> (row, rows, cols) in the param slab."""

    def P(p_ref, name):
        r, h, w = offs[name]
        return p_ref[r:r + h, 0:w]

    def kernel(x_ref, a_ref, st_ref, p_ref, out_ref, radjm, radjs, xwf):
        f32 = jnp.float32

        # ---- TCN: two tcn_blocks (conv1d + BN(eval) + ReLU; dropout = id) as
        #      zero-padded banded matmuls over all (s, b, node) rows at once.
        x = x_ref[...]                                                     # (128, 40)
        y1 = jnp.maximum(
            jnp.dot(x, P(p_ref, "w1"), preferred_element_type=f32) + P(p_ref, "b1"), 0.0)
        feat = jnp.maximum(
            jnp.dot(y1, P(p_ref, "w2"), preferred_element_type=f32) + P(p_ref, "b2"), 0.0)
        # feat: (S*B*N, F_PAD), lanes [F_TCN:] are exactly zero.

        kpt_bd = P(p_ref, "kpt_bd")                                        # (S*B*R, S*B*N)

        # ---- dim_reduce for ALL (s, b) blocks: 5 matmuls, no loops.
        rfeat = jnp.dot(kpt_bd, feat, preferred_element_type=f32)          # (64, 128)
        # feature half of the GCN-LSTM cell input, hoisted for all timesteps
        xwf[...] = jnp.dot(rfeat, P(p_ref, "wgx"), preferred_element_type=f32)      # (64, HID)

        a_main = a_ref[0:S * B * N_NODE, 0:B * N_NODE]                     # (128, 32)
        a_skip = a_ref[S * B * N_NODE:2 * S * B * N_NODE, 0:SKIP * B * N_NODE]  # (128, 64)
        afm = jnp.dot(a_main, P(p_ref, "kp_bd_main"), preferred_element_type=f32)   # (128, 16)
        radjm[...] = jnp.dot(kpt_bd, afm, preferred_element_type=f32)               # (64, 16)
        afs = jnp.dot(a_skip, P(p_ref, "kp_bd_skip"), preferred_element_type=f32)   # (128, 32)
        radjs[...] = jnp.dot(kpt_bd, afs, preferred_element_type=f32)               # (64, 32)

        wgh = P(p_ref, "wgh")                                              # (OUT, HID)

        def cell(adj_bd, xw_feat, h, c, wg, bg, avg):
            # adj_bd : (nb*R, nb*R) block-diag reduced adjacency
            # xw_feat: (nb*R, HID) precomputed feat @ Wx slice
            xw = xw_feat + jnp.dot(h, wgh, preferred_element_type=f32)     # (nb*R, HID)
            y = jnp.maximum(jnp.dot(adj_bd, xw, preferred_element_type=f32), 0.0)
            # per-block column mean over the R rows of each block (matmul form)
            cm = jnp.dot(avg, y, preferred_element_type=f32) + 1e-6
            xg = _softplus_t(y / cm)
            g = jnp.dot(xg, wg, preferred_element_type=f32) + bg           # (nb*R, 4*OUT)
            sg = jax.nn.sigmoid(g[:, 0:3 * OUT])
            it = sg[:, 0:OUT]
            ft = sg[:, OUT:2 * OUT]
            ot = sg[:, 2 * OUT:3 * OUT]
            ut = jnp.maximum(g[:, 3 * OUT:4 * OUT], 0.0)
            c_new = ft * c + it * ut
            h_new = ot * jnp.tanh(c_new)
            return h_new, c_new

        # ---- main recurrence over time (row order (b, r) within each step)
        h = st_ref[0:BR, :]
        c = st_ref[BR:2 * BR, :]
        wg_m = P(p_ref, "wg_main")
        bg_m = P(p_ref, "bg_main")
        avg_m = P(p_ref, "avg_main")
        for t in range(S):
            h, c = cell(radjm[t * BR:(t + 1) * BR, :], xwf[t * BR:(t + 1) * BR, :],
                        h, c, wg_m, bg_m, avg_m)

        # ---- skip recurrence (row order (sk, b, r); contiguous slices)
        hs = st_ref[2 * BR:2 * BR + SBR, :]
        cs = st_ref[2 * BR + SBR:2 * BR + 2 * SBR, :]
        wg_s = P(p_ref, "wg_skip")
        bg_s = P(p_ref, "bg_skip")
        avg_s = P(p_ref, "avg_skip")
        for j in range(NUM_P):
            r0 = (SKIP_OFF + j * SKIP) * BR
            hs, cs = cell(radjs[r0:r0 + SBR, :], xwf[r0:r0 + SBR, :],
                          hs, cs, wg_s, bg_s, avg_s)

        # ---- concat([h_t, h_skip per sk]) along lanes + fc (dropout eval = id)
        parts = [h] + [hs[sk * BR:(sk + 1) * BR, :] for sk in range(SKIP)]
        hcat = jnp.concatenate(parts, axis=1)                              # (BR, (SKIP+1)*OUT)
        out_ref[...] = (jnp.dot(hcat, P(p_ref, "fc_wt"), preferred_element_type=f32)
                        + P(p_ref, "fc_b"))                                # (BR, OUT_PAD)

    return kernel


# ------------------------------ parameters -----------------------------------
def init_params(key):
    def u(k, shape):
        return jax.random.uniform(k, shape, jnp.float32, -STDV, STDV)

    names_shapes = [
        ("kernel", (N_NODE, R)),
        ("conv1_w", (8, 1, 7)), ("conv1_b", (8,)),
        ("bn1_gamma", (8,)), ("bn1_beta", (8,)),
        ("conv2_w", (16, 8, 7)), ("conv2_b", (16,)),
        ("bn2_gamma", (16,)), ("bn2_beta", (16,)),
        ("gcn_kernel", (F_TCN + OUT, HID)),
        ("Wi", (HID, OUT)), ("Wf", (HID, OUT)), ("Wo", (HID, OUT)), ("Wc", (HID, OUT)),
        ("bi", (OUT, 1)), ("bf", (OUT, 1)), ("bo", (OUT, 1)), ("bc", (OUT, 1)),
        ("Wi_s", (HID, OUT)), ("Wf_s", (HID, OUT)), ("Wo_s", (HID, OUT)), ("Wc_s", (HID, OUT)),
        ("bi_s", (OUT, 1)), ("bf_s", (OUT, 1)), ("bo_s", (OUT, 1)), ("bc_s", (OUT, 1)),
        ("fc_w", (OUT, (SKIP + 1) * OUT)), ("fc_b", (OUT,)),
    ]
    keys = jax.random.split(key, len(names_shapes))
    return {name: u(k, shape) for k, (name, shape) in zip(keys, names_shapes)}


def _pack_param_slab(arrays):
    """Pack small f32 arrays into one (rows, 128) slab; returns slab + static offsets."""
    offsets = {}
    blocks = []
    row = 0
    for name, a in arrays.items():
        h, w = a.shape
        hp = ((h + 7) // 8) * 8
        blocks.append(jnp.pad(a, ((0, hp - h), (0, 128 - w))))
        offsets[name] = (row, h, w)
        row += hp
    return jnp.concatenate(blocks, axis=0), offsets


def prepare_params(p):
    """One-time parameter preprocessing (hoisted out of the forward path)."""
    eps = 1e-5
    f32 = jnp.float32

    # -- tcn_block 1: fold BN(eval), build banded conv-as-matmul weight.
    scale1 = p["bn1_gamma"] / jnp.sqrt(1.0 + eps)
    w1f = p["conv1_w"].reshape(8, K_CONV) * scale1[:, None]               # (c, k)
    b1f = p["conv1_b"] * scale1 + p["bn1_beta"]
    t_in = jnp.arange(T_RAW)[:, None]
    t1 = jnp.arange(L1)[None, :]
    k1 = t_in - STRIDE * t1
    valid1 = ((k1 >= 0) & (k1 < K_CONV)).astype(f32)
    k1c = jnp.clip(k1, 0, K_CONV - 1)
    w1_big = jnp.transpose(w1f[:, k1c] * valid1[None], (1, 2, 0)).reshape(T_RAW, L1 * 8)
    b1_big = jnp.tile(b1f, (L1,))[None, :]                                # layout t*8+c
    w1_big = jnp.pad(w1_big, ((0, T_PAD - T_RAW), (0, C1_PAD - L1 * 8)))
    b1_big = jnp.pad(b1_big, ((0, 0), (0, C1_PAD - L1 * 8)))

    # -- tcn_block 2
    scale2 = p["bn2_gamma"] / jnp.sqrt(1.0 + eps)
    w2f = p["conv2_w"] * scale2[:, None, None]                            # (co, cin, k)
    b2f = p["conv2_b"] * scale2 + p["bn2_beta"]
    tin2 = jnp.arange(L1)[:, None]
    l2 = jnp.arange(L2)[None, :]
    k2 = tin2 - STRIDE * l2
    valid2 = ((k2 >= 0) & (k2 < K_CONV)).astype(f32)
    k2c = jnp.clip(k2, 0, K_CONV - 1)
    w2g = w2f[:, :, k2c] * valid2[None, None]                             # (16, 8, L1, L2)
    w2_big = jnp.transpose(w2g, (2, 1, 0, 3)).reshape(L1 * 8, F_TCN)
    b2_big = jnp.repeat(b2f, L2)[None, :]                                 # layout co*L2+l2
    w2_big = jnp.pad(w2_big, ((0, C1_PAD - L1 * 8), (0, F_PAD - F_TCN)))
    b2_big = jnp.pad(b2_big, ((0, 0), (0, F_PAD - F_TCN)))

    # -- dim-reduce pooling kernel, block-diagonal forms
    kp = jnp.maximum(p["kernel"], 0.0)                                    # (N, R)
    kpt = kp.T                                                            # (R, N)
    kpt_bd = jnp.einsum("rn,gh->grhn", kpt, jnp.eye(S * B, dtype=f32)
                        ).reshape(S * B * R, S * B * N_NODE)              # (64, 128)
    kp_bd_main = jnp.einsum("nr,bc->bncr", kp, jnp.eye(B, dtype=f32)
                            ).reshape(B * N_NODE, B * R)                  # (32, 16)
    kp_bd_skip = jnp.einsum("nr,gh->gnhr", kp, jnp.eye(SKIP * B, dtype=f32)
                            ).reshape(SKIP * B * N_NODE, SKIP * B * R)    # (64, 32)

    # -- GCN kernel split for the implicit concat([feat, h]); feat part padded
    wgx = jnp.pad(p["gcn_kernel"][:F_TCN], ((0, F_PAD - F_TCN), (0, 0)))  # (128, HID)
    wgh = p["gcn_kernel"][F_TCN:]                                         # (OUT, HID)

    # -- fused gate weights (i|f|o|c) and biases, main + skip
    wg_main = jnp.concatenate([p["Wi"], p["Wf"], p["Wo"], p["Wc"]], axis=1)
    bg_main = jnp.concatenate([p["bi"].T, p["bf"].T, p["bo"].T, p["bc"].T], axis=1)
    wg_skip = jnp.concatenate([p["Wi_s"], p["Wf_s"], p["Wo_s"], p["Wc_s"]], axis=1)
    bg_skip = jnp.concatenate([p["bi_s"].T, p["bf_s"].T, p["bo_s"].T, p["bc_s"].T], axis=1)

    # -- fc, output lanes padded for a lane-dense store
    fc_wt = jnp.pad(p["fc_w"].T, ((0, 0), (0, OUT_PAD - OUT)))            # (48, 128)
    fc_b = jnp.pad(p["fc_b"][None, :], ((0, 0), (0, OUT_PAD - OUT)))      # (1, 128)

    # -- per-block row-averaging matrices (mean over the R rows of each block)
    avg_main = jnp.kron(jnp.eye(B, dtype=f32), jnp.full((R, R), 1.0 / R, f32))
    avg_skip = jnp.kron(jnp.eye(SKIP * B, dtype=f32), jnp.full((R, R), 1.0 / R, f32))

    slab, offs = _pack_param_slab(dict(
        w1=w1_big, b1=b1_big, w2=w2_big, b2=b2_big,
        kpt_bd=kpt_bd, kp_bd_main=kp_bd_main, kp_bd_skip=kp_bd_skip,
        wgx=wgx, wgh=wgh,
        wg_main=wg_main, bg_main=bg_main, wg_skip=wg_skip, bg_skip=bg_skip,
        fc_wt=fc_wt, fc_b=fc_b, avg_main=avg_main, avg_skip=avg_skip))

    return dict(slab=slab, offs=offs, kp=kp, kpt=kpt)


# ------------------------------- forward -------------------------------------
def layer_forward(prep, params, X, A, state, state_skip):
    f32 = jnp.float32

    # -- time-major inputs: rows ordered (s, b, node)
    x_tm = jnp.transpose(X, (1, 0, 2, 3)).reshape(S * B * N_NODE, T_RAW).astype(f32)
    x_pad = jnp.pad(x_tm, ((0, 0), (0, T_PAD - T_RAW)))

    a_tm = jnp.transpose(A, (1, 0, 2, 3)).astype(f32)                     # (S, B, N, N)
    # per-timestep block-diagonal A across batch (main layout)
    a_main_bd = jnp.einsum("sbij,bc->sbicj", a_tm, jnp.eye(B, dtype=f32)
                           ).reshape(S * B * N_NODE, B * N_NODE)          # (128, 32)
    # per-skip-step block-diagonal A across (sk, b) (skip layout)
    a_sk = a_tm[SKIP_OFF:].reshape(NUM_P, SKIP * B, N_NODE, N_NODE)
    a_skip_bd = jnp.einsum("jgxy,gh->jgxhy", a_sk, jnp.eye(SKIP * B, dtype=f32)
                           ).reshape(NUM_P * SKIP * B * N_NODE, SKIP * B * N_NODE)  # (128, 64)
    a_slab = jnp.concatenate(
        [jnp.pad(a_main_bd, ((0, 0), (0, SKIP * B * N_NODE - B * N_NODE))), a_skip_bd],
        axis=0)                                                           # (256, 64)

    # -- states packed into one slab; skip rows reordered (b, sk, r) -> (sk, b, r)
    h0 = state[0].reshape(B * R, OUT).astype(f32)
    c0 = state[1].reshape(B * R, OUT).astype(f32)
    h0s = jnp.transpose(state_skip[0].reshape(B, SKIP, R, OUT), (1, 0, 2, 3)
                        ).reshape(SKIP * B * R, OUT).astype(f32)
    c0s = jnp.transpose(state_skip[1].reshape(B, SKIP, R, OUT), (1, 0, 2, 3)
                        ).reshape(SKIP * B * R, OUT).astype(f32)
    st_slab = jnp.concatenate([h0, c0, h0s, c0s], axis=0)                 # (96, 16)

    kernel = _make_kernel(prep["offs"])
    out = pl.pallas_call(
        kernel,
        out_shape=jax.ShapeDtypeStruct((B * R, OUT_PAD), jnp.float32),
        in_specs=[pl.BlockSpec(memory_space=pltpu.MemorySpace.VMEM)] * 4,
        out_specs=pl.BlockSpec(memory_space=pltpu.MemorySpace.VMEM),
        scratch_shapes=[
            pltpu.VMEM((S * B * R, B * R), jnp.float32),                  # radj main layout
            pltpu.VMEM((NUM_P * SKIP * B * R, SKIP * B * R), jnp.float32),  # radj skip layout
            pltpu.VMEM((S * B * R, HID), jnp.float32),                    # feat @ Wx, all steps
        ],
    )(x_pad, a_slab, st_slab, prep["slab"])

    h_all = out[:, :OUT].reshape(B, R, OUT)

    # --- dim_reduce regularisation losses (parameter-only scalar glue) ---
    kernel_p = params["kernel"]
    kp = prep["kp"]
    gram = prep["kpt"] @ kp
    diag = jnp.diag(gram)
    ortho_loss = 0.2 * jnp.sum(jnp.square(gram - jnp.diag(diag)))
    var_loss = 0.3 * (jnp.sum(jnp.square(diag - jnp.mean(diag))) / (R - 1))
    neg_loss = 0.1 * jnp.sum(jnp.maximum(1e-6 - kernel_p, 0.0))
    l1_loss = 0.05 * jnp.sum(jnp.abs(kp))
    loss = S * (ortho_loss + var_loss + neg_loss + l1_loss)

    return h_all, loss


@jax.jit
def forward(params, X, A, state, state_skip):
    prep = prepare_params(params)
    return layer_forward(prep, params, X, A, state, state_skip)


# ---------------------------------- main --------------------------------------
if __name__ == "__main__":
    key = jax.random.PRNGKey(0)
    k_p, k_x, k_a = jax.random.split(key, 3)
    params = init_params(k_p)

    X = jax.random.normal(k_x, (B, S, N_NODE, T_RAW), jnp.float32)
    A = jax.random.normal(k_a, (B, S, N_NODE, N_NODE), jnp.float32)
    state = (jnp.zeros((B, R, OUT), jnp.float32),
             jnp.zeros((B, R, OUT), jnp.float32))
    state_skip = (jnp.zeros((B * SKIP, R, OUT), jnp.float32),
                  jnp.zeros((B * SKIP, R, OUT), jnp.float32))

    out, loss = forward(params, X, A, state, state_skip)
    out = jax.block_until_ready(out)
    loss = jax.block_until_ready(loss)
    assert out.shape == (B, R, OUT)
    assert bool(jnp.all(jnp.isfinite(out))) and bool(jnp.isfinite(loss))
    print("KERNEL_OK")
</pallas_src>

<mosaic_0001>
module attributes {stable_mosaic.version = 11 : i64} {
  func.func @kernel(%arg0: memref<128x40xf32, #tpu.memory_space<vmem>>, %arg1: memref<256x64xf32, #tpu.memory_space<vmem>>, %arg2: memref<96x16xf32, #tpu.memory_space<vmem>>, %arg3: memref<672x128xf32, #tpu.memory_space<vmem>>, %arg4: memref<16x128xf32, #tpu.memory_space<vmem>>, %arg5: memref<64x16xf32, #tpu.memory_space<vmem>>, %arg6: memref<64x32xf32, #tpu.memory_space<vmem>>, %arg7: memref<64x32xf32, #tpu.memory_space<vmem>>) attributes {dimension_semantics = [], scalar_prefetch = 0 : i64, scratch_operands = 3 : i64, tpu.core_type = #tpu.core_type<tc>} {
    %c0 = arith.constant 0 : index
    %c0_0 = arith.constant 0 : index
    %0 = vector.load %arg0[%c0, %c0_0] : memref<128x40xf32, #tpu.memory_space<vmem>>, vector<128x40xf32>
    %c0_1 = arith.constant 0 : index
    %c0_2 = arith.constant 0 : index
    %1 = vector.load %arg3[%c0_1, %c0_2] : memref<672x128xf32, #tpu.memory_space<vmem>>, vector<40x128xf32>
    %cst = arith.constant dense<0.000000e+00> : vector<128x128xf32>
    %2 = tpu.matmul %0, %1, %cst {dimension_numbers = #tpu.dot_dimension_numbers<[1], [0], [0], [1], [0, 0, 1, 1], [], []>} : vector<128x40xf32>, vector<40x128xf32>, vector<128x128xf32> -> vector<128x128xf32>
    %c40 = arith.constant 40 : index
    %c0_3 = arith.constant 0 : index
    %3 = vector.load %arg3[%c40, %c0_3] : memref<672x128xf32, #tpu.memory_space<vmem>>, vector<1x128xf32>
    %4 = vector.broadcast %3 : vector<1x128xf32> to vector<128x128xf32>
    %5 = arith.addf %2, %4 : vector<128x128xf32>
    %cst_4 = arith.constant 0.000000e+00 : f32
    %6 = vector.broadcast %cst_4 : f32 to vector<128x128xf32>
    %7 = arith.maximumf %5, %6 : vector<128x128xf32>
    %c48 = arith.constant 48 : index
    %c0_5 = arith.constant 0 : index
    %8 = vector.load %arg3[%c48, %c0_5] : memref<672x128xf32, #tpu.memory_space<vmem>>, vector<128x128xf32>
    %cst_6 = arith.constant dense<0.000000e+00> : vector<128x128xf32>
    %9 = tpu.matmul %7, %8, %cst_6 {dimension_numbers = #tpu.dot_dimension_numbers<[1], [0], [0], [1], [0, 0, 1, 1], [], []>} : vector<128x128xf32>, vector<128x128xf32>, vector<128x128xf32> -> vector<128x128xf32>
    %c176 = arith.constant 176 : index
    %c0_7 = arith.constant 0 : index
    %10 = vector.load %arg3[%c176, %c0_7] : memref<672x128xf32, #tpu.memory_space<vmem>>, vector<1x128xf32>
    %11 = vector.broadcast %10 : vector<1x128xf32> to vector<128x128xf32>
    %12 = arith.addf %9, %11 : vector<128x128xf32>
    %cst_8 = arith.constant 0.000000e+00 : f32
    %13 = vector.broadcast %cst_8 : f32 to vector<128x128xf32>
    %14 = arith.maximumf %12, %13 : vector<128x128xf32>
    %c184 = arith.constant 184 : index
    %c0_9 = arith.constant 0 : index
    %15 = vector.load %arg3[%c184, %c0_9] : memref<672x128xf32, #tpu.memory_space<vmem>>, vector<64x128xf32>
    %cst_10 = arith.constant dense<0.000000e+00> : vector<64x128xf32>
    %16 = tpu.matmul %15, %14, %cst_10 {dimension_numbers = #tpu.dot_dimension_numbers<[1], [0], [0], [1], [0, 0, 1, 1], [], []>} : vector<64x128xf32>, vector<128x128xf32>, vector<64x128xf32> -> vector<64x128xf32>
    %c344 = arith.constant 344 : index
    %c0_11 = arith.constant 0 : index
    %17 = vector.load %arg3[%c344, %c0_11] : memref<672x128xf32, #tpu.memory_space<vmem>>, vector<128x32xf32>
    %cst_12 = arith.constant dense<0.000000e+00> : vector<64x32xf32>
    %18 = tpu.matmul %16, %17, %cst_12 {dimension_numbers = #tpu.dot_dimension_numbers<[1], [0], [0], [1], [0, 0, 1, 1], [], []>} : vector<64x128xf32>, vector<128x32xf32>, vector<64x32xf32> -> vector<64x32xf32>
    %c0_13 = arith.constant 0 : index
    %c0_14 = arith.constant 0 : index
    %19 = vector.load %arg7[%c0_13, %c0_14] : memref<64x32xf32, #tpu.memory_space<vmem>>, vector<64x32xf32>
    tpu.vector_store %arg7[%c0_13, %c0_14], %18 {strides = array<i32>} : memref<64x32xf32, #tpu.memory_space<vmem>>, vector<64x32xf32>,
    %c0_15 = arith.constant 0 : index
    %c0_16 = arith.constant 0 : index
    %20 = vector.load %arg1[%c0_15, %c0_16] : memref<256x64xf32, #tpu.memory_space<vmem>>, vector<128x32xf32>
    %c128 = arith.constant 128 : index
    %c0_17 = arith.constant 0 : index
    %21 = vector.load %arg1[%c128, %c0_17] : memref<256x64xf32, #tpu.memory_space<vmem>>, vector<128x64xf32>
    %c248 = arith.constant 248 : index
    %c0_18 = arith.constant 0 : index
    %22 = vector.load %arg3[%c248, %c0_18] : memref<672x128xf32, #tpu.memory_space<vmem>>, vector<32x16xf32>
    %cst_19 = arith.constant dense<0.000000e+00> : vector<128x16xf32>
    %23 = tpu.matmul %20, %22, %cst_19 {dimension_numbers = #tpu.dot_dimension_numbers<[1], [0], [0], [1], [0, 0, 1, 1], [], []>} : vector<128x32xf32>, vector<32x16xf32>, vector<128x16xf32> -> vector<128x16xf32>
    %cst_20 = arith.constant dense<0.000000e+00> : vector<64x16xf32>
    %24 = tpu.matmul %15, %23, %cst_20 {dimension_numbers = #tpu.dot_dimension_numbers<[1], [0], [0], [1], [0, 0, 1, 1], [], []>} : vector<64x128xf32>, vector<128x16xf32>, vector<64x16xf32> -> vector<64x16xf32>
    %c0_21 = arith.constant 0 : index
    %c0_22 = arith.constant 0 : index
    %25 = vector.load %arg5[%c0_21, %c0_22] : memref<64x16xf32, #tpu.memory_space<vmem>>, vector<64x16xf32>
    tpu.vector_store %arg5[%c0_21, %c0_22], %24 {strides = array<i32>} : memref<64x16xf32, #tpu.memory_space<vmem>>, vector<64x16xf32>,
    %c280 = arith.constant 280 : index
    %c0_23 = arith.constant 0 : index
    %26 = vector.load %arg3[%c280, %c0_23] : memref<672x128xf32, #tpu.memory_space<vmem>>, vector<64x32xf32>
    %cst_24 = arith.constant dense<0.000000e+00> : vector<128x32xf32>
    %27 = tpu.matmul %21, %26, %cst_24 {dimension_numbers = #tpu.dot_dimension_numbers<[1], [0], [0], [1], [0, 0, 1, 1], [], []>} : vector<128x64xf32>, vector<64x32xf32>, vector<128x32xf32> -> vector<128x32xf32>
    %cst_25 = arith.constant dense<0.000000e+00> : vector<64x32xf32>
    %28 = tpu.matmul %15, %27, %cst_25 {dimension_numbers = #tpu.dot_dimension_numbers<[1], [0], [0], [1], [0, 0, 1, 1], [], []>} : vector<64x128xf32>, vector<128x32xf32>, vector<64x32xf32> -> vector<64x32xf32>
    %c0_26 = arith.constant 0 : index
    %c0_27 = arith.constant 0 : index
    %29 = vector.load %arg6[%c0_26, %c0_27] : memref<64x32xf32, #tpu.memory_space<vmem>>, vector<64x32xf32>
    tpu.vector_store %arg6[%c0_26, %c0_27], %28 {strides = array<i32>} : memref<64x32xf32, #tpu.memory_space<vmem>>, vector<64x32xf32>,
    %c472 = arith.constant 472 : index
    %c0_28 = arith.constant 0 : index
    %30 = vector.load %arg3[%c472, %c0_28] : memref<672x128xf32, #tpu.memory_space<vmem>>, vector<16x32xf32>
    %c0_29 = arith.constant 0 : index
    %c0_30 = arith.constant 0 : index
    %31 = vector.load %arg2[%c0_29, %c0_30] : memref<96x16xf32, #tpu.memory_space<vmem>>, vector<16x16xf32>
    %c16 = arith.constant 16 : index
    %c0_31 = arith.constant 0 : index
    %32 = vector.load %arg2[%c16, %c0_31] : memref<96x16xf32, #tpu.memory_space<vmem>>, vector<16x16xf32>
    %c488 = arith.constant 488 : index
    %c0_32 = arith.constant 0 : index
    %33 = vector.load %arg3[%c488, %c0_32] : memref<672x128xf32, #tpu.memory_space<vmem>>, vector<32x64xf32>
    %c520 = arith.constant 520 : index
    %c0_33 = arith.constant 0 : index
    %34 = vector.load %arg3[%c520, %c0_33] : memref<672x128xf32, #tpu.memory_space<vmem>>, vector<1x64xf32>
    %c624 = arith.constant 624 : index
    %c0_34 = arith.constant 0 : index
    %35 = vector.load %arg3[%c624, %c0_34] : memref<672x128xf32, #tpu.memory_space<vmem>>, vector<16x16xf32>
    %c0_35 = arith.constant 0 : index
    %c0_36 = arith.constant 0 : index
    %36 = vector.load %arg5[%c0_35, %c0_36] : memref<64x16xf32, #tpu.memory_space<vmem>>, vector<16x16xf32>
    %c0_37 = arith.constant 0 : index
    %c0_38 = arith.constant 0 : index
    %37 = vector.load %arg7[%c0_37, %c0_38] : memref<64x32xf32, #tpu.memory_space<vmem>>, vector<16x32xf32>
    %cst_39 = arith.constant dense<0.000000e+00> : vector<16x32xf32>
    %38 = tpu.matmul %31, %30, %cst_39 {dimension_numbers = #tpu.dot_dimension_numbers<[1], [0], [0], [1], [0, 0, 1, 1], [], []>} : vector<16x16xf32>, vector<16x32xf32>, vector<16x32xf32> -> vector<16x32xf32>
    %39 = arith.addf %37, %38 : vector<16x32xf32>
    %cst_40 = arith.constant dense<0.000000e+00> : vector<16x32xf32>
    %40 = tpu.matmul %36, %39, %cst_40 {dimension_numbers = #tpu.dot_dimension_numbers<[1], [0], [0], [1], [0, 0, 1, 1], [], []>} : vector<16x16xf32>, vector<16x32xf32>, vector<16x32xf32> -> vector<16x32xf32>
    %cst_41 = arith.constant 0.000000e+00 : f32
    %41 = vector.broadcast %cst_41 : f32 to vector<16x32xf32>
    %42 = arith.maximumf %40, %41 : vector<16x32xf32>
    %cst_42 = arith.constant dense<0.000000e+00> : vector<16x32xf32>
    %43 = tpu.matmul %35, %42, %cst_42 {dimension_numbers = #tpu.dot_dimension_numbers<[1], [0], [0], [1], [0, 0, 1, 1], [], []>} : vector<16x16xf32>, vector<16x32xf32>, vector<16x32xf32> -> vector<16x32xf32>
    %cst_43 = arith.constant 9.99999997E-7 : f32
    %44 = vector.broadcast %cst_43 : f32 to vector<16x32xf32>
    %45 = arith.addf %43, %44 : vector<16x32xf32>
    %46 = arith.divf %42, %45 : vector<16x32xf32>
    %cst_44 = arith.constant 2.000000e+01 : f32
    %47 = vector.broadcast %cst_44 : f32 to vector<16x32xf32>
    %48 = arith.cmpf ogt, %46, %47 : vector<16x32xf32>
    %cst_45 = arith.constant 2.000000e+01 : f32
    %49 = vector.broadcast %cst_45 : f32 to vector<16x32xf32>
    %50 = arith.minimumf %46, %49 : vector<16x32xf32>
    %51 = math.exp %50 : vector<16x32xf32>
    %52 = math.log1p %51 : vector<16x32xf32>
    %53 = arith.select %48, %46, %52 : vector<16x32xi1>, vector<16x32xf32>
    %cst_46 = arith.constant dense<0.000000e+00> : vector<16x64xf32>
    %54 = tpu.matmul %53, %33, %cst_46 {dimension_numbers = #tpu.dot_dimension_numbers<[1], [0], [0], [1], [0, 0, 1, 1], [], []>} : vector<16x32xf32>, vector<32x64xf32>, vector<16x64xf32> -> vector<16x64xf32>
    %55 = vector.broadcast %34 : vector<1x64xf32> to vector<16x64xf32>
    %56 = arith.addf %54, %55 : vector<16x64xf32>
    %57 = vector.extract_strided_slice %56 {offsets = [0, 0], sizes = [16, 48], strides = [1, 1]} : vector<16x64xf32> to vector<16x48xf32>
    %58 = arith.negf %57 : vector<16x48xf32>
    %59 = math.exp %58 : vector<16x48xf32>
    %cst_47 = arith.constant 1.000000e+00 : f32
    %60 = vector.broadcast %cst_47 : f32 to vector<16x48xf32>
    %61 = arith.addf %60, %59 : vector<16x48xf32>
    %62 = arith.divf %60, %61 : vector<16x48xf32>
    %63 = vector.extract_strided_slice %62 {offsets = [0, 0], sizes = [16, 16], strides = [1, 1]} : vector<16x48xf32> to vector<16x16xf32>
    %64 = vector.extract_strided_slice %62 {offsets = [0, 16], sizes = [16, 16], strides = [1, 1]} : vector<16x48xf32> to vector<16x16xf32>
    %65 = vector.extract_strided_slice %62 {offsets = [0, 32], sizes = [16, 16], strides = [1, 1]} : vector<16x48xf32> to vector<16x16xf32>
    %66 = vector.extract_strided_slice %56 {offsets = [0, 48], sizes = [16, 16], strides = [1, 1]} : vector<16x64xf32> to vector<16x16xf32>
    %cst_48 = arith.constant 0.000000e+00 : f32
    %67 = vector.broadcast %cst_48 : f32 to vector<16x16xf32>
    %68 = arith.maximumf %66, %67 : vector<16x16xf32>
    %69 = arith.mulf %64, %32 : vector<16x16xf32>
    %70 = arith.mulf %63, %68 : vector<16x16xf32>
    %71 = arith.addf %69, %70 : vector<16x16xf32>
    %72 = math.tanh %71 : vector<16x16xf32>
    %73 = arith.mulf %65, %72 : vector<16x16xf32>
    %c16_49 = arith.constant 16 : index
    %c0_50 = arith.constant 0 : index
    %74 = vector.load %arg5[%c16_49, %c0_50] : memref<64x16xf32, #tpu.memory_space<vmem>>, vector<16x16xf32>
    %c16_51 = arith.constant 16 : index
    %c0_52 = arith.constant 0 : index
    %75 = vector.load %arg7[%c16_51, %c0_52] : memref<64x32xf32, #tpu.memory_space<vmem>>, vector<16x32xf32>
    %cst_53 = arith.constant dense<0.000000e+00> : vector<16x32xf32>
    %76 = tpu.matmul %73, %30, %cst_53 {dimension_numbers = #tpu.dot_dimension_numbers<[1], [0], [0], [1], [0, 0, 1, 1], [], []>} : vector<16x16xf32>, vector<16x32xf32>, vector<16x32xf32> -> vector<16x32xf32>
    %77 = arith.addf %75, %76 : vector<16x32xf32>
    %cst_54 = arith.constant dense<0.000000e+00> : vector<16x32xf32>
    %78 = tpu.matmul %74, %77, %cst_54 {dimension_numbers = #tpu.dot_dimension_numbers<[1], [0], [0], [1], [0, 0, 1, 1], [], []>} : vector<16x16xf32>, vector<16x32xf32>, vector<16x32xf32> -> vector<16x32xf32>
    %cst_55 = arith.constant 0.000000e+00 : f32
    %79 = vector.broadcast %cst_55 : f32 to vector<16x32xf32>
    %80 = arith.maximumf %78, %79 : vector<16x32xf32>
    %cst_56 = arith.constant dense<0.000000e+00> : vector<16x32xf32>
    %81 = tpu.matmul %35, %80, %cst_56 {dimension_numbers = #tpu.dot_dimension_numbers<[1], [0], [0], [1], [0, 0, 1, 1], [], []>} : vector<16x16xf32>, vector<16x32xf32>, vector<16x32xf32> -> vector<16x32xf32>
    %cst_57 = arith.constant 9.99999997E-7 : f32
    %82 = vector.broadcast %cst_57 : f32 to vector<16x32xf32>
    %83 = arith.addf %81, %82 : vector<16x32xf32>
    %84 = arith.divf %80, %83 : vector<16x32xf32>
    %cst_58 = arith.constant 2.000000e+01 : f32
    %85 = vector.broadcast %cst_58 : f32 to vector<16x32xf32>
    %86 = arith.cmpf ogt, %84, %85 : vector<16x32xf32>
    %cst_59 = arith.constant 2.000000e+01 : f32
    %87 = vector.broadcast %cst_59 : f32 to vector<16x32xf32>
    %88 = arith.minimumf %84, %87 : vector<16x32xf32>
    %89 = math.exp %88 : vector<16x32xf32>
    %90 = math.log1p %89 : vector<16x32xf32>
    %91 = arith.select %86, %84, %90 : vector<16x32xi1>, vector<16x32xf32>
    %cst_60 = arith.constant dense<0.000000e+00> : vector<16x64xf32>
    %92 = tpu.matmul %91, %33, %cst_60 {dimension_numbers = #tpu.dot_dimension_numbers<[1], [0], [0], [1], [0, 0, 1, 1], [], []>} : vector<16x32xf32>, vector<32x64xf32>, vector<16x64xf32> -> vector<16x64xf32>
    %93 = vector.broadcast %34 : vector<1x64xf32> to vector<16x64xf32>
    %94 = arith.addf %92, %93 : vector<16x64xf32>
    %95 = vector.extract_strided_slice %94 {offsets = [0, 0], sizes = [16, 48], strides = [1, 1]} : vector<16x64xf32> to vector<16x48xf32>
    %96 = arith.negf %95 : vector<16x48xf32>
    %97 = math.exp %96 : vector<16x48xf32>
    %cst_61 = arith.constant 1.000000e+00 : f32
    %98 = vector.broadcast %cst_61 : f32 to vector<16x48xf32>
    %99 = arith.addf %98, %97 : vector<16x48xf32>
    %100 = arith.divf %98, %99 : vector<16x48xf32>
    %101 = vector.extract_strided_slice %100 {offsets = [0, 0], sizes = [16, 16], strides = [1, 1]} : vector<16x48xf32> to vector<16x16xf32>
    %102 = vector.extract_strided_slice %100 {offsets = [0, 16], sizes = [16, 16], strides = [1, 1]} : vector<16x48xf32> to vector<16x16xf32>
    %103 = vector.extract_strided_slice %100 {offsets = [0, 32], sizes = [16, 16], strides = [1, 1]} : vector<16x48xf32> to vector<16x16xf32>
    %104 = vector.extract_strided_slice %94 {offsets = [0, 48], sizes = [16, 16], strides = [1, 1]} : vector<16x64xf32> to vector<16x16xf32>
    %cst_62 = arith.constant 0.000000e+00 : f32
    %105 = vector.broadcast %cst_62 : f32 to vector<16x16xf32>
    %106 = arith.maximumf %104, %105 : vector<16x16xf32>
    %107 = arith.mulf %102, %71 : vector<16x16xf32>
    %108 = arith.mulf %101, %106 : vector<16x16xf32>
    %109 = arith.addf %107, %108 : vector<16x16xf32>
    %110 = math.tanh %109 : vector<16x16xf32>
    %111 = arith.mulf %103, %110 : vector<16x16xf32>
    %c32 = arith.constant 32 : index
    %c0_63 = arith.constant 0 : index
    %112 = vector.load %arg5[%c32, %c0_63] : memref<64x16xf32, #tpu.memory_space<vmem>>, vector<16x16xf32>
    %c32_64 = arith.constant 32 : index
    %c0_65 = arith.constant 0 : index
    %113 = vector.load %arg7[%c32_64, %c0_65] : memref<64x32xf32, #tpu.memory_space<vmem>>, vector<16x32xf32>
    %cst_66 = arith.constant dense<0.000000e+00> : vector<16x32xf32>
    %114 = tpu.matmul %111, %30, %cst_66 {dimension_numbers = #tpu.dot_dimension_numbers<[1], [0], [0], [1], [0, 0, 1, 1], [], []>} : vector<16x16xf32>, vector<16x32xf32>, vector<16x32xf32> -> vector<16x32xf32>
    %115 = arith.addf %113, %114 : vector<16x32xf32>
    %cst_67 = arith.constant dense<0.000000e+00> : vector<16x32xf32>
    %116 = tpu.matmul %112, %115, %cst_67 {dimension_numbers = #tpu.dot_dimension_numbers<[1], [0], [0], [1], [0, 0, 1, 1], [], []>} : vector<16x16xf32>, vector<16x32xf32>, vector<16x32xf32> -> vector<16x32xf32>
    %cst_68 = arith.constant 0.000000e+00 : f32
    %117 = vector.broadcast %cst_68 : f32 to vector<16x32xf32>
    %118 = arith.maximumf %116, %117 : vector<16x32xf32>
    %cst_69 = arith.constant dense<0.000000e+00> : vector<16x32xf32>
    %119 = tpu.matmul %35, %118, %cst_69 {dimension_numbers = #tpu.dot_dimension_numbers<[1], [0], [0], [1], [0, 0, 1, 1], [], []>} : vector<16x16xf32>, vector<16x32xf32>, vector<16x32xf32> -> vector<16x32xf32>
    %cst_70 = arith.constant 9.99999997E-7 : f32
    %120 = vector.broadcast %cst_70 : f32 to vector<16x32xf32>
    %121 = arith.addf %119, %120 : vector<16x32xf32>
    %122 = arith.divf %118, %121 : vector<16x32xf32>
    %cst_71 = arith.constant 2.000000e+01 : f32
    %123 = vector.broadcast %cst_71 : f32 to vector<16x32xf32>
    %124 = arith.cmpf ogt, %122, %123 : vector<16x32xf32>
    %cst_72 = arith.constant 2.000000e+01 : f32
    %125 = vector.broadcast %cst_72 : f32 to vector<16x32xf32>
    %126 = arith.minimumf %122, %125 : vector<16x32xf32>
    %127 = math.exp %126 : vector<16x32xf32>
    %128 = math.log1p %127 : vector<16x32xf32>
    %129 = arith.select %124, %122, %128 : vector<16x32xi1>, vector<16x32xf32>
    %cst_73 = arith.constant dense<0.000000e+00> : vector<16x64xf32>
    %130 = tpu.matmul %129, %33, %cst_73 {dimension_numbers = #tpu.dot_dimension_numbers<[1], [0], [0], [1], [0, 0, 1, 1], [], []>} : vector<16x32xf32>, vector<32x64xf32>, vector<16x64xf32> -> vector<16x64xf32>
    %131 = vector.broadcast %34 : vector<1x64xf32> to vector<16x64xf32>
    %132 = arith.addf %130, %131 : vector<16x64xf32>
    %133 = vector.extract_strided_slice %132 {offsets = [0, 0], sizes = [16, 48], strides = [1, 1]} : vector<16x64xf32> to vector<16x48xf32>
    %134 = arith.negf %133 : vector<16x48xf32>
    %135 = math.exp %134 : vector<16x48xf32>
    %cst_74 = arith.constant 1.000000e+00 : f32
    %136 = vector.broadcast %cst_74 : f32 to vector<16x48xf32>
    %137 = arith.addf %136, %135 : vector<16x48xf32>
    %138 = arith.divf %136, %137 : vector<16x48xf32>
    %139 = vector.extract_strided_slice %138 {offsets = [0, 0], sizes = [16, 16], strides = [1, 1]} : vector<16x48xf32> to vector<16x16xf32>
    %140 = vector.extract_strided_slice %138 {offsets = [0, 16], sizes = [16, 16], strides = [1, 1]} : vector<16x48xf32> to vector<16x16xf32>
    %141 = vector.extract_strided_slice %138 {offsets = [0, 32], sizes = [16, 16], strides = [1, 1]} : vector<16x48xf32> to vector<16x16xf32>
    %142 = vector.extract_strided_slice %132 {offsets = [0, 48], sizes = [16, 16], strides = [1, 1]} : vector<16x64xf32> to vector<16x16xf32>
    %cst_75 = arith.constant 0.000000e+00 : f32
    %143 = vector.broadcast %cst_75 : f32 to vector<16x16xf32>
    %144 = arith.maximumf %142, %143 : vector<16x16xf32>
    %145 = arith.mulf %140, %109 : vector<16x16xf32>
    %146 = arith.mulf %139, %144 : vector<16x16xf32>
    %147 = arith.addf %145, %146 : vector<16x16xf32>
    %148 = math.tanh %147 : vector<16x16xf32>
    %149 = arith.mulf %141, %148 : vector<16x16xf32>
    %c48_76 = arith.constant 48 : index
    %c0_77 = arith.constant 0 : index
    %150 = vector.load %arg5[%c48_76, %c0_77] : memref<64x16xf32, #tpu.memory_space<vmem>>, vector<16x16xf32>
    %c48_78 = arith.constant 48 : index
    %c0_79 = arith.constant 0 : index
    %151 = vector.load %arg7[%c48_78, %c0_79] : memref<64x32xf32, #tpu.memory_space<vmem>>, vector<16x32xf32>
    %cst_80 = arith.constant dense<0.000000e+00> : vector<16x32xf32>
    %152 = tpu.matmul %149, %30, %cst_80 {dimension_numbers = #tpu.dot_dimension_numbers<[1], [0], [0], [1], [0, 0, 1, 1], [], []>} : vector<16x16xf32>, vector<16x32xf32>, vector<16x32xf32> -> vector<16x32xf32>
    %153 = arith.addf %151, %152 : vector<16x32xf32>
    %cst_81 = arith.constant dense<0.000000e+00> : vector<16x32xf32>
    %154 = tpu.matmul %150, %153, %cst_81 {dimension_numbers = #tpu.dot_dimension_numbers<[1], [0], [0], [1], [0, 0, 1, 1], [], []>} : vector<16x16xf32>, vector<16x32xf32>, vector<16x32xf32> -> vector<16x32xf32>
    %cst_82 = arith.constant 0.000000e+00 : f32
    %155 = vector.broadcast %cst_82 : f32 to vector<16x32xf32>
    %156 = arith.maximumf %154, %155 : vector<16x32xf32>
    %cst_83 = arith.constant dense<0.000000e+00> : vector<16x32xf32>
    %157 = tpu.matmul %35, %156, %cst_83 {dimension_numbers = #tpu.dot_dimension_numbers<[1], [0], [0], [1], [0, 0, 1, 1], [], []>} : vector<16x16xf32>, vector<16x32xf32>, vector<16x32xf32> -> vector<16x32xf32>
    %cst_84 = arith.constant 9.99999997E-7 : f32
    %158 = vector.broadcast %cst_84 : f32 to vector<16x32xf32>
    %159 = arith.addf %157, %158 : vector<16x32xf32>
    %160 = arith.divf %156, %159 : vector<16x32xf32>
    %cst_85 = arith.constant 2.000000e+01 : f32
    %161 = vector.broadcast %cst_85 : f32 to vector<16x32xf32>
    %162 = arith.cmpf ogt, %160, %161 : vector<16x32xf32>
    %cst_86 = arith.constant 2.000000e+01 : f32
    %163 = vector.broadcast %cst_86 : f32 to vector<16x32xf32>
    %164 = arith.minimumf %160, %163 : vector<16x32xf32>
    %165 = math.exp %164 : vector<16x32xf32>
    %166 = math.log1p %165 : vector<16x32xf32>
    %167 = arith.select %162, %160, %166 : vector<16x32xi1>, vector<16x32xf32>
    %cst_87 = arith.constant dense<0.000000e+00> : vector<16x64xf32>
    %168 = tpu.matmul %167, %33, %cst_87 {dimension_numbers = #tpu.dot_dimension_numbers<[1], [0], [0], [1], [0, 0, 1, 1], [], []>} : vector<16x32xf32>, vector<32x64xf32>, vector<16x64xf32> -> vector<16x64xf32>
    %169 = vector.broadcast %34 : vector<1x64xf32> to vector<16x64xf32>
    %170 = arith.addf %168, %169 : vector<16x64xf32>
    %171 = vector.extract_strided_slice %170 {offsets = [0, 0], sizes = [16, 48], strides = [1, 1]} : vector<16x64xf32> to vector<16x48xf32>
    %172 = arith.negf %171 : vector<16x48xf32>
    %173 = math.exp %172 : vector<16x48xf32>
    %cst_88 = arith.constant 1.000000e+00 : f32
    %174 = vector.broadcast %cst_88 : f32 to vector<16x48xf32>
    %175 = arith.addf %174, %173 : vector<16x48xf32>
    %176 = arith.divf %174, %175 : vector<16x48xf32>
    %177 = vector.extract_strided_slice %176 {offsets = [0, 0], sizes = [16, 16], strides = [1, 1]} : vector<16x48xf32> to vector<16x16xf32>
    %178 = vector.extract_strided_slice %176 {offsets = [0, 16], sizes = [16, 16], strides = [1, 1]} : vector<16x48xf32> to vector<16x16xf32>
    %179 = vector.extract_strided_slice %176 {offsets = [0, 32], sizes = [16, 16], strides = [1, 1]} : vector<16x48xf32> to vector<16x16xf32>
    %180 = vector.extract_strided_slice %170 {offsets = [0, 48], sizes = [16, 16], strides = [1, 1]} : vector<16x64xf32> to vector<16x16xf32>
    %cst_89 = arith.constant 0.000000e+00 : f32
    %181 = vector.broadcast %cst_89 : f32 to vector<16x16xf32>
    %182 = arith.maximumf %180, %181 : vector<16x16xf32>
    %183 = arith.mulf %178, %147 : vector<16x16xf32>
    %184 = arith.mulf %177, %182 : vector<16x16xf32>
    %185 = arith.addf %183, %184 : vector<16x16xf32>
    %186 = math.tanh %185 : vector<16x16xf32>
    %187 = arith.mulf %179, %186 : vector<16x16xf32>
    %c32_90 = arith.constant 32 : index
    %c0_91 = arith.constant 0 : index
    %188 = vector.load %arg2[%c32_90, %c0_91] : memref<96x16xf32, #tpu.memory_space<vmem>>, vector<32x16xf32>
    %c64 = arith.constant 64 : index
    %c0_92 = arith.constant 0 : index
    %189 = vector.load %arg2[%c64, %c0_92] : memref<96x16xf32, #tpu.memory_space<vmem>>, vector<32x16xf32>
    %c528 = arith.constant 528 : index
    %c0_93 = arith.constant 0 : index
    %190 = vector.load %arg3[%c528, %c0_93] : memref<672x128xf32, #tpu.memory_space<vmem>>, vector<32x64xf32>
    %c560 = arith.constant 560 : index
    %c0_94 = arith.constant 0 : index
    %191 = vector.load %arg3[%c560, %c0_94] : memref<672x128xf32, #tpu.memory_space<vmem>>, vector<1x64xf32>
    %c640 = arith.constant 640 : index
    %c0_95 = arith.constant 0 : index
    %192 = vector.load %arg3[%c640, %c0_95] : memref<672x128xf32, #tpu.memory_space<vmem>>, vector<32x32xf32>
    %c0_96 = arith.constant 0 : index
    %c0_97 = arith.constant 0 : index
    %193 = vector.load %arg6[%c0_96, %c0_97] : memref<64x32xf32, #tpu.memory_space<vmem>>, vector<32x32xf32>
    %c0_98 = arith.constant 0 : index
    %c0_99 = arith.constant 0 : index
    %194 = vector.load %arg7[%c0_98, %c0_99] : memref<64x32xf32, #tpu.memory_space<vmem>>, vector<32x32xf32>
    %cst_100 = arith.constant dense<0.000000e+00> : vector<32x32xf32>
    %195 = tpu.matmul %188, %30, %cst_100 {dimension_numbers = #tpu.dot_dimension_numbers<[1], [0], [0], [1], [0, 0, 1, 1], [], []>} : vector<32x16xf32>, vector<16x32xf32>, vector<32x32xf32> -> vector<32x32xf32>
    %196 = arith.addf %194, %195 : vector<32x32xf32>
    %cst_101 = arith.constant dense<0.000000e+00> : vector<32x32xf32>
    %197 = tpu.matmul %193, %196, %cst_101 {dimension_numbers = #tpu.dot_dimension_numbers<[1], [0], [0], [1], [0, 0, 1, 1], [], []>} : vector<32x32xf32>, vector<32x32xf32>, vector<32x32xf32> -> vector<32x32xf32>
    %cst_102 = arith.constant 0.000000e+00 : f32
    %198 = vector.broadcast %cst_102 : f32 to vector<32x32xf32>
    %199 = arith.maximumf %197, %198 : vector<32x32xf32>
    %cst_103 = arith.constant dense<0.000000e+00> : vector<32x32xf32>
    %200 = tpu.matmul %192, %199, %cst_103 {dimension_numbers = #tpu.dot_dimension_numbers<[1], [0], [0], [1], [0, 0, 1, 1], [], []>} : vector<32x32xf32>, vector<32x32xf32>, vector<32x32xf32> -> vector<32x32xf32>
    %cst_104 = arith.constant 9.99999997E-7 : f32
    %201 = vector.broadcast %cst_104 : f32 to vector<32x32xf32>
    %202 = arith.addf %200, %201 : vector<32x32xf32>
    %203 = arith.divf %199, %202 : vector<32x32xf32>
    %cst_105 = arith.constant 2.000000e+01 : f32
    %204 = vector.broadcast %cst_105 : f32 to vector<32x32xf32>
    %205 = arith.cmpf ogt, %203, %204 : vector<32x32xf32>
    %cst_106 = arith.constant 2.000000e+01 : f32
    %206 = vector.broadcast %cst_106 : f32 to vector<32x32xf32>
    %207 = arith.minimumf %203, %206 : vector<32x32xf32>
    %208 = math.exp %207 : vector<32x32xf32>
    %209 = math.log1p %208 : vector<32x32xf32>
    %210 = arith.select %205, %203, %209 : vector<32x32xi1>, vector<32x32xf32>
    %cst_107 = arith.constant dense<0.000000e+00> : vector<32x64xf32>
    %211 = tpu.matmul %210, %190, %cst_107 {dimension_numbers = #tpu.dot_dimension_numbers<[1], [0], [0], [1], [0, 0, 1, 1], [], []>} : vector<32x32xf32>, vector<32x64xf32>, vector<32x64xf32> -> vector<32x64xf32>
    %212 = vector.broadcast %191 : vector<1x64xf32> to vector<32x64xf32>
    %213 = arith.addf %211, %212 : vector<32x64xf32>
    %214 = vector.extract_strided_slice %213 {offsets = [0, 0], sizes = [32, 48], strides = [1, 1]} : vector<32x64xf32> to vector<32x48xf32>
    %215 = arith.negf %214 : vector<32x48xf32>
    %216 = math.exp %215 : vector<32x48xf32>
    %cst_108 = arith.constant 1.000000e+00 : f32
    %217 = vector.broadcast %cst_108 : f32 to vector<32x48xf32>
    %218 = arith.addf %217, %216 : vector<32x48xf32>
    %219 = arith.divf %217, %218 : vector<32x48xf32>
    %220 = vector.extract_strided_slice %219 {offsets = [0, 0], sizes = [32, 16], strides = [1, 1]} : vector<32x48xf32> to vector<32x16xf32>
    %221 = vector.extract_strided_slice %219 {offsets = [0, 16], sizes = [32, 16], strides = [1, 1]} : vector<32x48xf32> to vector<32x16xf32>
    %222 = vector.extract_strided_slice %219 {offsets = [0, 32], sizes = [32, 16], strides = [1, 1]} : vector<32x48xf32> to vector<32x16xf32>
    %223 = vector.extract_strided_slice %213 {offsets = [0, 48], sizes = [32, 16], strides = [1, 1]} : vector<32x64xf32> to vector<32x16xf32>
    %cst_109 = arith.constant 0.000000e+00 : f32
    %224 = vector.broadcast %cst_109 : f32 to vector<32x16xf32>
    %225 = arith.maximumf %223, %224 : vector<32x16xf32>
    %226 = arith.mulf %221, %189 : vector<32x16xf32>
    %227 = arith.mulf %220, %225 : vector<32x16xf32>
    %228 = arith.addf %226, %227 : vector<32x16xf32>
    %229 = math.tanh %228 : vector<32x16xf32>
    %230 = arith.mulf %222, %229 : vector<32x16xf32>
    %c32_110 = arith.constant 32 : index
    %c0_111 = arith.constant 0 : index
    %231 = vector.load %arg6[%c32_110, %c0_111] : memref<64x32xf32, #tpu.memory_space<vmem>>, vector<32x32xf32>
    %c32_112 = arith.constant 32 : index
    %c0_113 = arith.constant 0 : index
    %232 = vector.load %arg7[%c32_112, %c0_113] : memref<64x32xf32, #tpu.memory_space<vmem>>, vector<32x32xf32>
    %cst_114 = arith.constant dense<0.000000e+00> : vector<32x32xf32>
    %233 = tpu.matmul %230, %30, %cst_114 {dimension_numbers = #tpu.dot_dimension_numbers<[1], [0], [0], [1], [0, 0, 1, 1], [], []>} : vector<32x16xf32>, vector<16x32xf32>, vector<32x32xf32> -> vector<32x32xf32>
    %234 = arith.addf %232, %233 : vector<32x32xf32>
    %cst_115 = arith.constant dense<0.000000e+00> : vector<32x32xf32>
    %235 = tpu.matmul %231, %234, %cst_115 {dimension_numbers = #tpu.dot_dimension_numbers<[1], [0], [0], [1], [0, 0, 1, 1], [], []>} : vector<32x32xf32>, vector<32x32xf32>, vector<32x32xf32> -> vector<32x32xf32>
    %cst_116 = arith.constant 0.000000e+00 : f32
    %236 = vector.broadcast %cst_116 : f32 to vector<32x32xf32>
    %237 = arith.maximumf %235, %236 : vector<32x32xf32>
    %cst_117 = arith.constant dense<0.000000e+00> : vector<32x32xf32>
    %238 = tpu.matmul %192, %237, %cst_117 {dimension_numbers = #tpu.dot_dimension_numbers<[1], [0], [0], [1], [0, 0, 1, 1], [], []>} : vector<32x32xf32>, vector<32x32xf32>, vector<32x32xf32> -> vector<32x32xf32>
    %cst_118 = arith.constant 9.99999997E-7 : f32
    %239 = vector.broadcast %cst_118 : f32 to vector<32x32xf32>
    %240 = arith.addf %238, %239 : vector<32x32xf32>
    %241 = arith.divf %237, %240 : vector<32x32xf32>
    %cst_119 = arith.constant 2.000000e+01 : f32
    %242 = vector.broadcast %cst_119 : f32 to vector<32x32xf32>
    %243 = arith.cmpf ogt, %241, %242 : vector<32x32xf32>
    %cst_120 = arith.constant 2.000000e+01 : f32
    %244 = vector.broadcast %cst_120 : f32 to vector<32x32xf32>
    %245 = arith.minimumf %241, %244 : vector<32x32xf32>
    %246 = math.exp %245 : vector<32x32xf32>
    %247 = math.log1p %246 : vector<32x32xf32>
    %248 = arith.select %243, %241, %247 : vector<32x32xi1>, vector<32x32xf32>
    %cst_121 = arith.constant dense<0.000000e+00> : vector<32x64xf32>
    %249 = tpu.matmul %248, %190, %cst_121 {dimension_numbers = #tpu.dot_dimension_numbers<[1], [0], [0], [1], [0, 0, 1, 1], [], []>} : vector<32x32xf32>, vector<32x64xf32>, vector<32x64xf32> -> vector<32x64xf32>
    %250 = vector.broadcast %191 : vector<1x64xf32> to vector<32x64xf32>
    %251 = arith.addf %249, %250 : vector<32x64xf32>
    %252 = vector.extract_strided_slice %251 {offsets = [0, 0], sizes = [32, 48], strides = [1, 1]} : vector<32x64xf32> to vector<32x48xf32>
    %253 = arith.negf %252 : vector<32x48xf32>
    %254 = math.exp %253 : vector<32x48xf32>
    %cst_122 = arith.constant 1.000000e+00 : f32
    %255 = vector.broadcast %cst_122 : f32 to vector<32x48xf32>
    %256 = arith.addf %255, %254 : vector<32x48xf32>
    %257 = arith.divf %255, %256 : vector<32x48xf32>
    %258 = vector.extract_strided_slice %257 {offsets = [0, 0], sizes = [32, 16], strides = [1, 1]} : vector<32x48xf32> to vector<32x16xf32>
    %259 = vector.extract_strided_slice %257 {offsets = [0, 16], sizes = [32, 16], strides = [1, 1]} : vector<32x48xf32> to vector<32x16xf32>
    %260 = vector.extract_strided_slice %257 {offsets = [0, 32], sizes = [32, 16], strides = [1, 1]} : vector<32x48xf32> to vector<32x16xf32>
    %261 = vector.extract_strided_slice %251 {offsets = [0, 48], sizes = [32, 16], strides = [1, 1]} : vector<32x64xf32> to vector<32x16xf32>
    %cst_123 = arith.constant 0.000000e+00 : f32
    %262 = vector.broadcast %cst_123 : f32 to vector<32x16xf32>
    %263 = arith.maximumf %261, %262 : vector<32x16xf32>
    %264 = arith.mulf %259, %228 : vector<32x16xf32>
    %265 = arith.mulf %258, %263 : vector<32x16xf32>
    %266 = arith.addf %264, %265 : vector<32x16xf32>
    %267 = math.tanh %266 : vector<32x16xf32>
    %268 = arith.mulf %260, %267 : vector<32x16xf32>
    %269 = vector.extract_strided_slice %268 {offsets = [0, 0], sizes = [16, 16], strides = [1, 1]} : vector<32x16xf32> to vector<16x16xf32>
    %270 = vector.extract_strided_slice %268 {offsets = [16, 0], sizes = [16, 16], strides = [1, 1]} : vector<32x16xf32> to vector<16x16xf32>
    %271 = tpu.concatenate %187, %269, %270 in 1 : vector<16x16xf32>, vector<16x16xf32>, vector<16x16xf32> -> vector<16x48xf32>
    %c568 = arith.constant 568 : index
    %c0_124 = arith.constant 0 : index
    %272 = vector.load %arg3[%c568, %c0_124] : memref<672x128xf32, #tpu.memory_space<vmem>>, vector<48x128xf32>
    %cst_125 = arith.constant dense<0.000000e+00> : vector<16x128xf32>
    %273 = tpu.matmul %271, %272, %cst_125 {dimension_numbers = #tpu.dot_dimension_numbers<[1], [0], [0], [1], [0, 0, 1, 1], [], []>} : vector<16x48xf32>, vector<48x128xf32>, vector<16x128xf32> -> vector<16x128xf32>
    %c616 = arith.constant 616 : index
    %c0_126 = arith.constant 0 : index
    %274 = vector.load %arg3[%c616, %c0_126] : memref<672x128xf32, #tpu.memory_space<vmem>>, vector<1x128xf32>
    %275 = vector.broadcast %274 : vector<1x128xf32> to vector<16x128xf32>
    %276 = arith.addf %273, %275 : vector<16x128xf32>
    %c0_127 = arith.constant 0 : index
    %c0_128 = arith.constant 0 : index
    %277 = vector.load %arg4[%c0_127, %c0_128] : memref<16x128xf32, #tpu.memory_space<vmem>>, vector<16x128xf32>
    tpu.vector_store %arg4[%c0_127, %c0_128], %276 {strides = array<i32>} : memref<16x128xf32, #tpu.memory_space<vmem>>, vector<16x128xf32>,
    return
  }
}

</mosaic_0001>

<llo_original>
// kernel: tile.8
$region0: #{tile.8}
  #allocation0 [shape = 's32[1]{0}', space=sflag, size = 0x4, scoped, tag = 'scoped memory for tile.8']
  %s0 = inlined_call_operand.vmem [shape: f32[8], index: 0, kind: input, shape index: {}]
  %s1 = inlined_call_operand.vmem [shape: f32[15,8], index: 1, kind: output, shape index: {}]
  // Predicated region
  $region2: #{tile.8} parent=0 // pred_check
    _
  $region3: #{tile.8} parent=0 // pred_check_branch
    %3 = sbr.rel (0) target = $region5
  $region4: #{tile.8} parent=0 // pred_region
    _
  $region5: #{tile.8} parent=0 // pred_fallthru
    _
  %v4 = vld [vmem:[%s0] ss:$0 sm:$0xff]
  %5 = vst [vmem:[%s1] sm:$0xff] %v4
  %s6 = scalar_lea.vmem %s1, 8
  %7 = vst [vmem:[%s6] sm:$0xff] %v4

// kernel: tile.9
$region0: #{tile.9}
  %s0 = inlined_call_operand.vmem [shape: f32[15,8], index: 0, kind: input, shape index: {}]
  %s1 = inlined_call_operand.vmem [shape: f32[1,120], index: 1, kind: output, shape index: {}]
  $region1: #{tile.9} parent=0
    #allocation0 [shape = 'u8[4096]{0}', space=vmem, size = 0x1000, scoped, tag = 'scoped mem for output reshape']
    %v2 = vld [vmem:[%s0] sm:$0x1]
    %vm3 = vcmask 64512
    %4 = vst.msk [vmem:[#allocation0] sm:$0x1] %vm3, %v2
    %s5 = scalar_lea.vmem %s0, 14
    %v6 = vld [vmem:[%s5] sm:$0x1]
    %7 = vrot.lane.b32.xlu0 %v6, 112
    %v8 = vpop.permute.xlu0 %7
    %vm9 = vcmask 982912
    %10 = vst.msk [vmem:[#allocation0] sm:$0x1] %vm9, %v8
    %s11 = scalar_lea.vmem %s0, 13
    %v12 = vld [vmem:[%s11] sm:$0x1]
    %13 = vrot.lane.b32.xlu0 %v12, 104
    %v14 = vpop.permute.xlu0 %13
    %vm15 = vcmask 917312
    %16 = vst.msk [vmem:[#allocation0] sm:$0x1] %vm15, %v14
    %s17 = scalar_lea.vmem %s0, 12
    %v18 = vld [vmem:[%s17] sm:$0x1]
    %19 = vrot.lane.b32.xlu0 %v18, 96
    %v20 = vpop.permute.xlu0 %19
    %vm21 = vcmask 851712
    %22 = vst.msk [vmem:[#allocation0] sm:$0x1] %vm21, %v20
    %s23 = scalar_lea.vmem %s0, 11
    %v24 = vld [vmem:[%s23] sm:$0x1]
    %25 = vrot.lane.b32.xlu0 %v24, 88
    %v26 = vpop.permute.xlu0 %25
    %vm27 = vcmask 786112
    %28 = vst.msk [vmem:[#allocation0] sm:$0x1] %vm27, %v26
    %s29 = scalar_lea.vmem %s0, 10
    %v30 = vld [vmem:[%s29] sm:$0x1]
    %31 = vrot.lane.b32.xlu0 %v30, 80
    %v32 = vpop.permute.xlu0 %31
    %vm33 = vcmask 720512
    %34 = vst.msk [vmem:[#allocation0] sm:$0x1] %vm33, %v32
    %s35 = scalar_lea.vmem %s0, 9
    %v36 = vld [vmem:[%s35] sm:$0x1]
    %37 = vrot.lane.b32.xlu0 %v36, 72
    %v38 = vpop.permute.xlu0 %37
    %vm39 = vcmask 654912
    %40 = vst.msk [vmem:[#allocation0] sm:$0x1] %vm39, %v38
    %s41 = scalar_lea.vmem %s0, 8
    %v42 = vld [vmem:[%s41] sm:$0x1]
    %43 = vrot.lane.b32.xlu0 %v42, 64
    %v44 = vpop.permute.xlu0 %43
    %vm45 = vcmask 589312
    %46 = vst.msk [vmem:[#allocation0] sm:$0x1] %vm45, %v44
    %s47 = scalar_lea.vmem %s0, 7
    %v48 = vld [vmem:[%s47] sm:$0x1]
    %49 = vrot.lane.b32.xlu0 %v48, 56
    %v50 = vpop.permute.xlu0 %49
    %vm51 = vcmask 523712
    %52 = vst.msk [vmem:[#allocation0] sm:$0x1] %vm51, %v50
    %s53 = scalar_lea.vmem %s0, 6
    %v54 = vld [vmem:[%s53] sm:$0x1]
    %55 = vrot.lane.b32.xlu0 %v54, 48
    %v56 = vpop.permute.xlu0 %55
    %vm57 = vcmask 458112
    %58 = vst.msk [vmem:[#allocation0] sm:$0x1] %vm57, %v56
    %s59 = scalar_lea.vmem %s0, 5
    %v60 = vld [vmem:[%s59] sm:$0x1]
    %61 = vrot.lane.b32.xlu0 %v60, 40
    %v62 = vpop.permute.xlu0 %61
    %vm63 = vcmask 392512
    %64 = vst.msk [vmem:[#allocation0] sm:$0x1] %vm63, %v62
    %s65 = scalar_lea.vmem %s0, 4
    %v66 = vld [vmem:[%s65] sm:$0x1]
    %67 = vrot.lane.b32.xlu0 %v66, 32
    %v68 = vpop.permute.xlu0 %67
    %vm69 = vcmask 326912
    %70 = vst.msk [vmem:[#allocation0] sm:$0x1] %vm69, %v68
    %s71 = scalar_lea.vmem %s0, 3
    %v72 = vld [vmem:[%s71] sm:$0x1]
    %73 = vrot.lane.b32.xlu0 %v72, 24
    %v74 = vpop.permute.xlu0 %73
    %vm75 = vcmask 261312
    %76 = vst.msk [vmem:[#allocation0] sm:$0x1] %vm75, %v74
    %s77 = scalar_lea.vmem %s0, 2
    %v78 = vld [vmem:[%s77] sm:$0x1]
    %79 = vrot.lane.b32.xlu0 %v78, 16
    %v80 = vpop.permute.xlu0 %79
    %vm81 = vcmask 195712
    %82 = vst.msk [vmem:[#allocation0] sm:$0x1] %vm81, %v80
    %s83 = scalar_lea.vmem %s0, 1
    %v84 = vld [vmem:[%s83] sm:$0x1]
    %85 = vrot.lane.b32.xlu0 %v84, 8
    %v86 = vpop.permute.xlu0 %85
    %vm87 = vcmask 130112
    %88 = vst.msk [vmem:[#allocation0] sm:$0x1] %vm87, %v86
    %s90 = sshll.u32 1, 1
    %s91 = ssub.s32 %s90, 1
    %v93 = vld [vmem:[#allocation0] sm:%s91]
    %s94 = sshll.u32 1, 1
    %s95 = ssub.s32 %s94, 1
    %96 = vst [vmem:[%s1] sm:%s95] %v93

// kernel: forward.1
$region0: #{forward.1}
  #allocation0 [shape = 'u32[]', space=smem, size = 0x4, offset = 0x4, fixed_abs, tag = 'smem constant byte address 0x4 - core index']
  #allocation1 [shape = 'u32[144,128]{1,0:T(1,128)}', space=vmem, size = 0x12000, scoped, tag = 'internal scratch']
  #allocation2 [shape = 'f32[64,16]{1,0:T(8,128)}', space=vmem, size = 0x8000, scoped, tag = 'scratch operand']
  #allocation3 [shape = 'f32[64,32]{1,0:T(8,128)}', space=vmem, size = 0x8000, scoped, tag = 'scratch operand']
  #allocation4 [shape = 'f32[64,32]{1,0:T(8,128)}', space=vmem, size = 0x8000, scoped, tag = 'scratch operand']
  %s0 = inlined_call_operand.vmem [shape: f32[128,40], index: 0, kind: input, shape index: {}]
  %s1 = inlined_call_operand.vmem [shape: f32[256,64], index: 1, kind: input, shape index: {}]
  %s2 = inlined_call_operand.vmem [shape: f32[96,16], index: 2, kind: input, shape index: {}]
  %s3 = inlined_call_operand.vmem [shape: f32[672,128], index: 3, kind: input, shape index: {}]
  %s4 = inlined_call_operand.vmem [shape: f32[16,128], index: 4, kind: output, shape index: {}]
  %s5 = sld [smem:[#allocation0]]
  $region26: #{forward.1} parent=0
    _
  %s7 = ssub.s32 1, %s5
  %s8 = scalar_select 0, %s7, %s5
  // Predicated region
  $region2: #{forward.1} parent=0 // pred_check
    _
  $region3: #{forward.1} parent=0 // pred_check_branch
    %10 = sbr.rel (0) target = $region5
  $region4: #{forward.1} parent=0 // pred_region
    _
  $region5: #{forward.1} parent=0 // pred_fallthru
    _
  // Predicated region
  $region6: #{forward.1} parent=0 // pred_check
    _
  $region7: #{forward.1} parent=0 // pred_check_branch
    %12 = sbr.rel (0) target = $region9
  $region8: #{forward.1} parent=0 // pred_region
    _
  $region9: #{forward.1} parent=0 // pred_fallthru
    _
  // Predicated region
  $region10: #{forward.1} parent=0 // pred_check
    _
  $region11: #{forward.1} parent=0 // pred_check_branch
    %14 = sbr.rel (0) target = $region13
  $region12: #{forward.1} parent=0 // pred_region
    _
  $region13: #{forward.1} parent=0 // pred_fallthru
    _
  // Predicated region
  $region14: #{forward.1} parent=0 // pred_check
    _
  $region15: #{forward.1} parent=0 // pred_check_branch
    %16 = sbr.rel (0) target = $region17
  $region16: #{forward.1} parent=0 // pred_region
    _
  $region17: #{forward.1} parent=0 // pred_fallthru
    _
  %v17 = vld [vmem:[%s0] sm:$0xff]
  %v18 = vld [vmem:[%s0 + $0x8] sm:$0xff]
  %v19 = vld [vmem:[%s0 + $0x10] sm:$0xff]
  %v20 = vld [vmem:[%s0 + $0x18] sm:$0xff]
  %v21 = vld [vmem:[%s0 + $0x20] sm:$0xff]
  %v22 = vld [vmem:[%s0 + $0x28] sm:$0xff]
  %v23 = vld [vmem:[%s0 + $0x30] sm:$0xff]
  %v24 = vld [vmem:[%s0 + $0x38] sm:$0xff]
  %v25 = vld [vmem:[%s0 + $0x40] sm:$0xff]
  %v26 = vld [vmem:[%s0 + $0x48] sm:$0xff]
  %v27 = vld [vmem:[%s0 + $0x50] sm:$0xff]
  %v28 = vld [vmem:[%s0 + $0x58] sm:$0xff]
  %v29 = vld [vmem:[%s0 + $0x60] sm:$0xff]
  %v30 = vld [vmem:[%s0 + $0x68] sm:$0xff]
  %v31 = vld [vmem:[%s0 + $0x70] sm:$0xff]
  %v32 = vld [vmem:[%s0 + $0x78] sm:$0xff]
  %v33 = vld [vmem:[%s3] sm:$0xff]
  %v34 = vld [vmem:[%s3 + $0x8] sm:$0xff]
  %v35 = vld [vmem:[%s3 + $0x10] sm:$0xff]
  %v36 = vld [vmem:[%s3 + $0x18] sm:$0xff]
  %v37 = vld [vmem:[%s3 + $0x20] sm:$0xff]
  %v38 = vld [vmem:[%s3 + $0x28] sm:$0x1]
  %v39 = vlaneseq
  %v40 = vshrl.u32 %v39, 7
  %v41 = vsub.s32 0, %v40
  %v42 = vrot.slane %v38, %v41
  %vm43 = vcmask 326656
  %v45 = vsel %vm43, %v17, 0
  %v48 = vsel %vm43, %v18, 0
  %v51 = vsel %vm43, %v19, 0
  %v54 = vsel %vm43, %v20, 0
  %v57 = vsel %vm43, %v21, 0
  %v60 = vsel %vm43, %v22, 0
  %v63 = vsel %vm43, %v23, 0
  %v66 = vsel %vm43, %v24, 0
  %v69 = vsel %vm43, %v25, 0
  %v72 = vsel %vm43, %v26, 0
  %v75 = vsel %vm43, %v27, 0
  %v78 = vsel %vm43, %v28, 0
  %v81 = vsel %vm43, %v29, 0
  %v84 = vsel %vm43, %v30, 0
  %v87 = vsel %vm43, %v31, 0
  %v90 = vsel %vm43, %v32, 0
  %92 = vmatprep.subr.mxu0 0.0
  %93 = vmatpush1.msra.mxu0 0.0
  %94 = vmatprep.subr.mxu0 0.0
  %95 = vmatpush1.msra.mxu0 0.0
  %96 = vmatprep.subr.mxu0 0.0
  %97 = vmatpush1.msra.mxu0 0.0
  %98 = vmatprep.subr.mxu0 0.0
  %99 = vmatpush1.msra.mxu0 0.0
  %100 = vmatprep.subr.mxu0 0.0
  %101 = vmatpush1.msra.mxu0 0.0
  %102 = vmatprep.subr.mxu0 0.0
  %103 = vmatpush1.msra.mxu0 0.0
  %104 = vmatprep.subr.mxu0 0.0
  %105 = vmatpush1.msra.mxu0 0.0
  %106 = vmatprep.subr.mxu0 0.0
  %107 = vmatpush1.msra.mxu0 0.0
  %108 = vmatprep.subr.mxu0 0.0
  %109 = vmatpush1.msra.mxu0 0.0
  %110 = vmatprep.subr.mxu0 0.0
  %111 = vmatpush1.msra.mxu0 0.0
  %112 = vmatprep.subr.mxu0 0.0
  %113 = vmatpush1.msra.mxu0 0.0
  %114 = vmatprep.subr.mxu0 0.0
  %115 = vmatpush1.msra.mxu0 %v37
  %116 = vmatprep.subr.mxu0 0.0
  %117 = vmatpush1.msra.mxu0 %v36
  %118 = vmatprep.subr.mxu0 0.0
  %119 = vmatpush1.msra.mxu0 %v35
  %120 = vmatprep.subr.mxu0 0.0
  %121 = vmatpush1.msra.mxu0 %v34
  %122 = vmatprep.subr.mxu0 0.0
  %123 = vmatpush1.msra.mxu0 %v33
  %124 = vmatprep.subr.mxu0 0.0
  %125 = vmatpush2.msra.mxu0 0.0
  %126 = vmatprep.subr.mxu0 0.0
  %127 = vmatpush2.msra.mxu0 0.0
  %128 = vmatprep.subr.mxu0 0.0
  %129 = vmatpush2.msra.mxu0 0.0
  %130 = vmatprep.subr.mxu0 0.0
  %131 = vmatpush2.msra.mxu0 0.0
  %132 = vmatprep.subr.mxu0 0.0
  %133 = vmatpush2.msra.mxu0 0.0
  %134 = vmatprep.subr.mxu0 0.0
  %135 = vmatpush2.msra.mxu0 0.0
  %136 = vmatprep.subr.mxu0 0.0
  %137 = vmatpush2.msra.mxu0 0.0
  %138 = vmatprep.subr.mxu0 0.0
  %139 = vmatpush2.msra.mxu0 0.0
  %140 = vmatprep.subr.mxu0 0.0
  %141 = vmatpush2.msra.mxu0 0.0
  %142 = vmatprep.subr.mxu0 0.0
  %143 = vmatpush2.msra.mxu0 0.0
  %144 = vmatprep.subr.mxu0 0.0
  %145 = vmatpush2.msra.mxu0 0.0
  %146 = vmatprep.subr.mxu0 0.0
  %147 = vmatpush2.msra.mxu0 0.0
  %148 = vmatprep.subr.mxu0 0.0
  %149 = vmatpush2.msra.mxu0 0.0
  %150 = vmatprep.subr.mxu0 0.0
  %151 = vmatpush2.msra.mxu0 0.0
  %152 = vmatprep.subr.mxu0 0.0
  %153 = vmatpush2.msra.mxu0 0.0
  %154 = vmatprep.subr.mxu0 0.0
  %155 = vmatpush2.msra.mxu0 0.0
  %156 = vmatprep.mubr.f32.mxu0 0.0
  %157 = vmatmul.mubr.f32.gmra.mxu0 %v45
  %v158 = vpop.f32.mrf.mxu0
  %v159 = vadd.f32 %v42, %v158
  %v160 = vpop.f32.mrf.mxu0
  %161 = vmatprep.mubr.f32.mxu0 0.0
  %162 = vmatmul.mubr.f32.gmra.mxu0 %v48
  %v163 = vpop.f32.mrf.mxu0
  %v164 = vadd.f32 %v42, %v163
  %v165 = vpop.f32.mrf.mxu0
  %166 = vmatprep.mubr.f32.mxu0 0.0
  %167 = vmatmul.mubr.f32.gmra.mxu0 %v51
  %v168 = vpop.f32.mrf.mxu0
  %v169 = vadd.f32 %v42, %v168
  %v170 = vpop.f32.mrf.mxu0
  %171 = vmatprep.mubr.f32.mxu0 0.0
  %172 = vmatmul.mubr.f32.gmra.mxu0 %v54
  %v173 = vpop.f32.mrf.mxu0
  %v174 = vadd.f32 %v42, %v173
  %v175 = vpop.f32.mrf.mxu0
  %176 = vmatprep.mubr.f32.mxu0 0.0
  %177 = vmatmul.mubr.f32.gmra.mxu0 %v57
  %v178 = vpop.f32.mrf.mxu0
  %v179 = vadd.f32 %v42, %v178
  %v180 = vpop.f32.mrf.mxu0
  %181 = vmatprep.mubr.f32.mxu0 0.0
  %182 = vmatmul.mubr.f32.gmra.mxu0 %v60
  %v183 = vpop.f32.mrf.mxu0
  %v184 = vadd.f32 %v42, %v183
  %v185 = vpop.f32.mrf.mxu0
  %186 = vmatprep.mubr.f32.mxu0 0.0
  %187 = vmatmul.mubr.f32.gmra.mxu0 %v63
  %v188 = vpop.f32.mrf.mxu0
  %v189 = vadd.f32 %v42, %v188
  %v190 = vpop.f32.mrf.mxu0
  %191 = vmatprep.mubr.f32.mxu0 0.0
  %192 = vmatmul.mubr.f32.gmra.mxu0 %v66
  %v193 = vpop.f32.mrf.mxu0
  %v194 = vadd.f32 %v42, %v193
  %v195 = vpop.f32.mrf.mxu0
  %196 = vmatprep.mubr.f32.mxu0 0.0
  %197 = vmatmul.mubr.f32.gmra.mxu0 %v69
  %v198 = vpop.f32.mrf.mxu0
  %v199 = vadd.f32 %v42, %v198
  %v200 = vpop.f32.mrf.mxu0
  %201 = vmatprep.mubr.f32.mxu0 0.0
  %202 = vmatmul.mubr.f32.gmra.mxu0 %v72
  %v203 = vpop.f32.mrf.mxu0
  %v204 = vadd.f32 %v42, %v203
  %v205 = vpop.f32.mrf.mxu0
  %206 = vmatprep.mubr.f32.mxu0 0.0
  %207 = vmatmul.mubr.f32.gmra.mxu0 %v75
  %v208 = vpop.f32.mrf.mxu0
  %v209 = vadd.f32 %v42, %v208
  %v210 = vpop.f32.mrf.mxu0
  %211 = vmatprep.mubr.f32.mxu0 0.0
  %212 = vmatmul.mubr.f32.gmra.mxu0 %v78
  %v213 = vpop.f32.mrf.mxu0
  %v214 = vadd.f32 %v42, %v213
  %v215 = vpop.f32.mrf.mxu0
  %216 = vmatprep.mubr.f32.mxu0 0.0
  %217 = vmatmul.mubr.f32.gmra.mxu0 %v81
  %v218 = vpop.f32.mrf.mxu0
  %v219 = vadd.f32 %v42, %v218
  %v220 = vpop.f32.mrf.mxu0
  %221 = vmatprep.mubr.f32.mxu0 0.0
  %222 = vmatmul.mubr.f32.gmra.mxu0 %v84
  %v223 = vpop.f32.mrf.mxu0
  %v224 = vadd.f32 %v42, %v223
  %v225 = vpop.f32.mrf.mxu0
  %226 = vmatprep.mubr.f32.mxu0 0.0
  %227 = vmatmul.mubr.f32.gmra.mxu0 %v87
  %v228 = vpop.f32.mrf.mxu0
  %v229 = vadd.f32 %v42, %v228
  %v230 = vpop.f32.mrf.mxu0
  %231 = vmatprep.mubr.f32.mxu0 0.0
  %232 = vmatmul.mubr.f32.gmra.mxu0 %v90
  %v233 = vpop.f32.mrf.mxu0
  %v234 = vadd.f32 %v42, %v233
  %v235 = vpop.f32.mrf.mxu0
  %236 = vdwg.mxu0
  %v237 = vmax.f32 %v159, 0.0
  %v238 = vmax.f32 %v164, 0.0
  %v239 = vmax.f32 %v169, 0.0
  %v240 = vmax.f32 %v174, 0.0
  %v241 = vmax.f32 %v179, 0.0
  %v242 = vmax.f32 %v184, 0.0
  %v243 = vmax.f32 %v189, 0.0
  %v244 = vmax.f32 %v194, 0.0
  %v245 = vmax.f32 %v199, 0.0
  %v246 = vmax.f32 %v204, 0.0
  %v247 = vmax.f32 %v209, 0.0
  %v248 = vmax.f32 %v214, 0.0
  %v249 = vmax.f32 %v219, 0.0
  %v250 = vmax.f32 %v224, 0.0
  %v251 = vmax.f32 %v229, 0.0
  %v252 = vmax.f32 %v234, 0.0
  %v253 = vld [vmem:[%s3 + $0x30] sm:$0xff]
  %v254 = vld [vmem:[%s3 + $0x38] sm:$0xff]
  %v255 = vld [vmem:[%s3 + $0x40] sm:$0xff]
  %v256 = vld [vmem:[%s3 + $0x48] sm:$0xff]
  %v257 = vld [vmem:[%s3 + $0x50] sm:$0xff]
  %v258 = vld [vmem:[%s3 + $0x58] sm:$0xff]
  %v259 = vld [vmem:[%s3 + $0x60] sm:$0xff]
  %v260 = vld [vmem:[%s3 + $0x68] sm:$0xff]
  %v261 = vld [vmem:[%s3 + $0x70] sm:$0xff]
  %v262 = vld [vmem:[%s3 + $0x78] sm:$0xff]
  %v263 = vld [vmem:[%s3 + $0x80] sm:$0xff]
  %v264 = vld [vmem:[%s3 + $0x88] sm:$0xff]
  %v265 = vld [vmem:[%s3 + $0x90] sm:$0xff]
  %v266 = vld [vmem:[%s3 + $0x98] sm:$0xff]
  %v267 = vld [vmem:[%s3 + $0xa0] sm:$0xff]
  %v268 = vld [vmem:[%s3 + $0xa8] sm:$0xff]
  %v269 = vld [vmem:[%s3 + $0xb0] sm:$0x1]
  %v270 = vlaneseq
  %v271 = vshrl.u32 %v270, 7
  %v272 = vsub.s32 0, %v271
  %v273 = vrot.slane %v269, %v272
  %274 = vmatprep.subr.mxu0 0.0
  %275 = vmatpush1.msra.mxu0 %v268
  %276 = vmatprep.subr.mxu0 0.0
  %277 = vmatpush1.msra.mxu0 %v267
  %278 = vmatprep.subr.mxu0 0.0
  %279 = vmatpush1.msra.mxu0 %v266
  %280 = vmatprep.subr.mxu0 0.0
  %281 = vmatpush1.msra.mxu0 %v265
  %282 = vmatprep.subr.mxu0 0.0
  %283 = vmatpush1.msra.mxu0 %v264
  %284 = vmatprep.subr.mxu0 0.0
  %285 = vmatpush1.msra.mxu0 %v263
  %286 = vmatprep.subr.mxu0 0.0
  %287 = vmatpush1.msra.mxu0 %v262
  %288 = vmatprep.subr.mxu0 0.0
  %289 = vmatpush1.msra.mxu0 %v261
  %290 = vmatprep.subr.mxu0 0.0
  %291 = vmatpush1.msra.mxu0 %v260
  %292 = vmatprep.subr.mxu0 0.0
  %293 = vmatpush1.msra.mxu0 %v259
  %294 = vmatprep.subr.mxu0 0.0
  %295 = vmatpush1.msra.mxu0 %v258
  %296 = vmatprep.subr.mxu0 0.0
  %297 = vmatpush1.msra.mxu0 %v257
  %298 = vmatprep.subr.mxu0 0.0
  %299 = vmatpush1.msra.mxu0 %v256
  %300 = vmatprep.subr.mxu0 0.0
  %301 = vmatpush1.msra.mxu0 %v255
  %302 = vmatprep.subr.mxu0 0.0
  %303 = vmatpush1.msra.mxu0 %v254
  %304 = vmatprep.subr.mxu0 0.0
  %305 = vmatpush1.msra.mxu0 %v253
  %306 = vmatprep.subr.mxu0 0.0
  %307 = vmatpush2.msra.mxu0 0.0
  %308 = vmatprep.subr.mxu0 0.0
  %309 = vmatpush2.msra.mxu0 0.0
  %310 = vmatprep.subr.mxu0 0.0
  %311 = vmatpush2.msra.mxu0 0.0
  %312 = vmatprep.subr.mxu0 0.0
  %313 = vmatpush2.msra.mxu0 0.0
  %314 = vmatprep.subr.mxu0 0.0
  %315 = vmatpush2.msra.mxu0 0.0
  %316 = vmatprep.subr.mxu0 0.0
  %317 = vmatpush2.msra.mxu0 0.0
  %318 = vmatprep.subr.mxu0 0.0
  %319 = vmatpush2.msra.mxu0 0.0
  %320 = vmatprep.subr.mxu0 0.0
  %321 = vmatpush2.msra.mxu0 0.0
  %322 = vmatprep.subr.mxu0 0.0
  %323 = vmatpush2.msra.mxu0 0.0
  %324 = vmatprep.subr.mxu0 0.0
  %325 = vmatpush2.msra.mxu0 0.0
  %326 = vmatprep.subr.mxu0 0.0
  %327 = vmatpush2.msra.mxu0 0.0
  %328 = vmatprep.subr.mxu0 0.0
  %329 = vmatpush2.msra.mxu0 0.0
  %330 = vmatprep.subr.mxu0 0.0
  %331 = vmatpush2.msra.mxu0 0.0
  %332 = vmatprep.subr.mxu0 0.0
  %333 = vmatpush2.msra.mxu0 0.0
  %334 = vmatprep.subr.mxu0 0.0
  %335 = vmatpush2.msra.mxu0 0.0
  %336 = vmatprep.subr.mxu0 0.0
  %337 = vmatpush2.msra.mxu0 0.0
  %338 = vmatprep.mubr.f32.mxu0 0.0
  %339 = vmatmul.mubr.f32.gmra.mxu0 %v237
  %v340 = vpop.f32.mrf.mxu0
  %v341 = vadd.f32 %v273, %v340
  %v342 = vpop.f32.mrf.mxu0
  %343 = vmatprep.mubr.f32.mxu0 0.0
  %344 = vmatmul.mubr.f32.gmra.mxu0 %v238
  %v345 = vpop.f32.mrf.mxu0
  %v346 = vadd.f32 %v273, %v345
  %v347 = vpop.f32.mrf.mxu0
  %348 = vmatprep.mubr.f32.mxu0 0.0
  %349 = vmatmul.mubr.f32.gmra.mxu0 %v239
  %v350 = vpop.f32.mrf.mxu0
  %v351 = vadd.f32 %v273, %v350
  %v352 = vpop.f32.mrf.mxu0
  %353 = vmatprep.mubr.f32.mxu0 0.0
  %354 = vmatmul.mubr.f32.gmra.mxu0 %v240
  %v355 = vpop.f32.mrf.mxu0
  %v356 = vadd.f32 %v273, %v355
  %v357 = vpop.f32.mrf.mxu0
  %358 = vmatprep.mubr.f32.mxu0 0.0
  %359 = vmatmul.mubr.f32.gmra.mxu0 %v241
  %v360 = vpop.f32.mrf.mxu0
  %v361 = vadd.f32 %v273, %v360
  %v362 = vpop.f32.mrf.mxu0
  %363 = vmatprep.mubr.f32.mxu0 0.0
  %364 = vmatmul.mubr.f32.gmra.mxu0 %v242
  %v365 = vpop.f32.mrf.mxu0
  %v366 = vadd.f32 %v273, %v365
  %v367 = vpop.f32.mrf.mxu0
  %368 = vmatprep.mubr.f32.mxu0 0.0
  %369 = vmatmul.mubr.f32.gmra.mxu0 %v243
  %v370 = vpop.f32.mrf.mxu0
  %v371 = vadd.f32 %v273, %v370
  %v372 = vpop.f32.mrf.mxu0
  %373 = vmatprep.mubr.f32.mxu0 0.0
  %374 = vmatmul.mubr.f32.gmra.mxu0 %v244
  %v375 = vpop.f32.mrf.mxu0
  %v376 = vadd.f32 %v273, %v375
  %v377 = vpop.f32.mrf.mxu0
  %378 = vmatprep.mubr.f32.mxu0 0.0
  %379 = vmatmul.mubr.f32.gmra.mxu0 %v245
  %v380 = vpop.f32.mrf.mxu0
  %v381 = vadd.f32 %v273, %v380
  %v382 = vpop.f32.mrf.mxu0
  %383 = vmatprep.mubr.f32.mxu0 0.0
  %384 = vmatmul.mubr.f32.gmra.mxu0 %v246
  %v385 = vpop.f32.mrf.mxu0
  %v386 = vadd.f32 %v273, %v385
  %v387 = vpop.f32.mrf.mxu0
  %388 = vmatprep.mubr.f32.mxu0 0.0
  %389 = vmatmul.mubr.f32.gmra.mxu0 %v247
  %v390 = vpop.f32.mrf.mxu0
  %v391 = vadd.f32 %v273, %v390
  %v392 = vpop.f32.mrf.mxu0
  %393 = vmatprep.mubr.f32.mxu0 0.0
  %394 = vmatmul.mubr.f32.gmra.mxu0 %v248
  %v395 = vpop.f32.mrf.mxu0
  %v396 = vadd.f32 %v273, %v395
  %v397 = vpop.f32.mrf.mxu0
  %398 = vmatprep.mubr.f32.mxu0 0.0
  %399 = vmatmul.mubr.f32.gmra.mxu0 %v249
  %v400 = vpop.f32.mrf.mxu0
  %v401 = vadd.f32 %v273, %v400
  %v402 = vpop.f32.mrf.mxu0
  %403 = vmatprep.mubr.f32.mxu0 0.0
  %404 = vmatmul.mubr.f32.gmra.mxu0 %v250
  %v405 = vpop.f32.mrf.mxu0
  %v406 = vadd.f32 %v273, %v405
  %v407 = vpop.f32.mrf.mxu0
  %408 = vmatprep.mubr.f32.mxu0 0.0
  %409 = vmatmul.mubr.f32.gmra.mxu0 %v251
  %v410 = vpop.f32.mrf.mxu0
  %v411 = vadd.f32 %v273, %v410
  %v412 = vpop.f32.mrf.mxu0
  %413 = vmatprep.mubr.f32.mxu0 0.0
  %414 = vmatmul.mubr.f32.gmra.mxu0 %v252
  %v415 = vpop.f32.mrf.mxu0
  %v416 = vadd.f32 %v273, %v415
  %v417 = vpop.f32.mrf.mxu0
  %418 = vdwg.mxu0
  %v419 = vmax.f32 %v341, 0.0
  %v420 = vmax.f32 %v346, 0.0
  %v421 = vmax.f32 %v351, 0.0
  %v422 = vmax.f32 %v356, 0.0
  %v423 = vmax.f32 %v361, 0.0
  %v424 = vmax.f32 %v366, 0.0
  %v425 = vmax.f32 %v371, 0.0
  %v426 = vmax.f32 %v376, 0.0
  %v427 = vmax.f32 %v381, 0.0
  %v428 = vmax.f32 %v386, 0.0
  %v429 = vmax.f32 %v391, 0.0
  %v430 = vmax.f32 %v396, 0.0
  %v431 = vmax.f32 %v401, 0.0
  %v432 = vmax.f32 %v406, 0.0
  %v433 = vmax.f32 %v411, 0.0
  %v434 = vmax.f32 %v416, 0.0
  %v435 = vld [vmem:[%s3 + $0xb8] sm:$0xff]
  %v436 = vld [vmem:[%s3 + $0xc0] sm:$0xff]
  %v437 = vld [vmem:[%s3 + $0xc8] sm:$0xff]
  %v438 = vld [vmem:[%s3 + $0xd0] sm:$0xff]
  %v439 = vld [vmem:[%s3 + $0xd8] sm:$0xff]
  %v440 = vld [vmem:[%s3 + $0xe0] sm:$0xff]
  %v441 = vld [vmem:[%s3 + $0xe8] sm:$0xff]
  %v442 = vld [vmem:[%s3 + $0xf0] sm:$0xff]
  %443 = vmatprep.subr.mxu0 0.0
  %444 = vmatpush1.msra.mxu0 %v434
  %445 = vmatprep.subr.mxu0 0.0
  %446 = vmatpush1.msra.mxu0 %v433
  %447 = vmatprep.subr.mxu0 0.0
  %448 = vmatpush1.msra.mxu0 %v432
  %449 = vmatprep.subr.mxu0 0.0
  %450 = vmatpush1.msra.mxu0 %v431
  %451 = vmatprep.subr.mxu0 0.0
  %452 = vmatpush1.msra.mxu0 %v430
  %453 = vmatprep.subr.mxu0 0.0
  %454 = vmatpush1.msra.mxu0 %v429
  %455 = vmatprep.subr.mxu0 0.0
  %456 = vmatpush1.msra.mxu0 %v428
  %457 = vmatprep.subr.mxu0 0.0
  %458 = vmatpush1.msra.mxu0 %v427
  %459 = vmatprep.subr.mxu0 0.0
  %460 = vmatpush1.msra.mxu0 %v426
  %461 = vmatprep.subr.mxu0 0.0
  %462 = vmatpush1.msra.mxu0 %v425
  %463 = vmatprep.subr.mxu0 0.0
  %464 = vmatpush1.msra.mxu0 %v424
  %465 = vmatprep.subr.mxu0 0.0
  %466 = vmatpush1.msra.mxu0 %v423
  %467 = vmatprep.subr.mxu0 0.0
  %468 = vmatpush1.msra.mxu0 %v422
  %469 = vmatprep.subr.mxu0 0.0
  %470 = vmatpush1.msra.mxu0 %v421
  %471 = vmatprep.subr.mxu0 0.0
  %472 = vmatpush1.msra.mxu0 %v420
  %473 = vmatprep.subr.mxu0 0.0
  %474 = vmatpush1.msra.mxu0 %v419
  %475 = vmatprep.subr.mxu0 0.0
  %476 = vmatpush2.msra.mxu0 0.0
  %477 = vmatprep.subr.mxu0 0.0
  %478 = vmatpush2.msra.mxu0 0.0
  %479 = vmatprep.subr.mxu0 0.0
  %480 = vmatpush2.msra.mxu0 0.0
  %481 = vmatprep.subr.mxu0 0.0
  %482 = vmatpush2.msra.mxu0 0.0
  %483 = vmatprep.subr.mxu0 0.0
  %484 = vmatpush2.msra.mxu0 0.0
  %485 = vmatprep.subr.mxu0 0.0
  %486 = vmatpush2.msra.mxu0 0.0
  %487 = vmatprep.subr.mxu0 0.0
  %488 = vmatpush2.msra.mxu0 0.0
  %489 = vmatprep.subr.mxu0 0.0
  %490 = vmatpush2.msra.mxu0 0.0
  %491 = vmatprep.subr.mxu0 0.0
  %492 = vmatpush2.msra.mxu0 0.0
  %493 = vmatprep.subr.mxu0 0.0
  %494 = vmatpush2.msra.mxu0 0.0
  %495 = vmatprep.subr.mxu0 0.0
  %496 = vmatpush2.msra.mxu0 0.0
  %497 = vmatprep.subr.mxu0 0.0
  %498 = vmatpush2.msra.mxu0 0.0
  %499 = vmatprep.subr.mxu0 0.0
  %500 = vmatpush2.msra.mxu0 0.0
  %501 = vmatprep.subr.mxu0 0.0
  %502 = vmatpush2.msra.mxu0 0.0
  %503 = vmatprep.subr.mxu0 0.0
  %504 = vmatpush2.msra.mxu0 0.0
  %505 = vmatprep.subr.mxu0 0.0
  %506 = vmatpush2.msra.mxu0 0.0
  %507 = vmatprep.mubr.f32.mxu0 0.0
  %508 = vmatmul.mubr.f32.gmra.mxu0 %v435
  %v509 = vpop.f32.mrf.mxu0
  %v510 = vadd.f32 0.0, %v509
  %v511 = vpop.f32.mrf.mxu0
  %512 = vmatprep.mubr.f32.mxu0 0.0
  %513 = vmatmul.mubr.f32.gmra.mxu0 %v436
  %v514 = vpop.f32.mrf.mxu0
  %v515 = vadd.f32 0.0, %v514
  %v516 = vpop.f32.mrf.mxu0
  %517 = vmatprep.mubr.f32.mxu0 0.0
  %518 = vmatmul.mubr.f32.gmra.mxu0 %v437
  %v519 = vpop.f32.mrf.mxu0
  %v520 = vadd.f32 0.0, %v519
  %v521 = vpop.f32.mrf.mxu0
  %522 = vmatprep.mubr.f32.mxu0 0.0
  %523 = vmatmul.mubr.f32.gmra.mxu0 %v438
  %v524 = vpop.f32.mrf.mxu0
  %v525 = vadd.f32 0.0, %v524
  %v526 = vpop.f32.mrf.mxu0
  %527 = vmatprep.mubr.f32.mxu0 0.0
  %528 = vmatmul.mubr.f32.gmra.mxu0 %v439
  %v529 = vpop.f32.mrf.mxu0
  %v530 = vadd.f32 0.0, %v529
  %v531 = vpop.f32.mrf.mxu0
  %532 = vmatprep.mubr.f32.mxu0 0.0
  %533 = vmatmul.mubr.f32.gmra.mxu0 %v440
  %v534 = vpop.f32.mrf.mxu0
  %v535 = vadd.f32 0.0, %v534
  %v536 = vpop.f32.mrf.mxu0
  %537 = vmatprep.mubr.f32.mxu0 0.0
  %538 = vmatmul.mubr.f32.gmra.mxu0 %v441
  %v539 = vpop.f32.mrf.mxu0
  %v540 = vadd.f32 0.0, %v539
  %v541 = vpop.f32.mrf.mxu0
  %542 = vmatprep.mubr.f32.mxu0 0.0
  %543 = vmatmul.mubr.f32.gmra.mxu0 %v442
  %v544 = vpop.f32.mrf.mxu0
  %v545 = vadd.f32 0.0, %v544
  %v546 = vpop.f32.mrf.mxu0
  %547 = vdwg.mxu0
  %v548 = vld [vmem:[%s3 + $0x158] sm:$0xff]
  %v549 = vld [vmem:[%s3 + $0x160] sm:$0xff]
  %v550 = vld [vmem:[%s3 + $0x168] sm:$0xff]
  %v551 = vld [vmem:[%s3 + $0x170] sm:$0xff]
  %v552 = vld [vmem:[%s3 + $0x178] sm:$0xff]
  %v553 = vld [vmem:[%s3 + $0x180] sm:$0xff]
  %v554 = vld [vmem:[%s3 + $0x188] sm:$0xff]
  %v555 = vld [vmem:[%s3 + $0x190] sm:$0xff]
  %v556 = vld [vmem:[%s3 + $0x198] sm:$0xff]
  %v557 = vld [vmem:[%s3 + $0x1a0] sm:$0xff]
  %v558 = vld [vmem:[%s3 + $0x1a8] sm:$0xff]
  %v559 = vld [vmem:[%s3 + $0x1b0] sm:$0xff]
  %v560 = vld [vmem:[%s3 + $0x1b8] sm:$0xff]
  %v561 = vld [vmem:[%s3 + $0x1c0] sm:$0xff]
  %v562 = vld [vmem:[%s3 + $0x1c8] sm:$0xff]
  %v563 = vld [vmem:[%s3 + $0x1d0] sm:$0xff]
  %564 = vmatprep.subr.mxu0 0.0
  %565 = vmatpush1.msra.mxu0 %v563
  %566 = vmatprep.subr.mxu0 0.0
  %567 = vmatpush1.msra.mxu0 %v562
  %568 = vmatprep.subr.mxu0 0.0
  %569 = vmatpush1.msra.mxu0 %v561
  %570 = vmatprep.subr.mxu0 0.0
  %571 = vmatpush1.msra.mxu0 %v560
  %572 = vmatprep.subr.mxu0 0.0
  %573 = vmatpush1.msra.mxu0 %v559
  %574 = vmatprep.subr.mxu0 0.0
  %575 = vmatpush1.msra.mxu0 %v558
  %576 = vmatprep.subr.mxu0 0.0
  %577 = vmatpush1.msra.mxu0 %v557
  %578 = vmatprep.subr.mxu0 0.0
  %579 = vmatpush1.msra.mxu0 %v556
  %580 = vmatprep.subr.mxu0 0.0
  %581 = vmatpush1.msra.mxu0 %v555
  %582 = vmatprep.subr.mxu0 0.0
  %583 = vmatpush1.msra.mxu0 %v554
  %584 = vmatprep.subr.mxu0 0.0
  %585 = vmatpush1.msra.mxu0 %v553
  %586 = vmatprep.subr.mxu0 0.0
  %587 = vmatpush1.msra.mxu0 %v552
  %588 = vmatprep.subr.mxu0 0.0
  %589 = vmatpush1.msra.mxu0 %v551
  %590 = vmatprep.subr.mxu0 0.0
  %591 = vmatpush1.msra.mxu0 %v550
  %592 = vmatprep.subr.mxu0 0.0
  %593 = vmatpush1.msra.mxu0 %v549
  %594 = vmatprep.subr.mxu0 0.0
  %595 = vmatpush1.msra.mxu0 %v548
  %596 = vmatprep.subr.mxu0 0.0
  %597 = vmatpush2.msra.mxu0 0.0
  %598 = vmatprep.subr.mxu0 0.0
  %599 = vmatpush2.msra.mxu0 0.0
  %600 = vmatprep.subr.mxu0 0.0
  %601 = vmatpush2.msra.mxu0 0.0
  %602 = vmatprep.subr.mxu0 0.0
  %603 = vmatpush2.msra.mxu0 0.0
  %604 = vmatprep.subr.mxu0 0.0
  %605 = vmatpush2.msra.mxu0 0.0
  %606 = vmatprep.subr.mxu0 0.0
  %607 = vmatpush2.msra.mxu0 0.0
  %608 = vmatprep.subr.mxu0 0.0
  %609 = vmatpush2.msra.mxu0 0.0
  %610 = vmatprep.subr.mxu0 0.0
  %611 = vmatpush2.msra.mxu0 0.0
  %612 = vmatprep.subr.mxu0 0.0
  %613 = vmatpush2.msra.mxu0 0.0
  %614 = vmatprep.subr.mxu0 0.0
  %615 = vmatpush2.msra.mxu0 0.0
  %616 = vmatprep.subr.mxu0 0.0
  %617 = vmatpush2.msra.mxu0 0.0
  %618 = vmatprep.subr.mxu0 0.0
  %619 = vmatpush2.msra.mxu0 0.0
  %620 = vmatprep.subr.mxu0 0.0
  %621 = vmatpush2.msra.mxu0 0.0
  %622 = vmatprep.subr.mxu0 0.0
  %623 = vmatpush2.msra.mxu0 0.0
  %624 = vmatprep.subr.mxu0 0.0
  %625 = vmatpush2.msra.mxu0 0.0
  %626 = vmatprep.subr.mxu0 0.0
  %627 = vmatpush2.msra.mxu0 0.0
  %628 = vmatprep.mubr.f32.mxu0 0.0
  %629 = vmatmul.mubr.f32.gmra.mxu0 %v510
  %v630 = vpop.f32.mrf.mxu0
  %v631 = vadd.f32 0.0, %v630
  %v632 = vpop.f32.mrf.mxu0
  %633 = vmatprep.mubr.f32.mxu0 0.0
  %634 = vmatmul.mubr.f32.gmra.mxu0 %v515
  %v635 = vpop.f32.mrf.mxu0
  %v636 = vadd.f32 0.0, %v635
  %v637 = vpop.f32.mrf.mxu0
  %638 = vmatprep.mubr.f32.mxu0 0.0
  %639 = vmatmul.mubr.f32.gmra.mxu0 %v520
  %v640 = vpop.f32.mrf.mxu0
  %v641 = vadd.f32 0.0, %v640
  %v642 = vpop.f32.mrf.mxu0
  %643 = vmatprep.mubr.f32.mxu0 0.0
  %644 = vmatmul.mubr.f32.gmra.mxu0 %v525
  %v645 = vpop.f32.mrf.mxu0
  %v646 = vadd.f32 0.0, %v645
  %v647 = vpop.f32.mrf.mxu0
  %648 = vmatprep.mubr.f32.mxu0 0.0
  %649 = vmatmul.mubr.f32.gmra.mxu0 %v530
  %v650 = vpop.f32.mrf.mxu0
  %v651 = vadd.f32 0.0, %v650
  %v652 = vpop.f32.mrf.mxu0
  %653 = vmatprep.mubr.f32.mxu0 0.0
  %654 = vmatmul.mubr.f32.gmra.mxu0 %v535
  %v655 = vpop.f32.mrf.mxu0
  %v656 = vadd.f32 0.0, %v655
  %v657 = vpop.f32.mrf.mxu0
  %658 = vmatprep.mubr.f32.mxu0 0.0
  %659 = vmatmul.mubr.f32.gmra.mxu0 %v540
  %v660 = vpop.f32.mrf.mxu0
  %v661 = vadd.f32 0.0, %v660
  %v662 = vpop.f32.mrf.mxu0
  %663 = vmatprep.mubr.f32.mxu0 0.0
  %664 = vmatmul.mubr.f32.gmra.mxu0 %v545
  %v665 = vpop.f32.mrf.mxu0
  %v666 = vadd.f32 0.0, %v665
  %v667 = vpop.f32.mrf.mxu0
  %668 = vdwg.mxu0
  %vm669 = vcmask 261120
  %670 = vst.msk [vmem:[#allocation4] sm:$0xff] %vm669, %v631
  %671 = vst.msk [vmem:[#allocation4 + $0x8] sm:$0xff] %vm669, %v636
  %672 = vst.msk [vmem:[#allocation4 + $0x10] sm:$0xff] %vm669, %v641
  %673 = vst.msk [vmem:[#allocation4 + $0x18] sm:$0xff] %vm669, %v646
  %674 = vst.msk [vmem:[#allocation4 + $0x20] sm:$0xff] %vm669, %v651
  %675 = vst.msk [vmem:[#allocation4 + $0x28] sm:$0xff] %vm669, %v656
  %676 = vst.msk [vmem:[#allocation4 + $0x30] sm:$0xff] %vm669, %v661
  %677 = vst.msk [vmem:[#allocation4 + $0x38] sm:$0xff] %vm669, %v666
  %v678 = vld [vmem:[%s1] sm:$0xff]
  %v679 = vld [vmem:[%s1 + $0x8] sm:$0xff]
  %v680 = vld [vmem:[%s1 + $0x10] sm:$0xff]
  %v681 = vld [vmem:[%s1 + $0x18] sm:$0xff]
  %v682 = vld [vmem:[%s1 + $0x20] sm:$0xff]
  %v683 = vld [vmem:[%s1 + $0x28] sm:$0xff]
  %v684 = vld [vmem:[%s1 + $0x30] sm:$0xff]
  %v685 = vld [vmem:[%s1 + $0x38] sm:$0xff]
  %v686 = vld [vmem:[%s1 + $0x40] sm:$0xff]
  %v687 = vld [vmem:[%s1 + $0x48] sm:$0xff]
  %v688 = vld [vmem:[%s1 + $0x50] sm:$0xff]
  %v689 = vld [vmem:[%s1 + $0x58] sm:$0xff]
  %v690 = vld [vmem:[%s1 + $0x60] sm:$0xff]
  %v691 = vld [vmem:[%s1 + $0x68] sm:$0xff]
  %v692 = vld [vmem:[%s1 + $0x70] sm:$0xff]
  %v693 = vld [vmem:[%s1 + $0x78] sm:$0xff]
  %v694 = vld [vmem:[%s1 + $0x80] sm:$0xff]
  %v695 = vld [vmem:[%s1 + $0x88] sm:$0xff]
  %v696 = vld [vmem:[%s1 + $0x90] sm:$0xff]
  %v697 = vld [vmem:[%s1 + $0x98] sm:$0xff]
  %v698 = vld [vmem:[%s1 + $0xa0] sm:$0xff]
  %v699 = vld [vmem:[%s1 + $0xa8] sm:$0xff]
  %v700 = vld [vmem:[%s1 + $0xb0] sm:$0xff]
  %v701 = vld [vmem:[%s1 + $0xb8] sm:$0xff]
  %v702 = vld [vmem:[%s1 + $0xc0] sm:$0xff]
  %v703 = vld [vmem:[%s1 + $0xc8] sm:$0xff]
  %v704 = vld [vmem:[%s1 + $0xd0] sm:$0xff]
  %v705 = vld [vmem:[%s1 + $0xd8] sm:$0xff]
  %v706 = vld [vmem:[%s1 + $0xe0] sm:$0xff]
  %v707 = vld [vmem:[%s1 + $0xe8] sm:$0xff]
  %v708 = vld [vmem:[%s1 + $0xf0] sm:$0xff]
  %v709 = vld [vmem:[%s1 + $0xf8] sm:$0xff]
  %v710 = vld [vmem:[%s3 + $0xf8] sm:$0xff]
  %v711 = vld [vmem:[%s3 + $0x100] sm:$0xff]
  %v712 = vld [vmem:[%s3 + $0x108] sm:$0xff]
  %v713 = vld [vmem:[%s3 + $0x110] sm:$0xff]
  %v715 = vsel %vm669, %v678, 0
  %v718 = vsel %vm669, %v679, 0
  %v721 = vsel %vm669, %v680, 0
  %v724 = vsel %vm669, %v681, 0
  %v727 = vsel %vm669, %v682, 0
  %v730 = vsel %vm669, %v683, 0
  %v733 = vsel %vm669, %v684, 0
  %v736 = vsel %vm669, %v685, 0
  %v739 = vsel %vm669, %v686, 0
  %v742 = vsel %vm669, %v687, 0
  %v745 = vsel %vm669, %v688, 0
  %v748 = vsel %vm669, %v689, 0
  %v751 = vsel %vm669, %v690, 0
  %v754 = vsel %vm669, %v691, 0
  %v757 = vsel %vm669, %v692, 0
  %v760 = vsel %vm669, %v693, 0
  %762 = vmatprep.subr.mxu0 0.0
  %763 = vmatpush1.msra.mxu0 0.0
  %764 = vmatprep.subr.mxu0 0.0
  %765 = vmatpush1.msra.mxu0 0.0
  %766 = vmatprep.subr.mxu0 0.0
  %767 = vmatpush1.msra.mxu0 0.0
  %768 = vmatprep.subr.mxu0 0.0
  %769 = vmatpush1.msra.mxu0 0.0
  %770 = vmatprep.subr.mxu0 0.0
  %771 = vmatpush1.msra.mxu0 0.0
  %772 = vmatprep.subr.mxu0 0.0
  %773 = vmatpush1.msra.mxu0 0.0
  %774 = vmatprep.subr.mxu0 0.0
  %775 = vmatpush1.msra.mxu0 0.0
  %776 = vmatprep.subr.mxu0 0.0
  %777 = vmatpush1.msra.mxu0 0.0
  %778 = vmatprep.subr.mxu0 0.0
  %779 = vmatpush1.msra.mxu0 0.0
  %780 = vmatprep.subr.mxu0 0.0
  %781 = vmatpush1.msra.mxu0 0.0
  %782 = vmatprep.subr.mxu0 0.0
  %783 = vmatpush1.msra.mxu0 0.0
  %784 = vmatprep.subr.mxu0 0.0
  %785 = vmatpush1.msra.mxu0 0.0
  %786 = vmatprep.subr.mxu0 0.0
  %787 = vmatpush1.msra.mxu0 %v713
  %788 = vmatprep.subr.mxu0 0.0
  %789 = vmatpush1.msra.mxu0 %v712
  %790 = vmatprep.subr.mxu0 0.0
  %791 = vmatpush1.msra.mxu0 %v711
  %792 = vmatprep.subr.mxu0 0.0
  %793 = vmatpush1.msra.mxu0 %v710
  %794 = vmatprep.subr.mxu0 0.0
  %795 = vmatpush2.msra.mxu0 0.0
  %796 = vmatprep.subr.mxu0 0.0
  %797 = vmatpush2.msra.mxu0 0.0
  %798 = vmatprep.subr.mxu0 0.0
  %799 = vmatpush2.msra.mxu0 0.0
  %800 = vmatprep.subr.mxu0 0.0
  %801 = vmatpush2.msra.mxu0 0.0
  %802 = vmatprep.subr.mxu0 0.0
  %803 = vmatpush2.msra.mxu0 0.0
  %804 = vmatprep.subr.mxu0 0.0
  %805 = vmatpush2.msra.mxu0 0.0
  %806 = vmatprep.subr.mxu0 0.0
  %807 = vmatpush2.msra.mxu0 0.0
  %808 = vmatprep.subr.mxu0 0.0
  %809 = vmatpush2.msra.mxu0 0.0
  %810 = vmatprep.subr.mxu0 0.0
  %811 = vmatpush2.msra.mxu0 0.0
  %812 = vmatprep.subr.mxu0 0.0
  %813 = vmatpush2.msra.mxu0 0.0
  %814 = vmatprep.subr.mxu0 0.0
  %815 = vmatpush2.msra.mxu0 0.0
  %816 = vmatprep.subr.mxu0 0.0
  %817 = vmatpush2.msra.mxu0 0.0
  %818 = vmatprep.subr.mxu0 0.0
  %819 = vmatpush2.msra.mxu0 0.0
  %820 = vmatprep.subr.mxu0 0.0
  %821 = vmatpush2.msra.mxu0 0.0
  %822 = vmatprep.subr.mxu0 0.0
  %823 = vmatpush2.msra.mxu0 0.0
  %824 = vmatprep.subr.mxu0 0.0
  %825 = vmatpush2.msra.mxu0 0.0
  %826 = vmatprep.mubr.f32.mxu0 0.0
  %827 = vmatmul.mubr.f32.gmra.mxu0 %v715
  %v828 = vpop.f32.mrf.mxu0
  %v829 = vadd.f32 0.0, %v828
  %v830 = vpop.f32.mrf.mxu0
  %831 = vmatprep.mubr.f32.mxu0 0.0
  %832 = vmatmul.mubr.f32.gmra.mxu0 %v718
  %v833 = vpop.f32.mrf.mxu0
  %v834 = vadd.f32 0.0, %v833
  %v835 = vpop.f32.mrf.mxu0
  %836 = vmatprep.mubr.f32.mxu0 0.0
  %837 = vmatmul.mubr.f32.gmra.mxu0 %v721
  %v838 = vpop.f32.mrf.mxu0
  %v839 = vadd.f32 0.0, %v838
  %v840 = vpop.f32.mrf.mxu0
  %841 = vmatprep.mubr.f32.mxu0 0.0
  %842 = vmatmul.mubr.f32.gmra.mxu0 %v724
  %v843 = vpop.f32.mrf.mxu0
  %v844 = vadd.f32 0.0, %v843
  %v845 = vpop.f32.mrf.mxu0
  %846 = vmatprep.mubr.f32.mxu0 0.0
  %847 = vmatmul.mubr.f32.gmra.mxu0 %v727
  %v848 = vpop.f32.mrf.mxu0
  %v849 = vadd.f32 0.0, %v848
  %v850 = vpop.f32.mrf.mxu0
  %851 = vmatprep.mubr.f32.mxu0 0.0
  %852 = vmatmul.mubr.f32.gmra.mxu0 %v730
  %v853 = vpop.f32.mrf.mxu0
  %v854 = vadd.f32 0.0, %v853
  %v855 = vpop.f32.mrf.mxu0
  %856 = vmatprep.mubr.f32.mxu0 0.0
  %857 = vmatmul.mubr.f32.gmra.mxu0 %v733
  %v858 = vpop.f32.mrf.mxu0
  %v859 = vadd.f32 0.0, %v858
  %v860 = vpop.f32.mrf.mxu0
  %861 = vmatprep.mubr.f32.mxu0 0.0
  %862 = vmatmul.mubr.f32.gmra.mxu0 %v736
  %v863 = vpop.f32.mrf.mxu0
  %v864 = vadd.f32 0.0, %v863
  %v865 = vpop.f32.mrf.mxu0
  %866 = vmatprep.mubr.f32.mxu0 0.0
  %867 = vmatmul.mubr.f32.gmra.mxu0 %v739
  %v868 = vpop.f32.mrf.mxu0
  %v869 = vadd.f32 0.0, %v868
  %v870 = vpop.f32.mrf.mxu0
  %871 = vmatprep.mubr.f32.mxu0 0.0
  %872 = vmatmul.mubr.f32.gmra.mxu0 %v742
  %v873 = vpop.f32.mrf.mxu0
  %v874 = vadd.f32 0.0, %v873
  %v875 = vpop.f32.mrf.mxu0
  %876 = vmatprep.mubr.f32.mxu0 0.0
  %877 = vmatmul.mubr.f32.gmra.mxu0 %v745
  %v878 = vpop.f32.mrf.mxu0
  %v879 = vadd.f32 0.0, %v878
  %v880 = vpop.f32.mrf.mxu0
  %881 = vmatprep.mubr.f32.mxu0 0.0
  %882 = vmatmul.mubr.f32.gmra.mxu0 %v748
  %v883 = vpop.f32.mrf.mxu0
  %v884 = vadd.f32 0.0, %v883
  %v885 = vpop.f32.mrf.mxu0
  %886 = vmatprep.mubr.f32.mxu0 0.0
  %887 = vmatmul.mubr.f32.gmra.mxu0 %v751
  %v888 = vpop.f32.mrf.mxu0
  %v889 = vadd.f32 0.0, %v888
  %v890 = vpop.f32.mrf.mxu0
  %891 = vmatprep.mubr.f32.mxu0 0.0
  %892 = vmatmul.mubr.f32.gmra.mxu0 %v754
  %v893 = vpop.f32.mrf.mxu0
  %v894 = vadd.f32 0.0, %v893
  %v895 = vpop.f32.mrf.mxu0
  %896 = vmatprep.mubr.f32.mxu0 0.0
  %897 = vmatmul.mubr.f32.gmra.mxu0 %v757
  %v898 = vpop.f32.mrf.mxu0
  %v899 = vadd.f32 0.0, %v898
  %v900 = vpop.f32.mrf.mxu0
  %901 = vmatprep.mubr.f32.mxu0 0.0
  %902 = vmatmul.mubr.f32.gmra.mxu0 %v760
  %v903 = vpop.f32.mrf.mxu0
  %v904 = vadd.f32 0.0, %v903
  %v905 = vpop.f32.mrf.mxu0
  %906 = vdwg.mxu0
  %907 = vmatprep.subr.mxu0 0.0
  %908 = vmatpush1.msra.mxu0 %v904
  %909 = vmatprep.subr.mxu0 0.0
  %910 = vmatpush1.msra.mxu0 %v899
  %911 = vmatprep.subr.mxu0 0.0
  %912 = vmatpush1.msra.mxu0 %v894
  %913 = vmatprep.subr.mxu0 0.0
  %914 = vmatpush1.msra.mxu0 %v889
  %915 = vmatprep.subr.mxu0 0.0
  %916 = vmatpush1.msra.mxu0 %v884
  %917 = vmatprep.subr.mxu0 0.0
  %918 = vmatpush1.msra.mxu0 %v879
  %919 = vmatprep.subr.mxu0 0.0
  %920 = vmatpush1.msra.mxu0 %v874
  %921 = vmatprep.subr.mxu0 0.0
  %922 = vmatpush1.msra.mxu0 %v869
  %923 = vmatprep.subr.mxu0 0.0
  %924 = vmatpush1.msra.mxu0 %v864
  %925 = vmatprep.subr.mxu0 0.0
  %926 = vmatpush1.msra.mxu0 %v859
  %927 = vmatprep.subr.mxu0 0.0
  %928 = vmatpush1.msra.mxu0 %v854
  %929 = vmatprep.subr.mxu0 0.0
  %930 = vmatpush1.msra.mxu0 %v849
  %931 = vmatprep.subr.mxu0 0.0
  %932 = vmatpush1.msra.mxu0 %v844
  %933 = vmatprep.subr.mxu0 0.0
  %934 = vmatpush1.msra.mxu0 %v839
  %935 = vmatprep.subr.mxu0 0.0
  %936 = vmatpush1.msra.mxu0 %v834
  %937 = vmatprep.subr.mxu0 0.0
  %938 = vmatpush1.msra.mxu0 %v829
  %939 = vmatprep.subr.mxu0 0.0
  %940 = vmatpush2.msra.mxu0 0.0
  %941 = vmatprep.subr.mxu0 0.0
  %942 = vmatpush2.msra.mxu0 0.0
  %943 = vmatprep.subr.mxu0 0.0
  %944 = vmatpush2.msra.mxu0 0.0
  %945 = vmatprep.subr.mxu0 0.0
  %946 = vmatpush2.msra.mxu0 0.0
  %947 = vmatprep.subr.mxu0 0.0
  %948 = vmatpush2.msra.mxu0 0.0
  %949 = vmatprep.subr.mxu0 0.0
  %950 = vmatpush2.msra.mxu0 0.0
  %951 = vmatprep.subr.mxu0 0.0
  %952 = vmatpush2.msra.mxu0 0.0
  %953 = vmatprep.subr.mxu0 0.0
  %954 = vmatpush2.msra.mxu0 0.0
  %955 = vmatprep.subr.mxu0 0.0
  %956 = vmatpush2.msra.mxu0 0.0
  %957 = vmatprep.subr.mxu0 0.0
  %958 = vmatpush2.msra.mxu0 0.0
  %959 = vmatprep.subr.mxu0 0.0
  %960 = vmatpush2.msra.mxu0 0.0
  %961 = vmatprep.subr.mxu0 0.0
  %962 = vmatpush2.msra.mxu0 0.0
  %963 = vmatprep.subr.mxu0 0.0
  %964 = vmatpush2.msra.mxu0 0.0
  %965 = vmatprep.subr.mxu0 0.0
  %966 = vmatpush2.msra.mxu0 0.0
  %967 = vmatprep.subr.mxu0 0.0
  %968 = vmatpush2.msra.mxu0 0.0
  %969 = vmatprep.subr.mxu0 0.0
  %970 = vmatpush2.msra.mxu0 0.0
  %971 = vmatprep.mubr.f32.mxu0 0.0
  %972 = vmatmul.mubr.f32.gmra.mxu0 %v435
  %v973 = vpop.f32.mrf.mxu0
  %v974 = vadd.f32 0.0, %v973
  %v975 = vpop.f32.mrf.mxu0
  %976 = vmatprep.mubr.f32.mxu0 0.0
  %977 = vmatmul.mubr.f32.gmra.mxu0 %v436
  %v978 = vpop.f32.mrf.mxu0
  %v979 = vadd.f32 0.0, %v978
  %v980 = vpop.f32.mrf.mxu0
  %981 = vmatprep.mubr.f32.mxu0 0.0
  %982 = vmatmul.mubr.f32.gmra.mxu0 %v437
  %v983 = vpop.f32.mrf.mxu0
  %v984 = vadd.f32 0.0, %v983
  %v985 = vpop.f32.mrf.mxu0
  %986 = vmatprep.mubr.f32.mxu0 0.0
  %987 = vmatmul.mubr.f32.gmra.mxu0 %v438
  %v988 = vpop.f32.mrf.mxu0
  %v989 = vadd.f32 0.0, %v988
  %v990 = vpop.f32.mrf.mxu0
  %991 = vmatprep.mubr.f32.mxu0 0.0
  %992 = vmatmul.mubr.f32.gmra.mxu0 %v439
  %v993 = vpop.f32.mrf.mxu0
  %v994 = vadd.f32 0.0, %v993
  %v995 = vpop.f32.mrf.mxu0
  %996 = vmatprep.mubr.f32.mxu0 0.0
  %997 = vmatmul.mubr.f32.gmra.mxu0 %v440
  %v998 = vpop.f32.mrf.mxu0
  %v999 = vadd.f32 0.0, %v998
  %v1000 = vpop.f32.mrf.mxu0
  %1001 = vmatprep.mubr.f32.mxu0 0.0
  %1002 = vmatmul.mubr.f32.gmra.mxu0 %v441
  %v1003 = vpop.f32.mrf.mxu0
  %v1004 = vadd.f32 0.0, %v1003
  %v1005 = vpop.f32.mrf.mxu0
  %1006 = vmatprep.mubr.f32.mxu0 0.0
  %1007 = vmatmul.mubr.f32.gmra.mxu0 %v442
  %v1008 = vpop.f32.mrf.mxu0
  %v1009 = vadd.f32 0.0, %v1008
  %v1010 = vpop.f32.mrf.mxu0
  %1011 = vdwg.mxu0
  %vm1012 = vcmask 130048
  %1013 = vst.msk [vmem:[#allocation2] sm:$0xff] %vm1012, %v974
  %1014 = vst.msk [vmem:[#allocation2 + $0x8] sm:$0xff] %vm1012, %v979
  %1015 = vst.msk [vmem:[#allocation2 + $0x10] sm:$0xff] %vm1012, %v984
  %1016 = vst.msk [vmem:[#allocation2 + $0x18] sm:$0xff] %vm1012, %v989
  %1017 = vst.msk [vmem:[#allocation2 + $0x20] sm:$0xff] %vm1012, %v994
  %1018 = vst.msk [vmem:[#allocation2 + $0x28] sm:$0xff] %vm1012, %v999
  %1019 = vst.msk [vmem:[#allocation2 + $0x30] sm:$0xff] %vm1012, %v1004
  %1020 = vst.msk [vmem:[#allocation2 + $0x38] sm:$0xff] %vm1012, %v1009
  %v1021 = vld [vmem:[%s3 + $0x118] sm:$0xff]
  %v1022 = vld [vmem:[%s3 + $0x120] sm:$0xff]
  %v1023 = vld [vmem:[%s3 + $0x128] sm:$0xff]
  %v1024 = vld [vmem:[%s3 + $0x130] sm:$0xff]
  %v1025 = vld [vmem:[%s3 + $0x138] sm:$0xff]
  %v1026 = vld [vmem:[%s3 + $0x140] sm:$0xff]
  %v1027 = vld [vmem:[%s3 + $0x148] sm:$0xff]
  %v1028 = vld [vmem:[%s3 + $0x150] sm:$0xff]
  %vm1029 = vcmask 523264
  %v1031 = vsel %vm1029, %v694, 0
  %v1034 = vsel %vm1029, %v695, 0
  %v1037 = vsel %vm1029, %v696, 0
  %v1040 = vsel %vm1029, %v697, 0
  %v1043 = vsel %vm1029, %v698, 0
  %v1046 = vsel %vm1029, %v699, 0
  %v1049 = vsel %vm1029, %v700, 0
  %v1052 = vsel %vm1029, %v701, 0
  %v1055 = vsel %vm1029, %v702, 0
  %v1058 = vsel %vm1029, %v703, 0
  %v1061 = vsel %vm1029, %v704, 0
  %v1064 = vsel %vm1029, %v705, 0
  %v1067 = vsel %vm1029, %v706, 0
  %v1070 = vsel %vm1029, %v707, 0
  %v1073 = vsel %vm1029, %v708, 0
  %v1076 = vsel %vm1029, %v709, 0
  %1078 = vmatprep.subr.mxu0 0.0
  %1079 = vmatpush1.msra.mxu0 0.0
  %1080 = vmatprep.subr.mxu0 0.0
  %1081 = vmatpush1.msra.mxu0 0.0
  %1082 = vmatprep.subr.mxu0 0.0
  %1083 = vmatpush1.msra.mxu0 0.0
  %1084 = vmatprep.subr.mxu0 0.0
  %1085 = vmatpush1.msra.mxu0 0.0
  %1086 = vmatprep.subr.mxu0 0.0
  %1087 = vmatpush1.msra.mxu0 0.0
  %1088 = vmatprep.subr.mxu0 0.0
  %1089 = vmatpush1.msra.mxu0 0.0
  %1090 = vmatprep.subr.mxu0 0.0
  %1091 = vmatpush1.msra.mxu0 0.0
  %1092 = vmatprep.subr.mxu0 0.0
  %1093 = vmatpush1.msra.mxu0 0.0
  %1094 = vmatprep.subr.mxu0 0.0
  %1095 = vmatpush1.msra.mxu0 %v1028
  %1096 = vmatprep.subr.mxu0 0.0
  %1097 = vmatpush1.msra.mxu0 %v1027
  %1098 = vmatprep.subr.mxu0 0.0
  %1099 = vmatpush1.msra.mxu0 %v1026
  %1100 = vmatprep.subr.mxu0 0.0
  %1101 = vmatpush1.msra.mxu0 %v1025
  %1102 = vmatprep.subr.mxu0 0.0
  %1103 = vmatpush1.msra.mxu0 %v1024
  %1104 = vmatprep.subr.mxu0 0.0
  %1105 = vmatpush1.msra.mxu0 %v1023
  %1106 = vmatprep.subr.mxu0 0.0
  %1107 = vmatpush1.msra.mxu0 %v1022
  %1108 = vmatprep.subr.mxu0 0.0
  %1109 = vmatpush1.msra.mxu0 %v1021
  %1110 = vmatprep.subr.mxu0 0.0
  %1111 = vmatpush2.msra.mxu0 0.0
  %1112 = vmatprep.subr.mxu0 0.0
  %1113 = vmatpush2.msra.mxu0 0.0
  %1114 = vmatprep.subr.mxu0 0.0
  %1115 = vmatpush2.msra.mxu0 0.0
  %1116 = vmatprep.subr.mxu0 0.0
  %1117 = vmatpush2.msra.mxu0 0.0
  %1118 = vmatprep.subr.mxu0 0.0
  %1119 = vmatpush2.msra.mxu0 0.0
  %1120 = vmatprep.subr.mxu0 0.0
  %1121 = vmatpush2.msra.mxu0 0.0
  %1122 = vmatprep.subr.mxu0 0.0
  %1123 = vmatpush2.msra.mxu0 0.0
  %1124 = vmatprep.subr.mxu0 0.0
  %1125 = vmatpush2.msra.mxu0 0.0
  %1126 = vmatprep.subr.mxu0 0.0
  %1127 = vmatpush2.msra.mxu0 0.0
  %1128 = vmatprep.subr.mxu0 0.0
  %1129 = vmatpush2.msra.mxu0 0.0
  %1130 = vmatprep.subr.mxu0 0.0
  %1131 = vmatpush2.msra.mxu0 0.0
  %1132 = vmatprep.subr.mxu0 0.0
  %1133 = vmatpush2.msra.mxu0 0.0
  %1134 = vmatprep.subr.mxu0 0.0
  %1135 = vmatpush2.msra.mxu0 0.0
  %1136 = vmatprep.subr.mxu0 0.0
  %1137 = vmatpush2.msra.mxu0 0.0
  %1138 = vmatprep.subr.mxu0 0.0
  %1139 = vmatpush2.msra.mxu0 0.0
  %1140 = vmatprep.subr.mxu0 0.0
  %1141 = vmatpush2.msra.mxu0 0.0
  %1142 = vmatprep.mubr.f32.mxu0 0.0
  %1143 = vmatmul.mubr.f32.gmra.mxu0 %v1031
  %v1144 = vpop.f32.mrf.mxu0
  %v1145 = vadd.f32 0.0, %v1144
  %v1146 = vpop.f32.mrf.mxu0
  %1147 = vmatprep.mubr.f32.mxu0 0.0
  %1148 = vmatmul.mubr.f32.gmra.mxu0 %v1034
  %v1149 = vpop.f32.mrf.mxu0
  %v1150 = vadd.f32 0.0, %v1149
  %v1151 = vpop.f32.mrf.mxu0
  %1152 = vmatprep.mubr.f32.mxu0 0.0
  %1153 = vmatmul.mubr.f32.gmra.mxu0 %v1037
  %v1154 = vpop.f32.mrf.mxu0
  %v1155 = vadd.f32 0.0, %v1154
  %v1156 = vpop.f32.mrf.mxu0
  %1157 = vmatprep.mubr.f32.mxu0 0.0
  %1158 = vmatmul.mubr.f32.gmra.mxu0 %v1040
  %v1159 = vpop.f32.mrf.mxu0
  %v1160 = vadd.f32 0.0, %v1159
  %v1161 = vpop.f32.mrf.mxu0
  %1162 = vmatprep.mubr.f32.mxu0 0.0
  %1163 = vmatmul.mubr.f32.gmra.mxu0 %v1043
  %v1164 = vpop.f32.mrf.mxu0
  %v1165 = vadd.f32 0.0, %v1164
  %v1166 = vpop.f32.mrf.mxu0
  %1167 = vmatprep.mubr.f32.mxu0 0.0
  %1168 = vmatmul.mubr.f32.gmra.mxu0 %v1046
  %v1169 = vpop.f32.mrf.mxu0
  %v1170 = vadd.f32 0.0, %v1169
  %v1171 = vpop.f32.mrf.mxu0
  %1172 = vmatprep.mubr.f32.mxu0 0.0
  %1173 = vmatmul.mubr.f32.gmra.mxu0 %v1049
  %v1174 = vpop.f32.mrf.mxu0
  %v1175 = vadd.f32 0.0, %v1174
  %v1176 = vpop.f32.mrf.mxu0
  %1177 = vmatprep.mubr.f32.mxu0 0.0
  %1178 = vmatmul.mubr.f32.gmra.mxu0 %v1052
  %v1179 = vpop.f32.mrf.mxu0
  %v1180 = vadd.f32 0.0, %v1179
  %v1181 = vpop.f32.mrf.mxu0
  %1182 = vmatprep.mubr.f32.mxu0 0.0
  %1183 = vmatmul.mubr.f32.gmra.mxu0 %v1055
  %v1184 = vpop.f32.mrf.mxu0
  %v1185 = vadd.f32 0.0, %v1184
  %v1186 = vpop.f32.mrf.mxu0
  %1187 = vmatprep.mubr.f32.mxu0 0.0
  %1188 = vmatmul.mubr.f32.gmra.mxu0 %v1058
  %v1189 = vpop.f32.mrf.mxu0
  %v1190 = vadd.f32 0.0, %v1189
  %v1191 = vpop.f32.mrf.mxu0
  %1192 = vmatprep.mubr.f32.mxu0 0.0
  %1193 = vmatmul.mubr.f32.gmra.mxu0 %v1061
  %v1194 = vpop.f32.mrf.mxu0
  %v1195 = vadd.f32 0.0, %v1194
  %v1196 = vpop.f32.mrf.mxu0
  %1197 = vmatprep.mubr.f32.mxu0 0.0
  %1198 = vmatmul.mubr.f32.gmra.mxu0 %v1064
  %v1199 = vpop.f32.mrf.mxu0
  %v1200 = vadd.f32 0.0, %v1199
  %v1201 = vpop.f32.mrf.mxu0
  %1202 = vmatprep.mubr.f32.mxu0 0.0
  %1203 = vmatmul.mubr.f32.gmra.mxu0 %v1067
  %v1204 = vpop.f32.mrf.mxu0
  %v1205 = vadd.f32 0.0, %v1204
  %v1206 = vpop.f32.mrf.mxu0
  %1207 = vmatprep.mubr.f32.mxu0 0.0
  %1208 = vmatmul.mubr.f32.gmra.mxu0 %v1070
  %v1209 = vpop.f32.mrf.mxu0
  %v1210 = vadd.f32 0.0, %v1209
  %v1211 = vpop.f32.mrf.mxu0
  %1212 = vmatprep.mubr.f32.mxu0 0.0
  %1213 = vmatmul.mubr.f32.gmra.mxu0 %v1073
  %v1214 = vpop.f32.mrf.mxu0
  %v1215 = vadd.f32 0.0, %v1214
  %v1216 = vpop.f32.mrf.mxu0
  %1217 = vmatprep.mubr.f32.mxu0 0.0
  %1218 = vmatmul.mubr.f32.gmra.mxu0 %v1076
  %v1219 = vpop.f32.mrf.mxu0
  %v1220 = vadd.f32 0.0, %v1219
  %v1221 = vpop.f32.mrf.mxu0
  %1222 = vdwg.mxu0
  %1223 = vmatprep.subr.mxu0 0.0
  %1224 = vmatpush1.msra.mxu0 %v1220
  %1225 = vmatprep.subr.mxu0 0.0
  %1226 = vmatpush1.msra.mxu0 %v1215
  %1227 = vmatprep.subr.mxu0 0.0
  %1228 = vmatpush1.msra.mxu0 %v1210
  %1229 = vmatprep.subr.mxu0 0.0
  %1230 = vmatpush1.msra.mxu0 %v1205
  %1231 = vmatprep.subr.mxu0 0.0
  %1232 = vmatpush1.msra.mxu0 %v1200
  %1233 = vmatprep.subr.mxu0 0.0
  %1234 = vmatpush1.msra.mxu0 %v1195
  %1235 = vmatprep.subr.mxu0 0.0
  %1236 = vmatpush1.msra.mxu0 %v1190
  %1237 = vmatprep.subr.mxu0 0.0
  %1238 = vmatpush1.msra.mxu0 %v1185
  %1239 = vmatprep.subr.mxu0 0.0
  %1240 = vmatpush1.msra.mxu0 %v1180
  %1241 = vmatprep.subr.mxu0 0.0
  %1242 = vmatpush1.msra.mxu0 %v1175
  %1243 = vmatprep.subr.mxu0 0.0
  %1244 = vmatpush1.msra.mxu0 %v1170
  %1245 = vmatprep.subr.mxu0 0.0
  %1246 = vmatpush1.msra.mxu0 %v1165
  %1247 = vmatprep.subr.mxu0 0.0
  %1248 = vmatpush1.msra.mxu0 %v1160
  %1249 = vmatprep.subr.mxu0 0.0
  %1250 = vmatpush1.msra.mxu0 %v1155
  %1251 = vmatprep.subr.mxu0 0.0
  %1252 = vmatpush1.msra.mxu0 %v1150
  %1253 = vmatprep.subr.mxu0 0.0
  %1254 = vmatpush1.msra.mxu0 %v1145
  %1255 = vmatprep.subr.mxu0 0.0
  %1256 = vmatpush2.msra.mxu0 0.0
  %1257 = vmatprep.subr.mxu0 0.0
  %1258 = vmatpush2.msra.mxu0 0.0
  %1259 = vmatprep.subr.mxu0 0.0
  %1260 = vmatpush2.msra.mxu0 0.0
  %1261 = vmatprep.subr.mxu0 0.0
  %1262 = vmatpush2.msra.mxu0 0.0
  %1263 = vmatprep.subr.mxu0 0.0
  %1264 = vmatpush2.msra.mxu0 0.0
  %1265 = vmatprep.subr.mxu0 0.0
  %1266 = vmatpush2.msra.mxu0 0.0
  %1267 = vmatprep.subr.mxu0 0.0
  %1268 = vmatpush2.msra.mxu0 0.0
  %1269 = vmatprep.subr.mxu0 0.0
  %1270 = vmatpush2.msra.mxu0 0.0
  %1271 = vmatprep.subr.mxu0 0.0
  %1272 = vmatpush2.msra.mxu0 0.0
  %1273 = vmatprep.subr.mxu0 0.0
  %1274 = vmatpush2.msra.mxu0 0.0
  %1275 = vmatprep.subr.mxu0 0.0
  %1276 = vmatpush2.msra.mxu0 0.0
  %1277 = vmatprep.subr.mxu0 0.0
  %1278 = vmatpush2.msra.mxu0 0.0
  %1279 = vmatprep.subr.mxu0 0.0
  %1280 = vmatpush2.msra.mxu0 0.0
  %1281 = vmatprep.subr.mxu0 0.0
  %1282 = vmatpush2.msra.mxu0 0.0
  %1283 = vmatprep.subr.mxu0 0.0
  %1284 = vmatpush2.msra.mxu0 0.0
  %1285 = vmatprep.subr.mxu0 0.0
  %1286 = vmatpush2.msra.mxu0 0.0
  %1287 = vmatprep.mubr.f32.mxu0 0.0
  %1288 = vmatmul.mubr.f32.gmra.mxu0 %v435
  %v1289 = vpop.f32.mrf.mxu0
  %v1290 = vadd.f32 0.0, %v1289
  %v1291 = vpop.f32.mrf.mxu0
  %1292 = vmatprep.mubr.f32.mxu0 0.0
  %1293 = vmatmul.mubr.f32.gmra.mxu0 %v436
  %v1294 = vpop.f32.mrf.mxu0
  %v1295 = vadd.f32 0.0, %v1294
  %v1296 = vpop.f32.mrf.mxu0
  %1297 = vmatprep.mubr.f32.mxu0 0.0
  %1298 = vmatmul.mubr.f32.gmra.mxu0 %v437
  %v1299 = vpop.f32.mrf.mxu0
  %v1300 = vadd.f32 0.0, %v1299
  %v1301 = vpop.f32.mrf.mxu0
  %1302 = vmatprep.mubr.f32.mxu0 0.0
  %1303 = vmatmul.mubr.f32.gmra.mxu0 %v438
  %v1304 = vpop.f32.mrf.mxu0
  %v1305 = vadd.f32 0.0, %v1304
  %v1306 = vpop.f32.mrf.mxu0
  %1307 = vmatprep.mubr.f32.mxu0 0.0
  %1308 = vmatmul.mubr.f32.gmra.mxu0 %v439
  %v1309 = vpop.f32.mrf.mxu0
  %v1310 = vadd.f32 0.0, %v1309
  %v1311 = vpop.f32.mrf.mxu0
  %1312 = vmatprep.mubr.f32.mxu0 0.0
  %1313 = vmatmul.mubr.f32.gmra.mxu0 %v440
  %v1314 = vpop.f32.mrf.mxu0
  %v1315 = vadd.f32 0.0, %v1314
  %v1316 = vpop.f32.mrf.mxu0
  %1317 = vmatprep.mubr.f32.mxu0 0.0
  %1318 = vmatmul.mubr.f32.gmra.mxu0 %v441
  %v1319 = vpop.f32.mrf.mxu0
  %v1320 = vadd.f32 0.0, %v1319
  %v1321 = vpop.f32.mrf.mxu0
  %1322 = vmatprep.mubr.f32.mxu0 0.0
  %1323 = vmatmul.mubr.f32.gmra.mxu0 %v442
  %v1324 = vpop.f32.mrf.mxu0
  %v1325 = vadd.f32 0.0, %v1324
  %v1326 = vpop.f32.mrf.mxu0
  %1327 = vdwg.mxu0
  %1328 = vst.msk [vmem:[#allocation3] sm:$0xff] %vm669, %v1290
  %1329 = vst.msk [vmem:[#allocation3 + $0x8] sm:$0xff] %vm669, %v1295
  %1330 = vst.msk [vmem:[#allocation3 + $0x10] sm:$0xff] %vm669, %v1300
  %1331 = vst.msk [vmem:[#allocation3 + $0x18] sm:$0xff] %vm669, %v1305
  %1332 = vst.msk [vmem:[#allocation3 + $0x20] sm:$0xff] %vm669, %v1310
  %1333 = vst.msk [vmem:[#allocation3 + $0x28] sm:$0xff] %vm669, %v1315
  %1334 = vst.msk [vmem:[#allocation3 + $0x30] sm:$0xff] %vm669, %v1320
  %1335 = vst.msk [vmem:[#allocation3 + $0x38] sm:$0xff] %vm669, %v1325
  %v1336 = vld [vmem:[%s3 + $0x1d8] sm:$0xff]
  %v1337 = vld [vmem:[%s3 + $0x1e0] sm:$0xff]
  %v1338 = vld [vmem:[%s2] sm:$0xff]
  %v1339 = vld [vmem:[%s2 + $0x8] sm:$0xff]
  %v1340 = vld [vmem:[%s2 + $0x10] sm:$0xff]
  %v1341 = vld [vmem:[%s2 + $0x18] sm:$0xff]
  %v1342 = vld [vmem:[%s3 + $0x1e8] sm:$0xff]
  %v1343 = vld [vmem:[%s3 + $0x1f0] sm:$0xff]
  %v1344 = vld [vmem:[%s3 + $0x1f8] sm:$0xff]
  %v1345 = vld [vmem:[%s3 + $0x200] sm:$0xff]
  %v1346 = vld [vmem:[%s3 + $0x208] sm:$0x1]
  %v1347 = vld [vmem:[%s3 + $0x270] sm:$0xff]
  %v1348 = vld [vmem:[%s3 + $0x278] sm:$0xff]
  %v1349 = vld [vmem:[#allocation2] sm:$0xff]
  %v1350 = vld [vmem:[#allocation2 + $0x8] sm:$0xff]
  %v1351 = vld [vmem:[#allocation4] sm:$0xff]
  %v1352 = vld [vmem:[#allocation4 + $0x8] sm:$0xff]
  %v1354 = vsel %vm1012, %v1338, 0
  %v1357 = vsel %vm1012, %v1339, 0
  %1359 = vmatprep.subr.mxu0 0.0
  %1360 = vmatpush1.msra.mxu0 0.0
  %1361 = vmatprep.subr.mxu0 0.0
  %1362 = vmatpush1.msra.mxu0 0.0
  %1363 = vmatprep.subr.mxu0 0.0
  %1364 = vmatpush1.msra.mxu0 0.0
  %1365 = vmatprep.subr.mxu0 0.0
  %1366 = vmatpush1.msra.mxu0 0.0
  %1367 = vmatprep.subr.mxu0 0.0
  %1368 = vmatpush1.msra.mxu0 0.0
  %1369 = vmatprep.subr.mxu0 0.0
  %1370 = vmatpush1.msra.mxu0 0.0
  %1371 = vmatprep.subr.mxu0 0.0
  %1372 = vmatpush1.msra.mxu0 0.0
  %1373 = vmatprep.subr.mxu0 0.0
  %1374 = vmatpush1.msra.mxu0 0.0
  %1375 = vmatprep.subr.mxu0 0.0
  %1376 = vmatpush1.msra.mxu0 0.0
  %1377 = vmatprep.subr.mxu0 0.0
  %1378 = vmatpush1.msra.mxu0 0.0
  %1379 = vmatprep.subr.mxu0 0.0
  %1380 = vmatpush1.msra.mxu0 0.0
  %1381 = vmatprep.subr.mxu0 0.0
  %1382 = vmatpush1.msra.mxu0 0.0
  %1383 = vmatprep.subr.mxu0 0.0
  %1384 = vmatpush1.msra.mxu0 0.0
  %1385 = vmatprep.subr.mxu0 0.0
  %1386 = vmatpush1.msra.mxu0 0.0
  %1387 = vmatprep.subr.mxu0 0.0
  %1388 = vmatpush1.msra.mxu0 %v1337
  %1389 = vmatprep.subr.mxu0 0.0
  %1390 = vmatpush1.msra.mxu0 %v1336
  %1391 = vmatprep.subr.mxu0 0.0
  %1392 = vmatpush2.msra.mxu0 0.0
  %1393 = vmatprep.subr.mxu0 0.0
  %1394 = vmatpush2.msra.mxu0 0.0
  %1395 = vmatprep.subr.mxu0 0.0
  %1396 = vmatpush2.msra.mxu0 0.0
  %1397 = vmatprep.subr.mxu0 0.0
  %1398 = vmatpush2.msra.mxu0 0.0
  %1399 = vmatprep.subr.mxu0 0.0
  %1400 = vmatpush2.msra.mxu0 0.0
  %1401 = vmatprep.subr.mxu0 0.0
  %1402 = vmatpush2.msra.mxu0 0.0
  %1403 = vmatprep.subr.mxu0 0.0
  %1404 = vmatpush2.msra.mxu0 0.0
  %1405 = vmatprep.subr.mxu0 0.0
  %1406 = vmatpush2.msra.mxu0 0.0
  %1407 = vmatprep.subr.mxu0 0.0
  %1408 = vmatpush2.msra.mxu0 0.0
  %1409 = vmatprep.subr.mxu0 0.0
  %1410 = vmatpush2.msra.mxu0 0.0
  %1411 = vmatprep.subr.mxu0 0.0
  %1412 = vmatpush2.msra.mxu0 0.0
  %1413 = vmatprep.subr.mxu0 0.0
  %1414 = vmatpush2.msra.mxu0 0.0
  %1415 = vmatprep.subr.mxu0 0.0
  %1416 = vmatpush2.msra.mxu0 0.0
  %1417 = vmatprep.subr.mxu0 0.0
  %1418 = vmatpush2.msra.mxu0 0.0
  %1419 = vmatprep.subr.mxu0 0.0
  %1420 = vmatpush2.msra.mxu0 0.0
  %1421 = vmatprep.subr.mxu0 0.0
  %1422 = vmatpush2.msra.mxu0 0.0
  %1423 = vmatprep.mubr.f32.mxu0 0.0
  %1424 = vmatmul.mubr.f32.gmra.mxu0 %v1354
  %v1425 = vpop.f32.mrf.mxu0
  %v1426 = vadd.f32 0.0, %v1425
  %v1427 = vpop.f32.mrf.mxu0
  %1428 = vmatprep.mubr.f32.mxu0 0.0
  %1429 = vmatmul.mubr.f32.gmra.mxu0 %v1357
  %v1430 = vpop.f32.mrf.mxu0
  %v1431 = vadd.f32 0.0, %v1430
  %v1432 = vpop.f32.mrf.mxu0
  %1433 = vdwg.mxu0
  %v1434 = vadd.f32 %v1351, %v1426
  %v1435 = vadd.f32 %v1352, %v1431
  %v1437 = vsel %vm1012, %v1349, 0
  %v1440 = vsel %vm1012, %v1350, 0
  %1442 = vmatprep.subr.mxu0 0.0
  %1443 = vmatpush1.msra.mxu0 0.0
  %1444 = vmatprep.subr.mxu0 0.0
  %1445 = vmatpush1.msra.mxu0 0.0
  %1446 = vmatprep.subr.mxu0 0.0
  %1447 = vmatpush1.msra.mxu0 0.0
  %1448 = vmatprep.subr.mxu0 0.0
  %1449 = vmatpush1.msra.mxu0 0.0
  %1450 = vmatprep.subr.mxu0 0.0
  %1451 = vmatpush1.msra.mxu0 0.0
  %1452 = vmatprep.subr.mxu0 0.0
  %1453 = vmatpush1.msra.mxu0 0.0
  %1454 = vmatprep.subr.mxu0 0.0
  %1455 = vmatpush1.msra.mxu0 0.0
  %1456 = vmatprep.subr.mxu0 0.0
  %1457 = vmatpush1.msra.mxu0 0.0
  %1458 = vmatprep.subr.mxu0 0.0
  %1459 = vmatpush1.msra.mxu0 0.0
  %1460 = vmatprep.subr.mxu0 0.0
  %1461 = vmatpush1.msra.mxu0 0.0
  %1462 = vmatprep.subr.mxu0 0.0
  %1463 = vmatpush1.msra.mxu0 0.0
  %1464 = vmatprep.subr.mxu0 0.0
  %1465 = vmatpush1.msra.mxu0 0.0
  %1466 = vmatprep.subr.mxu0 0.0
  %1467 = vmatpush1.msra.mxu0 0.0
  %1468 = vmatprep.subr.mxu0 0.0
  %1469 = vmatpush1.msra.mxu0 0.0
  %1470 = vmatprep.subr.mxu0 0.0
  %1471 = vmatpush1.msra.mxu0 %v1435
  %1472 = vmatprep.subr.mxu0 0.0
  %1473 = vmatpush1.msra.mxu0 %v1434
  %1474 = vmatprep.subr.mxu0 0.0
  %1475 = vmatpush2.msra.mxu0 0.0
  %1476 = vmatprep.subr.mxu0 0.0
  %1477 = vmatpush2.msra.mxu0 0.0
  %1478 = vmatprep.subr.mxu0 0.0
  %1479 = vmatpush2.msra.mxu0 0.0
  %1480 = vmatprep.subr.mxu0 0.0
  %1481 = vmatpush2.msra.mxu0 0.0
  %1482 = vmatprep.subr.mxu0 0.0
  %1483 = vmatpush2.msra.mxu0 0.0
  %1484 = vmatprep.subr.mxu0 0.0
  %1485 = vmatpush2.msra.mxu0 0.0
  %1486 = vmatprep.subr.mxu0 0.0
  %1487 = vmatpush2.msra.mxu0 0.0
  %1488 = vmatprep.subr.mxu0 0.0
  %1489 = vmatpush2.msra.mxu0 0.0
  %1490 = vmatprep.subr.mxu0 0.0
  %1491 = vmatpush2.msra.mxu0 0.0
  %1492 = vmatprep.subr.mxu0 0.0
  %1493 = vmatpush2.msra.mxu0 0.0
  %1494 = vmatprep.subr.mxu0 0.0
  %1495 = vmatpush2.msra.mxu0 0.0
  %1496 = vmatprep.subr.mxu0 0.0
  %1497 = vmatpush2.msra.mxu0 0.0
  %1498 = vmatprep.subr.mxu0 0.0
  %1499 = vmatpush2.msra.mxu0 0.0
  %1500 = vmatprep.subr.mxu0 0.0
  %1501 = vmatpush2.msra.mxu0 0.0
  %1502 = vmatprep.subr.mxu0 0.0
  %1503 = vmatpush2.msra.mxu0 0.0
  %1504 = vmatprep.subr.mxu0 0.0
  %1505 = vmatpush2.msra.mxu0 0.0
  %1506 = vmatprep.mubr.f32.mxu0 0.0
  %1507 = vmatmul.mubr.f32.gmra.mxu0 %v1437
  %v1508 = vpop.f32.mrf.mxu0
  %v1509 = vadd.f32 0.0, %v1508
  %v1510 = vpop.f32.mrf.mxu0
  %1511 = vmatprep.mubr.f32.mxu0 0.0
  %1512 = vmatmul.mubr.f32.gmra.mxu0 %v1440
  %v1513 = vpop.f32.mrf.mxu0
  %v1514 = vadd.f32 0.0, %v1513
  %v1515 = vpop.f32.mrf.mxu0
  %1516 = vdwg.mxu0
  %v1517 = vmax.f32 %v1509, 0.0
  %v1518 = vmax.f32 %v1514, 0.0
  %v1520 = vsel %vm1012, %v1347, 0
  %v1523 = vsel %vm1012, %v1348, 0
  %1525 = vmatprep.subr.mxu0 0.0
  %1526 = vmatpush1.msra.mxu0 0.0
  %1527 = vmatprep.subr.mxu0 0.0
  %1528 = vmatpush1.msra.mxu0 0.0
  %1529 = vmatprep.subr.mxu0 0.0
  %1530 = vmatpush1.msra.mxu0 0.0
  %1531 = vmatprep.subr.mxu0 0.0
  %1532 = vmatpush1.msra.mxu0 0.0
  %1533 = vmatprep.subr.mxu0 0.0
  %1534 = vmatpush1.msra.mxu0 0.0
  %1535 = vmatprep.subr.mxu0 0.0
  %1536 = vmatpush1.msra.mxu0 0.0
  %1537 = vmatprep.subr.mxu0 0.0
  %1538 = vmatpush1.msra.mxu0 0.0
  %1539 = vmatprep.subr.mxu0 0.0
  %1540 = vmatpush1.msra.mxu0 0.0
  %1541 = vmatprep.subr.mxu0 0.0
  %1542 = vmatpush1.msra.mxu0 0.0
  %1543 = vmatprep.subr.mxu0 0.0
  %1544 = vmatpush1.msra.mxu0 0.0
  %1545 = vmatprep.subr.mxu0 0.0
  %1546 = vmatpush1.msra.mxu0 0.0
  %1547 = vmatprep.subr.mxu0 0.0
  %1548 = vmatpush1.msra.mxu0 0.0
  %1549 = vmatprep.subr.mxu0 0.0
  %1550 = vmatpush1.msra.mxu0 0.0
  %1551 = vmatprep.subr.mxu0 0.0
  %1552 = vmatpush1.msra.mxu0 0.0
  %1553 = vmatprep.subr.mxu0 0.0
  %1554 = vmatpush1.msra.mxu0 %v1518
  %1555 = vmatprep.subr.mxu0 0.0
  %1556 = vmatpush1.msra.mxu0 %v1517
  %1557 = vmatprep.subr.mxu0 0.0
  %1558 = vmatpush2.msra.mxu0 0.0
  %1559 = vmatprep.subr.mxu0 0.0
  %1560 = vmatpush2.msra.mxu0 0.0
  %1561 = vmatprep.subr.mxu0 0.0
  %1562 = vmatpush2.msra.mxu0 0.0
  %1563 = vmatprep.subr.mxu0 0.0
  %1564 = vmatpush2.msra.mxu0 0.0
  %1565 = vmatprep.subr.mxu0 0.0
  %1566 = vmatpush2.msra.mxu0 0.0
  %1567 = vmatprep.subr.mxu0 0.0
  %1568 = vmatpush2.msra.mxu0 0.0
  %1569 = vmatprep.subr.mxu0 0.0
  %1570 = vmatpush2.msra.mxu0 0.0
  %1571 = vmatprep.subr.mxu0 0.0
  %1572 = vmatpush2.msra.mxu0 0.0
  %1573 = vmatprep.subr.mxu0 0.0
  %1574 = vmatpush2.msra.mxu0 0.0
  %1575 = vmatprep.subr.mxu0 0.0
  %1576 = vmatpush2.msra.mxu0 0.0
  %1577 = vmatprep.subr.mxu0 0.0
  %1578 = vmatpush2.msra.mxu0 0.0
  %1579 = vmatprep.subr.mxu0 0.0
  %1580 = vmatpush2.msra.mxu0 0.0
  %1581 = vmatprep.subr.mxu0 0.0
  %1582 = vmatpush2.msra.mxu0 0.0
  %1583 = vmatprep.subr.mxu0 0.0
  %1584 = vmatpush2.msra.mxu0 0.0
  %1585 = vmatprep.subr.mxu0 0.0
  %1586 = vmatpush2.msra.mxu0 0.0
  %1587 = vmatprep.subr.mxu0 0.0
  %1588 = vmatpush2.msra.mxu0 0.0
  %1589 = vmatprep.mubr.f32.mxu0 0.0
  %1590 = vmatmul.mubr.f32.gmra.mxu0 %v1520
  %v1591 = vpop.f32.mrf.mxu0
  %v1592 = vadd.f32 1e-06, %v1591
  %v1593 = vpop.f32.mrf.mxu0
  %1594 = vmatprep.mubr.f32.mxu0 0.0
  %1595 = vmatmul.mubr.f32.gmra.mxu0 %v1523
  %v1596 = vpop.f32.mrf.mxu0
  %v1597 = vadd.f32 1e-06, %v1596
  %v1598 = vpop.f32.mrf.mxu0
  %1599 = vdwg.mxu0
  %v1600 = vrcp.pop %v1592
  %v1601 = vmul.f32 %v1517, %v1600
  %v1602 = vrcp.pop %v1597
  %v1603 = vmul.f32 %v1518, %v1602
  %vm1604 = vcmp.gt.f32.partialorder %v1601, 20.0
  %vm1605 = vcmp.gt.f32.partialorder %v1603, 20.0
  %v1606 = vmin.f32 %v1601, 20.0
  %v1607 = vmin.f32 %v1603, 20.0
  %v1608 = vmul.f32 %v1606, 1.442695
  %v1609 = vpow.pop %v1608
  %v1610 = vmul.f32 %v1607, 1.442695
  %v1611 = vpow.pop %v1610
  %v1612 = vadd.f32 %v1609, 1.0
  %v1613 = vlog2.pop %v1612
  %v1614 = vmul.f32 %v1613, 0.6931472
  %v1615 = vmul.f32 -0.5, %v1609
  %v1616 = vadd.f32 %v1615, 1.0
  %v1617 = vmul.f32 %v1616, %v1609
  %v1618 = vand.u32 2147483647, %v1609
  %vm1619 = vcmp.lt.f32.partialorder %v1618, 0.0004427343
  %v1620 = vsel %vm1619, %v1617, %v1614
  %v1621 = vadd.f32 %v1611, 1.0
  %v1622 = vlog2.pop %v1621
  %v1623 = vmul.f32 %v1622, 0.6931472
  %v1624 = vmul.f32 -0.5, %v1611
  %v1625 = vadd.f32 %v1624, 1.0
  %v1626 = vmul.f32 %v1625, %v1611
  %v1627 = vand.u32 2147483647, %v1611
  %vm1628 = vcmp.lt.f32.partialorder %v1627, 0.0004427343
  %v1629 = vsel %vm1628, %v1626, %v1623
  %v1630 = vsel %vm1604, %v1601, %v1620
  %v1631 = vsel %vm1605, %v1603, %v1629
  %v1632 = vlaneseq
  %v1633 = vshrl.u32 %v1632, 7
  %v1634 = vsub.s32 0, %v1633
  %v1635 = vrot.slane %v1346, %v1634
  %v1637 = vsel %vm669, %v1630, 0
  %v1640 = vsel %vm669, %v1631, 0
  %1642 = vmatprep.subr.mxu0 0.0
  %1643 = vmatpush1.msra.mxu0 0.0
  %1644 = vmatprep.subr.mxu0 0.0
  %1645 = vmatpush1.msra.mxu0 0.0
  %1646 = vmatprep.subr.mxu0 0.0
  %1647 = vmatpush1.msra.mxu0 0.0
  %1648 = vmatprep.subr.mxu0 0.0
  %1649 = vmatpush1.msra.mxu0 0.0
  %1650 = vmatprep.subr.mxu0 0.0
  %1651 = vmatpush1.msra.mxu0 0.0
  %1652 = vmatprep.subr.mxu0 0.0
  %1653 = vmatpush1.msra.mxu0 0.0
  %1654 = vmatprep.subr.mxu0 0.0
  %1655 = vmatpush1.msra.mxu0 0.0
  %1656 = vmatprep.subr.mxu0 0.0
  %1657 = vmatpush1.msra.mxu0 0.0
  %1658 = vmatprep.subr.mxu0 0.0
  %1659 = vmatpush1.msra.mxu0 0.0
  %1660 = vmatprep.subr.mxu0 0.0
  %1661 = vmatpush1.msra.mxu0 0.0
  %1662 = vmatprep.subr.mxu0 0.0
  %1663 = vmatpush1.msra.mxu0 0.0
  %1664 = vmatprep.subr.mxu0 0.0
  %1665 = vmatpush1.msra.mxu0 0.0
  %1666 = vmatprep.subr.mxu0 0.0
  %1667 = vmatpush1.msra.mxu0 %v1345
  %1668 = vmatprep.subr.mxu0 0.0
  %1669 = vmatpush1.msra.mxu0 %v1344
  %1670 = vmatprep.subr.mxu0 0.0
  %1671 = vmatpush1.msra.mxu0 %v1343
  %1672 = vmatprep.subr.mxu0 0.0
  %1673 = vmatpush1.msra.mxu0 %v1342
  %1674 = vmatprep.subr.mxu0 0.0
  %1675 = vmatpush2.msra.mxu0 0.0
  %1676 = vmatprep.subr.mxu0 0.0
  %1677 = vmatpush2.msra.mxu0 0.0
  %1678 = vmatprep.subr.mxu0 0.0
  %1679 = vmatpush2.msra.mxu0 0.0
  %1680 = vmatprep.subr.mxu0 0.0
  %1681 = vmatpush2.msra.mxu0 0.0
  %1682 = vmatprep.subr.mxu0 0.0
  %1683 = vmatpush2.msra.mxu0 0.0
  %1684 = vmatprep.subr.mxu0 0.0
  %1685 = vmatpush2.msra.mxu0 0.0
  %1686 = vmatprep.subr.mxu0 0.0
  %1687 = vmatpush2.msra.mxu0 0.0
  %1688 = vmatprep.subr.mxu0 0.0
  %1689 = vmatpush2.msra.mxu0 0.0
  %1690 = vmatprep.subr.mxu0 0.0
  %1691 = vmatpush2.msra.mxu0 0.0
  %1692 = vmatprep.subr.mxu0 0.0
  %1693 = vmatpush2.msra.mxu0 0.0
  %1694 = vmatprep.subr.mxu0 0.0
  %1695 = vmatpush2.msra.mxu0 0.0
  %1696 = vmatprep.subr.mxu0 0.0
  %1697 = vmatpush2.msra.mxu0 0.0
  %1698 = vmatprep.subr.mxu0 0.0
  %1699 = vmatpush2.msra.mxu0 0.0
  %1700 = vmatprep.subr.mxu0 0.0
  %1701 = vmatpush2.msra.mxu0 0.0
  %1702 = vmatprep.subr.mxu0 0.0
  %1703 = vmatpush2.msra.mxu0 0.0
  %1704 = vmatprep.subr.mxu0 0.0
  %1705 = vmatpush2.msra.mxu0 0.0
  %1706 = vmatprep.mubr.f32.mxu0 0.0
  %1707 = vmatmul.mubr.f32.gmra.mxu0 %v1637
  %v1708 = vpop.f32.mrf.mxu0
  %v1709 = vadd.f32 %v1635, %v1708
  %v1710 = vpop.f32.mrf.mxu0
  %1711 = vmatprep.mubr.f32.mxu0 0.0
  %1712 = vmatmul.mubr.f32.gmra.mxu0 %v1640
  %v1713 = vpop.f32.mrf.mxu0
  %v1714 = vadd.f32 %v1635, %v1713
  %v1715 = vpop.f32.mrf.mxu0
  %1716 = vdwg.mxu0
  %v1717 = vxor.u32 %v1709, 2147483648
  %v1718 = vxor.u32 %v1714, 2147483648
  %v1719 = vmul.f32 %v1717, 1.442695
  %v1720 = vpow.pop %v1719
  %v1721 = vmul.f32 %v1718, 1.442695
  %v1722 = vpow.pop %v1721
  %v1723 = vadd.f32 %v1720, 1.0
  %v1724 = vadd.f32 %v1722, 1.0
  %v1725 = vrcp.pop %v1723
  %v1726 = vmul.f32 1.0, %v1725
  %v1727 = vrcp.pop %v1724
  %v1728 = vmul.f32 1.0, %v1727
  %v1729 = vmax.f32 %v1709, 0.0
  %v1730 = vmax.f32 %v1714, 0.0
  %1733 = vrot.lane.b32.xlu0 %v1340, 16
  %v1734 = vpop.permute.xlu0 %1733
  %1735 = vrot.lane.b32.xlu0 %v1341, 16
  %v1736 = vpop.permute.xlu0 %1735
  %v1739 = vmul.f32 %v1726, %v1734
  %v1740 = vmul.f32 %v1728, %v1736
  %1743 = vrot.lane.b32.xlu0 %v1729, 80
  %v1744 = vpop.permute.xlu0 %1743
  %1745 = vrot.lane.b32.xlu0 %v1730, 80
  %v1746 = vpop.permute.xlu0 %1745
  %v1749 = vmul.f32 %v1726, %v1744
  %v1750 = vmul.f32 %v1728, %v1746
  %1753 = vrot.lane.b32.xlu0 %v1749, 16
  %v1754 = vpop.permute.xlu0 %1753
  %1755 = vrot.lane.b32.xlu0 %v1750, 16
  %v1756 = vpop.permute.xlu0 %1755
  %v1759 = vadd.f32 %v1739, %v1754
  %v1760 = vadd.f32 %v1740, %v1756
  %v1761 = vtanh.pop %v1759
  %v1762 = vtanh.pop %v1760
  %1765 = vrot.lane.b32.xlu0 %v1761, 16
  %v1766 = vpop.permute.xlu0 %1765
  %1767 = vrot.lane.b32.xlu0 %v1762, 16
  %v1768 = vpop.permute.xlu0 %1767
  %v1771 = vmul.f32 %v1726, %v1766
  %v1772 = vmul.f32 %v1728, %v1768
  %v1773 = vld [vmem:[#allocation2 + $0x10] sm:$0xff]
  %v1774 = vld [vmem:[#allocation2 + $0x18] sm:$0xff]
  %v1775 = vld [vmem:[#allocation4 + $0x10] sm:$0xff]
  %v1776 = vld [vmem:[#allocation4 + $0x18] sm:$0xff]
  %1779 = vrot.lane.b32.xlu0 %v1771, 96
  %v1780 = vpop.permute.xlu0 %1779
  %1781 = vrot.lane.b32.xlu0 %v1772, 96
  %v1782 = vpop.permute.xlu0 %1781
  %v1783 = vsel %vm1012, %v1780, 0
  %v1785 = vsel %vm1012, %v1782, 0
  %1787 = vmatprep.subr.mxu0 0.0
  %1788 = vmatpush1.msra.mxu0 0.0
  %1789 = vmatprep.subr.mxu0 0.0
  %1790 = vmatpush1.msra.mxu0 0.0
  %1791 = vmatprep.subr.mxu0 0.0
  %1792 = vmatpush1.msra.mxu0 0.0
  %1793 = vmatprep.subr.mxu0 0.0
  %1794 = vmatpush1.msra.mxu0 0.0
  %1795 = vmatprep.subr.mxu0 0.0
  %1796 = vmatpush1.msra.mxu0 0.0
  %1797 = vmatprep.subr.mxu0 0.0
  %1798 = vmatpush1.msra.mxu0 0.0
  %1799 = vmatprep.subr.mxu0 0.0
  %1800 = vmatpush1.msra.mxu0 0.0
  %1801 = vmatprep.subr.mxu0 0.0
  %1802 = vmatpush1.msra.mxu0 0.0
  %1803 = vmatprep.subr.mxu0 0.0
  %1804 = vmatpush1.msra.mxu0 0.0
  %1805 = vmatprep.subr.mxu0 0.0
  %1806 = vmatpush1.msra.mxu0 0.0
  %1807 = vmatprep.subr.mxu0 0.0
  %1808 = vmatpush1.msra.mxu0 0.0
  %1809 = vmatprep.subr.mxu0 0.0
  %1810 = vmatpush1.msra.mxu0 0.0
  %1811 = vmatprep.subr.mxu0 0.0
  %1812 = vmatpush1.msra.mxu0 0.0
  %1813 = vmatprep.subr.mxu0 0.0
  %1814 = vmatpush1.msra.mxu0 0.0
  %1815 = vmatprep.subr.mxu0 0.0
  %1816 = vmatpush1.msra.mxu0 %v1337
  %1817 = vmatprep.subr.mxu0 0.0
  %1818 = vmatpush1.msra.mxu0 %v1336
  %1819 = vmatprep.subr.mxu0 0.0
  %1820 = vmatpush2.msra.mxu0 0.0
  %1821 = vmatprep.subr.mxu0 0.0
  %1822 = vmatpush2.msra.mxu0 0.0
  %1823 = vmatprep.subr.mxu0 0.0
  %1824 = vmatpush2.msra.mxu0 0.0
  %1825 = vmatprep.subr.mxu0 0.0
  %1826 = vmatpush2.msra.mxu0 0.0
  %1827 = vmatprep.subr.mxu0 0.0
  %1828 = vmatpush2.msra.mxu0 0.0
  %1829 = vmatprep.subr.mxu0 0.0
  %1830 = vmatpush2.msra.mxu0 0.0
  %1831 = vmatprep.subr.mxu0 0.0
  %1832 = vmatpush2.msra.mxu0 0.0
  %1833 = vmatprep.subr.mxu0 0.0
  %1834 = vmatpush2.msra.mxu0 0.0
  %1835 = vmatprep.subr.mxu0 0.0
  %1836 = vmatpush2.msra.mxu0 0.0
  %1837 = vmatprep.subr.mxu0 0.0
  %1838 = vmatpush2.msra.mxu0 0.0
  %1839 = vmatprep.subr.mxu0 0.0
  %1840 = vmatpush2.msra.mxu0 0.0
  %1841 = vmatprep.subr.mxu0 0.0
  %1842 = vmatpush2.msra.mxu0 0.0
  %1843 = vmatprep.subr.mxu0 0.0
  %1844 = vmatpush2.msra.mxu0 0.0
  %1845 = vmatprep.subr.mxu0 0.0
  %1846 = vmatpush2.msra.mxu0 0.0
  %1847 = vmatprep.subr.mxu0 0.0
  %1848 = vmatpush2.msra.mxu0 0.0
  %1849 = vmatprep.subr.mxu0 0.0
  %1850 = vmatpush2.msra.mxu0 0.0
  %1851 = vmatprep.mubr.f32.mxu0 0.0
  %1852 = vmatmul.mubr.f32.gmra.mxu0 %v1783
  %v1853 = vpop.f32.mrf.mxu0
  %v1854 = vadd.f32 0.0, %v1853
  %v1855 = vpop.f32.mrf.mxu0
  %1856 = vmatprep.mubr.f32.mxu0 0.0
  %1857 = vmatmul.mubr.f32.gmra.mxu0 %v1785
  %v1858 = vpop.f32.mrf.mxu0
  %v1859 = vadd.f32 0.0, %v1858
  %v1860 = vpop.f32.mrf.mxu0
  %1861 = vdwg.mxu0
  %v1862 = vadd.f32 %v1775, %v1854
  %v1863 = vadd.f32 %v1776, %v1859
  %v1865 = vsel %vm1012, %v1773, 0
  %v1868 = vsel %vm1012, %v1774, 0
  %1870 = vmatprep.subr.mxu0 0.0
  %1871 = vmatpush1.msra.mxu0 0.0
  %1872 = vmatprep.subr.mxu0 0.0
  %1873 = vmatpush1.msra.mxu0 0.0
  %1874 = vmatprep.subr.mxu0 0.0
  %1875 = vmatpush1.msra.mxu0 0.0
  %1876 = vmatprep.subr.mxu0 0.0
  %1877 = vmatpush1.msra.mxu0 0.0
  %1878 = vmatprep.subr.mxu0 0.0
  %1879 = vmatpush1.msra.mxu0 0.0
  %1880 = vmatprep.subr.mxu0 0.0
  %1881 = vmatpush1.msra.mxu0 0.0
  %1882 = vmatprep.subr.mxu0 0.0
  %1883 = vmatpush1.msra.mxu0 0.0
  %1884 = vmatprep.subr.mxu0 0.0
  %1885 = vmatpush1.msra.mxu0 0.0
  %1886 = vmatprep.subr.mxu0 0.0
  %1887 = vmatpush1.msra.mxu0 0.0
  %1888 = vmatprep.subr.mxu0 0.0
  %1889 = vmatpush1.msra.mxu0 0.0
  %1890 = vmatprep.subr.mxu0 0.0
  %1891 = vmatpush1.msra.mxu0 0.0
  %1892 = vmatprep.subr.mxu0 0.0
  %1893 = vmatpush1.msra.mxu0 0.0
  %1894 = vmatprep.subr.mxu0 0.0
  %1895 = vmatpush1.msra.mxu0 0.0
  %1896 = vmatprep.subr.mxu0 0.0
  %1897 = vmatpush1.msra.mxu0 0.0
  %1898 = vmatprep.subr.mxu0 0.0
  %1899 = vmatpush1.msra.mxu0 %v1863
  %1900 = vmatprep.subr.mxu0 0.0
  %1901 = vmatpush1.msra.mxu0 %v1862
  %1902 = vmatprep.subr.mxu0 0.0
  %1903 = vmatpush2.msra.mxu0 0.0
  %1904 = vmatprep.subr.mxu0 0.0
  %1905 = vmatpush2.msra.mxu0 0.0
  %1906 = vmatprep.subr.mxu0 0.0
  %1907 = vmatpush2.msra.mxu0 0.0
  %1908 = vmatprep.subr.mxu0 0.0
  %1909 = vmatpush2.msra.mxu0 0.0
  %1910 = vmatprep.subr.mxu0 0.0
  %1911 = vmatpush2.msra.mxu0 0.0
  %1912 = vmatprep.subr.mxu0 0.0
  %1913 = vmatpush2.msra.mxu0 0.0
  %1914 = vmatprep.subr.mxu0 0.0
  %1915 = vmatpush2.msra.mxu0 0.0
  %1916 = vmatprep.subr.mxu0 0.0
  %1917 = vmatpush2.msra.mxu0 0.0
  %1918 = vmatprep.subr.mxu0 0.0
  %1919 = vmatpush2.msra.mxu0 0.0
  %1920 = vmatprep.subr.mxu0 0.0
  %1921 = vmatpush2.msra.mxu0 0.0
  %1922 = vmatprep.subr.mxu0 0.0
  %1923 = vmatpush2.msra.mxu0 0.0
  %1924 = vmatprep.subr.mxu0 0.0
  %1925 = vmatpush2.msra.mxu0 0.0
  %1926 = vmatprep.subr.mxu0 0.0
  %1927 = vmatpush2.msra.mxu0 0.0
  %1928 = vmatprep.subr.mxu0 0.0
  %1929 = vmatpush2.msra.mxu0 0.0
  %1930 = vmatprep.subr.mxu0 0.0
  %1931 = vmatpush2.msra.mxu0 0.0
  %1932 = vmatprep.subr.mxu0 0.0
  %1933 = vmatpush2.msra.mxu0 0.0
  %1934 = vmatprep.mubr.f32.mxu0 0.0
  %1935 = vmatmul.mubr.f32.gmra.mxu0 %v1865
  %v1936 = vpop.f32.mrf.mxu0
  %v1937 = vadd.f32 0.0, %v1936
  %v1938 = vpop.f32.mrf.mxu0
  %1939 = vmatprep.mubr.f32.mxu0 0.0
  %1940 = vmatmul.mubr.f32.gmra.mxu0 %v1868
  %v1941 = vpop.f32.mrf.mxu0
  %v1942 = vadd.f32 0.0, %v1941
  %v1943 = vpop.f32.mrf.mxu0
  %1944 = vdwg.mxu0
  %v1945 = vmax.f32 %v1937, 0.0
  %v1946 = vmax.f32 %v1942, 0.0
  %1947 = vmatprep.subr.mxu0 0.0
  %1948 = vmatpush1.msra.mxu0 0.0
  %1949 = vmatprep.subr.mxu0 0.0
  %1950 = vmatpush1.msra.mxu0 0.0
  %1951 = vmatprep.subr.mxu0 0.0
  %1952 = vmatpush1.msra.mxu0 0.0
  %1953 = vmatprep.subr.mxu0 0.0
  %1954 = vmatpush1.msra.mxu0 0.0
  %1955 = vmatprep.subr.mxu0 0.0
  %1956 = vmatpush1.msra.mxu0 0.0
  %1957 = vmatprep.subr.mxu0 0.0
  %1958 = vmatpush1.msra.mxu0 0.0
  %1959 = vmatprep.subr.mxu0 0.0
  %1960 = vmatpush1.msra.mxu0 0.0
  %1961 = vmatprep.subr.mxu0 0.0
  %1962 = vmatpush1.msra.mxu0 0.0
  %1963 = vmatprep.subr.mxu0 0.0
  %1964 = vmatpush1.msra.mxu0 0.0
  %1965 = vmatprep.subr.mxu0 0.0
  %1966 = vmatpush1.msra.mxu0 0.0
  %1967 = vmatprep.subr.mxu0 0.0
  %1968 = vmatpush1.msra.mxu0 0.0
  %1969 = vmatprep.subr.mxu0 0.0
  %1970 = vmatpush1.msra.mxu0 0.0
  %1971 = vmatprep.subr.mxu0 0.0
  %1972 = vmatpush1.msra.mxu0 0.0
  %1973 = vmatprep.subr.mxu0 0.0
  %1974 = vmatpush1.msra.mxu0 0.0
  %1975 = vmatprep.subr.mxu0 0.0
  %1976 = vmatpush1.msra.mxu0 %v1946
  %1977 = vmatprep.subr.mxu0 0.0
  %1978 = vmatpush1.msra.mxu0 %v1945
  %1979 = vmatprep.subr.mxu0 0.0
  %1980 = vmatpush2.msra.mxu0 0.0
  %1981 = vmatprep.subr.mxu0 0.0
  %1982 = vmatpush2.msra.mxu0 0.0
  %1983 = vmatprep.subr.mxu0 0.0
  %1984 = vmatpush2.msra.mxu0 0.0
  %1985 = vmatprep.subr.mxu0 0.0
  %1986 = vmatpush2.msra.mxu0 0.0
  %1987 = vmatprep.subr.mxu0 0.0
  %1988 = vmatpush2.msra.mxu0 0.0
  %1989 = vmatprep.subr.mxu0 0.0
  %1990 = vmatpush2.msra.mxu0 0.0
  %1991 = vmatprep.subr.mxu0 0.0
  %1992 = vmatpush2.msra.mxu0 0.0
  %1993 = vmatprep.subr.mxu0 0.0
  %1994 = vmatpush2.msra.mxu0 0.0
  %1995 = vmatprep.subr.mxu0 0.0
  %1996 = vmatpush2.msra.mxu0 0.0
  %1997 = vmatprep.subr.mxu0 0.0
  %1998 = vmatpush2.msra.mxu0 0.0
  %1999 = vmatprep.subr.mxu0 0.0
  %2000 = vmatpush2.msra.mxu0 0.0
  %2001 = vmatprep.subr.mxu0 0.0
  %2002 = vmatpush2.msra.mxu0 0.0
  %2003 = vmatprep.subr.mxu0 0.0
  %2004 = vmatpush2.msra.mxu0 0.0
  %2005 = vmatprep.subr.mxu0 0.0
  %2006 = vmatpush2.msra.mxu0 0.0
  %2007 = vmatprep.subr.mxu0 0.0
  %2008 = vmatpush2.msra.mxu0 0.0
  %2009 = vmatprep.subr.mxu0 0.0
  %2010 = vmatpush2.msra.mxu0 0.0
  %2011 = vmatprep.mubr.f32.mxu0 0.0
  %2012 = vmatmul.mubr.f32.gmra.mxu0 %v1520
  %v2013 = vpop.f32.mrf.mxu0
  %v2014 = vadd.f32 1e-06, %v2013
  %v2015 = vpop.f32.mrf.mxu0
  %2016 = vmatprep.mubr.f32.mxu0 0.0
  %2017 = vmatmul.mubr.f32.gmra.mxu0 %v1523
  %v2018 = vpop.f32.mrf.mxu0
  %v2019 = vadd.f32 1e-06, %v2018
  %v2020 = vpop.f32.mrf.mxu0
  %2021 = vdwg.mxu0
  %v2022 = vrcp.pop %v2014
  %v2023 = vmul.f32 %v1945, %v2022
  %v2024 = vrcp.pop %v2019
  %v2025 = vmul.f32 %v1946, %v2024
  %vm2026 = vcmp.gt.f32.partialorder %v2023, 20.0
  %vm2027 = vcmp.gt.f32.partialorder %v2025, 20.0
  %v2028 = vmin.f32 %v2023, 20.0
  %v2029 = vmin.f32 %v2025, 20.0
  %v2030 = vmul.f32 %v2028, 1.442695
  %v2031 = vpow.pop %v2030
  %v2032 = vmul.f32 %v2029, 1.442695
  %v2033 = vpow.pop %v2032
  %v2034 = vadd.f32 %v2031, 1.0
  %v2035 = vlog2.pop %v2034
  %v2036 = vmul.f32 %v2035, 0.6931472
  %v2037 = vmul.f32 -0.5, %v2031
  %v2038 = vadd.f32 %v2037, 1.0
  %v2039 = vmul.f32 %v2038, %v2031
  %v2040 = vand.u32 2147483647, %v2031
  %vm2041 = vcmp.lt.f32.partialorder %v2040, 0.0004427343
  %v2042 = vsel %vm2041, %v2039, %v2036
  %v2043 = vadd.f32 %v2033, 1.0
  %v2044 = vlog2.pop %v2043
  %v2045 = vmul.f32 %v2044, 0.6931472
  %v2046 = vmul.f32 -0.5, %v2033
  %v2047 = vadd.f32 %v2046, 1.0
  %v2048 = vmul.f32 %v2047, %v2033
  %v2049 = vand.u32 2147483647, %v2033
  %vm2050 = vcmp.lt.f32.partialorder %v2049, 0.0004427343
  %v2051 = vsel %vm2050, %v2048, %v2045
  %v2052 = vsel %vm2026, %v2023, %v2042
  %v2053 = vsel %vm2027, %v2025, %v2051
  %v2055 = vsel %vm669, %v2052, 0
  %v2058 = vsel %vm669, %v2053, 0
  %2060 = vmatprep.subr.mxu0 0.0
  %2061 = vmatpush1.msra.mxu0 0.0
  %2062 = vmatprep.subr.mxu0 0.0
  %2063 = vmatpush1.msra.mxu0 0.0
  %2064 = vmatprep.subr.mxu0 0.0
  %2065 = vmatpush1.msra.mxu0 0.0
  %2066 = vmatprep.subr.mxu0 0.0
  %2067 = vmatpush1.msra.mxu0 0.0
  %2068 = vmatprep.subr.mxu0 0.0
  %2069 = vmatpush1.msra.mxu0 0.0
  %2070 = vmatprep.subr.mxu0 0.0
  %2071 = vmatpush1.msra.mxu0 0.0
  %2072 = vmatprep.subr.mxu0 0.0
  %2073 = vmatpush1.msra.mxu0 0.0
  %2074 = vmatprep.subr.mxu0 0.0
  %2075 = vmatpush1.msra.mxu0 0.0
  %2076 = vmatprep.subr.mxu0 0.0
  %2077 = vmatpush1.msra.mxu0 0.0
  %2078 = vmatprep.subr.mxu0 0.0
  %2079 = vmatpush1.msra.mxu0 0.0
  %2080 = vmatprep.subr.mxu0 0.0
  %2081 = vmatpush1.msra.mxu0 0.0
  %2082 = vmatprep.subr.mxu0 0.0
  %2083 = vmatpush1.msra.mxu0 0.0
  %2084 = vmatprep.subr.mxu0 0.0
  %2085 = vmatpush1.msra.mxu0 %v1345
  %2086 = vmatprep.subr.mxu0 0.0
  %2087 = vmatpush1.msra.mxu0 %v1344
  %2088 = vmatprep.subr.mxu0 0.0
  %2089 = vmatpush1.msra.mxu0 %v1343
  %2090 = vmatprep.subr.mxu0 0.0
  %2091 = vmatpush1.msra.mxu0 %v1342
  %2092 = vmatprep.subr.mxu0 0.0
  %2093 = vmatpush2.msra.mxu0 0.0
  %2094 = vmatprep.subr.mxu0 0.0
  %2095 = vmatpush2.msra.mxu0 0.0
  %2096 = vmatprep.subr.mxu0 0.0
  %2097 = vmatpush2.msra.mxu0 0.0
  %2098 = vmatprep.subr.mxu0 0.0
  %2099 = vmatpush2.msra.mxu0 0.0
  %2100 = vmatprep.subr.mxu0 0.0
  %2101 = vmatpush2.msra.mxu0 0.0
  %2102 = vmatprep.subr.mxu0 0.0
  %2103 = vmatpush2.msra.mxu0 0.0
  %2104 = vmatprep.subr.mxu0 0.0
  %2105 = vmatpush2.msra.mxu0 0.0
  %2106 = vmatprep.subr.mxu0 0.0
  %2107 = vmatpush2.msra.mxu0 0.0
  %2108 = vmatprep.subr.mxu0 0.0
  %2109 = vmatpush2.msra.mxu0 0.0
  %2110 = vmatprep.subr.mxu0 0.0
  %2111 = vmatpush2.msra.mxu0 0.0
  %2112 = vmatprep.subr.mxu0 0.0
  %2113 = vmatpush2.msra.mxu0 0.0
  %2114 = vmatprep.subr.mxu0 0.0
  %2115 = vmatpush2.msra.mxu0 0.0
  %2116 = vmatprep.subr.mxu0 0.0
  %2117 = vmatpush2.msra.mxu0 0.0
  %2118 = vmatprep.subr.mxu0 0.0
  %2119 = vmatpush2.msra.mxu0 0.0
  %2120 = vmatprep.subr.mxu0 0.0
  %2121 = vmatpush2.msra.mxu0 0.0
  %2122 = vmatprep.subr.mxu0 0.0
  %2123 = vmatpush2.msra.mxu0 0.0
  %2124 = vmatprep.mubr.f32.mxu0 0.0
  %2125 = vmatmul.mubr.f32.gmra.mxu0 %v2055
  %v2126 = vpop.f32.mrf.mxu0
  %v2127 = vadd.f32 %v1635, %v2126
  %v2128 = vpop.f32.mrf.mxu0
  %2129 = vmatprep.mubr.f32.mxu0 0.0
  %2130 = vmatmul.mubr.f32.gmra.mxu0 %v2058
  %v2131 = vpop.f32.mrf.mxu0
  %v2132 = vadd.f32 %v1635, %v2131
  %v2133 = vpop.f32.mrf.mxu0
  %2134 = vdwg.mxu0
  %v2135 = vxor.u32 %v2127, 2147483648
  %v2136 = vxor.u32 %v2132, 2147483648
  %v2137 = vmul.f32 %v2135, 1.442695
  %v2138 = vpow.pop %v2137
  %v2139 = vmul.f32 %v2136, 1.442695
  %v2140 = vpow.pop %v2139
  %v2141 = vadd.f32 %v2138, 1.0
  %v2142 = vadd.f32 %v2140, 1.0
  %v2143 = vrcp.pop %v2141
  %v2144 = vmul.f32 1.0, %v2143
  %v2145 = vrcp.pop %v2142
  %v2146 = vmul.f32 1.0, %v2145
  %v2147 = vmax.f32 %v2127, 0.0
  %v2148 = vmax.f32 %v2132, 0.0
  %v2149 = vmul.f32 %v2144, %v1759
  %v2150 = vmul.f32 %v2146, %v1760
  %2153 = vrot.lane.b32.xlu0 %v2147, 80
  %v2154 = vpop.permute.xlu0 %2153
  %2155 = vrot.lane.b32.xlu0 %v2148, 80
  %v2156 = vpop.permute.xlu0 %2155
  %v2159 = vmul.f32 %v2144, %v2154
  %v2160 = vmul.f32 %v2146, %v2156
  %2163 = vrot.lane.b32.xlu0 %v2159, 16
  %v2164 = vpop.permute.xlu0 %2163
  %2165 = vrot.lane.b32.xlu0 %v2160, 16
  %v2166 = vpop.permute.xlu0 %2165
  %v2169 = vadd.f32 %v2149, %v2164
  %v2170 = vadd.f32 %v2150, %v2166
  %v2171 = vtanh.pop %v2169
  %v2172 = vtanh.pop %v2170
  %2175 = vrot.lane.b32.xlu0 %v2171, 16
  %v2176 = vpop.permute.xlu0 %2175
  %2177 = vrot.lane.b32.xlu0 %v2172, 16
  %v2178 = vpop.permute.xlu0 %2177
  %v2181 = vmul.f32 %v2144, %v2176
  %v2182 = vmul.f32 %v2146, %v2178
  %v2183 = vld [vmem:[#allocation2 + $0x20] sm:$0xff]
  %v2184 = vld [vmem:[#allocation2 + $0x28] sm:$0xff]
  %v2185 = vld [vmem:[#allocation4 + $0x20] sm:$0xff]
  %v2186 = vld [vmem:[#allocation4 + $0x28] sm:$0xff]
  %2189 = vrot.lane.b32.xlu0 %v2181, 96
  %v2190 = vpop.permute.xlu0 %2189
  %2191 = vrot.lane.b32.xlu0 %v2182, 96
  %v2192 = vpop.permute.xlu0 %2191
  %v2193 = vsel %vm1012, %v2190, 0
  %v2195 = vsel %vm1012, %v2192, 0
  %2197 = vmatprep.subr.mxu0 0.0
  %2198 = vmatpush1.msra.mxu0 0.0
  %2199 = vmatprep.subr.mxu0 0.0
  %2200 = vmatpush1.msra.mxu0 0.0
  %2201 = vmatprep.subr.mxu0 0.0
  %2202 = vmatpush1.msra.mxu0 0.0
  %2203 = vmatprep.subr.mxu0 0.0
  %2204 = vmatpush1.msra.mxu0 0.0
  %2205 = vmatprep.subr.mxu0 0.0
  %2206 = vmatpush1.msra.mxu0 0.0
  %2207 = vmatprep.subr.mxu0 0.0
  %2208 = vmatpush1.msra.mxu0 0.0
  %2209 = vmatprep.subr.mxu0 0.0
  %2210 = vmatpush1.msra.mxu0 0.0
  %2211 = vmatprep.subr.mxu0 0.0
  %2212 = vmatpush1.msra.mxu0 0.0
  %2213 = vmatprep.subr.mxu0 0.0
  %2214 = vmatpush1.msra.mxu0 0.0
  %2215 = vmatprep.subr.mxu0 0.0
  %2216 = vmatpush1.msra.mxu0 0.0
  %2217 = vmatprep.subr.mxu0 0.0
  %2218 = vmatpush1.msra.mxu0 0.0
  %2219 = vmatprep.subr.mxu0 0.0
  %2220 = vmatpush1.msra.mxu0 0.0
  %2221 = vmatprep.subr.mxu0 0.0
  %2222 = vmatpush1.msra.mxu0 0.0
  %2223 = vmatprep.subr.mxu0 0.0
  %2224 = vmatpush1.msra.mxu0 0.0
  %2225 = vmatprep.subr.mxu0 0.0
  %2226 = vmatpush1.msra.mxu0 %v1337
  %2227 = vmatprep.subr.mxu0 0.0
  %2228 = vmatpush1.msra.mxu0 %v1336
  %2229 = vmatprep.subr.mxu0 0.0
  %2230 = vmatpush2.msra.mxu0 0.0
  %2231 = vmatprep.subr.mxu0 0.0
  %2232 = vmatpush2.msra.mxu0 0.0
  %2233 = vmatprep.subr.mxu0 0.0
  %2234 = vmatpush2.msra.mxu0 0.0
  %2235 = vmatprep.subr.mxu0 0.0
  %2236 = vmatpush2.msra.mxu0 0.0
  %2237 = vmatprep.subr.mxu0 0.0
  %2238 = vmatpush2.msra.mxu0 0.0
  %2239 = vmatprep.subr.mxu0 0.0
  %2240 = vmatpush2.msra.mxu0 0.0
  %2241 = vmatprep.subr.mxu0 0.0
  %2242 = vmatpush2.msra.mxu0 0.0
  %2243 = vmatprep.subr.mxu0 0.0
  %2244 = vmatpush2.msra.mxu0 0.0
  %2245 = vmatprep.subr.mxu0 0.0
  %2246 = vmatpush2.msra.mxu0 0.0
  %2247 = vmatprep.subr.mxu0 0.0
  %2248 = vmatpush2.msra.mxu0 0.0
  %2249 = vmatprep.subr.mxu0 0.0
  %2250 = vmatpush2.msra.mxu0 0.0
  %2251 = vmatprep.subr.mxu0 0.0
  %2252 = vmatpush2.msra.mxu0 0.0
  %2253 = vmatprep.subr.mxu0 0.0
  %2254 = vmatpush2.msra.mxu0 0.0
  %2255 = vmatprep.subr.mxu0 0.0
  %2256 = vmatpush2.msra.mxu0 0.0
  %2257 = vmatprep.subr.mxu0 0.0
  %2258 = vmatpush2.msra.mxu0 0.0
  %2259 = vmatprep.subr.mxu0 0.0
  %2260 = vmatpush2.msra.mxu0 0.0
  %2261 = vmatprep.mubr.f32.mxu0 0.0
  %2262 = vmatmul.mubr.f32.gmra.mxu0 %v2193
  %v2263 = vpop.f32.mrf.mxu0
  %v2264 = vadd.f32 0.0, %v2263
  %v2265 = vpop.f32.mrf.mxu0
  %2266 = vmatprep.mubr.f32.mxu0 0.0
  %2267 = vmatmul.mubr.f32.gmra.mxu0 %v2195
  %v2268 = vpop.f32.mrf.mxu0
  %v2269 = vadd.f32 0.0, %v2268
  %v2270 = vpop.f32.mrf.mxu0
  %2271 = vdwg.mxu0
  %v2272 = vadd.f32 %v2185, %v2264
  %v2273 = vadd.f32 %v2186, %v2269
  %v2275 = vsel %vm1012, %v2183, 0
  %v2278 = vsel %vm1012, %v2184, 0
  %2280 = vmatprep.subr.mxu0 0.0
  %2281 = vmatpush1.msra.mxu0 0.0
  %2282 = vmatprep.subr.mxu0 0.0
  %2283 = vmatpush1.msra.mxu0 0.0
  %2284 = vmatprep.subr.mxu0 0.0
  %2285 = vmatpush1.msra.mxu0 0.0
  %2286 = vmatprep.subr.mxu0 0.0
  %2287 = vmatpush1.msra.mxu0 0.0
  %2288 = vmatprep.subr.mxu0 0.0
  %2289 = vmatpush1.msra.mxu0 0.0
  %2290 = vmatprep.subr.mxu0 0.0
  %2291 = vmatpush1.msra.mxu0 0.0
  %2292 = vmatprep.subr.mxu0 0.0
  %2293 = vmatpush1.msra.mxu0 0.0
  %2294 = vmatprep.subr.mxu0 0.0
  %2295 = vmatpush1.msra.mxu0 0.0
  %2296 = vmatprep.subr.mxu0 0.0
  %2297 = vmatpush1.msra.mxu0 0.0
  %2298 = vmatprep.subr.mxu0 0.0
  %2299 = vmatpush1.msra.mxu0 0.0
  %2300 = vmatprep.subr.mxu0 0.0
  %2301 = vmatpush1.msra.mxu0 0.0
  %2302 = vmatprep.subr.mxu0 0.0
  %2303 = vmatpush1.msra.mxu0 0.0
  %2304 = vmatprep.subr.mxu0 0.0
  %2305 = vmatpush1.msra.mxu0 0.0
  %2306 = vmatprep.subr.mxu0 0.0
  %2307 = vmatpush1.msra.mxu0 0.0
  %2308 = vmatprep.subr.mxu0 0.0
  %2309 = vmatpush1.msra.mxu0 %v2273
  %2310 = vmatprep.subr.mxu0 0.0
  %2311 = vmatpush1.msra.mxu0 %v2272
  %2312 = vmatprep.subr.mxu0 0.0
  %2313 = vmatpush2.msra.mxu0 0.0
  %2314 = vmatprep.subr.mxu0 0.0
  %2315 = vmatpush2.msra.mxu0 0.0
  %2316 = vmatprep.subr.mxu0 0.0
  %2317 = vmatpush2.msra.mxu0 0.0
  %2318 = vmatprep.subr.mxu0 0.0
  %2319 = vmatpush2.msra.mxu0 0.0
  %2320 = vmatprep.subr.mxu0 0.0
  %2321 = vmatpush2.msra.mxu0 0.0
  %2322 = vmatprep.subr.mxu0 0.0
  %2323 = vmatpush2.msra.mxu0 0.0
  %2324 = vmatprep.subr.mxu0 0.0
  %2325 = vmatpush2.msra.mxu0 0.0
  %2326 = vmatprep.subr.mxu0 0.0
  %2327 = vmatpush2.msra.mxu0 0.0
  %2328 = vmatprep.subr.mxu0 0.0
  %2329 = vmatpush2.msra.mxu0 0.0
  %2330 = vmatprep.subr.mxu0 0.0
  %2331 = vmatpush2.msra.mxu0 0.0
  %2332 = vmatprep.subr.mxu0 0.0
  %2333 = vmatpush2.msra.mxu0 0.0
  %2334 = vmatprep.subr.mxu0 0.0
  %2335 = vmatpush2.msra.mxu0 0.0
  %2336 = vmatprep.subr.mxu0 0.0
  %2337 = vmatpush2.msra.mxu0 0.0
  %2338 = vmatprep.subr.mxu0 0.0
  %2339 = vmatpush2.msra.mxu0 0.0
  %2340 = vmatprep.subr.mxu0 0.0
  %2341 = vmatpush2.msra.mxu0 0.0
  %2342 = vmatprep.subr.mxu0 0.0
  %2343 = vmatpush2.msra.mxu0 0.0
  %2344 = vmatprep.mubr.f32.mxu0 0.0
  %2345 = vmatmul.mubr.f32.gmra.mxu0 %v2275
  %v2346 = vpop.f32.mrf.mxu0
  %v2347 = vadd.f32 0.0, %v2346
  %v2348 = vpop.f32.mrf.mxu0
  %2349 = vmatprep.mubr.f32.mxu0 0.0
  %2350 = vmatmul.mubr.f32.gmra.mxu0 %v2278
  %v2351 = vpop.f32.mrf.mxu0
  %v2352 = vadd.f32 0.0, %v2351
  %v2353 = vpop.f32.mrf.mxu0
  %2354 = vdwg.mxu0
  %v2355 = vmax.f32 %v2347, 0.0
  %v2356 = vmax.f32 %v2352, 0.0
  %2357 = vmatprep.subr.mxu0 0.0
  %2358 = vmatpush1.msra.mxu0 0.0
  %2359 = vmatprep.subr.mxu0 0.0
  %2360 = vmatpush1.msra.mxu0 0.0
  %2361 = vmatprep.subr.mxu0 0.0
  %2362 = vmatpush1.msra.mxu0 0.0
  %2363 = vmatprep.subr.mxu0 0.0
  %2364 = vmatpush1.msra.mxu0 0.0
  %2365 = vmatprep.subr.mxu0 0.0
  %2366 = vmatpush1.msra.mxu0 0.0
  %2367 = vmatprep.subr.mxu0 0.0
  %2368 = vmatpush1.msra.mxu0 0.0
  %2369 = vmatprep.subr.mxu0 0.0
  %2370 = vmatpush1.msra.mxu0 0.0
  %2371 = vmatprep.subr.mxu0 0.0
  %2372 = vmatpush1.msra.mxu0 0.0
  %2373 = vmatprep.subr.mxu0 0.0
  %2374 = vmatpush1.msra.mxu0 0.0
  %2375 = vmatprep.subr.mxu0 0.0
  %2376 = vmatpush1.msra.mxu0 0.0
  %2377 = vmatprep.subr.mxu0 0.0
  %2378 = vmatpush1.msra.mxu0 0.0
  %2379 = vmatprep.subr.mxu0 0.0
  %2380 = vmatpush1.msra.mxu0 0.0
  %2381 = vmatprep.subr.mxu0 0.0
  %2382 = vmatpush1.msra.mxu0 0.0
  %2383 = vmatprep.subr.mxu0 0.0
  %2384 = vmatpush1.msra.mxu0 0.0
  %2385 = vmatprep.subr.mxu0 0.0
  %2386 = vmatpush1.msra.mxu0 %v2356
  %2387 = vmatprep.subr.mxu0 0.0
  %2388 = vmatpush1.msra.mxu0 %v2355
  %2389 = vmatprep.subr.mxu0 0.0
  %2390 = vmatpush2.msra.mxu0 0.0
  %2391 = vmatprep.subr.mxu0 0.0
  %2392 = vmatpush2.msra.mxu0 0.0
  %2393 = vmatprep.subr.mxu0 0.0
  %2394 = vmatpush2.msra.mxu0 0.0
  %2395 = vmatprep.subr.mxu0 0.0
  %2396 = vmatpush2.msra.mxu0 0.0
  %2397 = vmatprep.subr.mxu0 0.0
  %2398 = vmatpush2.msra.mxu0 0.0
  %2399 = vmatprep.subr.mxu0 0.0
  %2400 = vmatpush2.msra.mxu0 0.0
  %2401 = vmatprep.subr.mxu0 0.0
  %2402 = vmatpush2.msra.mxu0 0.0
  %2403 = vmatprep.subr.mxu0 0.0
  %2404 = vmatpush2.msra.mxu0 0.0
  %2405 = vmatprep.subr.mxu0 0.0
  %2406 = vmatpush2.msra.mxu0 0.0
  %2407 = vmatprep.subr.mxu0 0.0
  %2408 = vmatpush2.msra.mxu0 0.0
  %2409 = vmatprep.subr.mxu0 0.0
  %2410 = vmatpush2.msra.mxu0 0.0
  %2411 = vmatprep.subr.mxu0 0.0
  %2412 = vmatpush2.msra.mxu0 0.0
  %2413 = vmatprep.subr.mxu0 0.0
  %2414 = vmatpush2.msra.mxu0 0.0
  %2415 = vmatprep.subr.mxu0 0.0
  %2416 = vmatpush2.msra.mxu0 0.0
  %2417 = vmatprep.subr.mxu0 0.0
  %2418 = vmatpush2.msra.mxu0 0.0
  %2419 = vmatprep.subr.mxu0 0.0
  %2420 = vmatpush2.msra.mxu0 0.0
  %2421 = vmatprep.mubr.f32.mxu0 0.0
  %2422 = vmatmul.mubr.f32.gmra.mxu0 %v1520
  %v2423 = vpop.f32.mrf.mxu0
  %v2424 = vadd.f32 1e-06, %v2423
  %v2425 = vpop.f32.mrf.mxu0
  %2426 = vmatprep.mubr.f32.mxu0 0.0
  %2427 = vmatmul.mubr.f32.gmra.mxu0 %v1523
  %v2428 = vpop.f32.mrf.mxu0
  %v2429 = vadd.f32 1e-06, %v2428
  %v2430 = vpop.f32.mrf.mxu0
  %2431 = vdwg.mxu0
  %v2432 = vrcp.pop %v2424
  %v2433 = vmul.f32 %v2355, %v2432
  %v2434 = vrcp.pop %v2429
  %v2435 = vmul.f32 %v2356, %v2434
  %vm2436 = vcmp.gt.f32.partialorder %v2433, 20.0
  %vm2437 = vcmp.gt.f32.partialorder %v2435, 20.0
  %v2438 = vmin.f32 %v2433, 20.0
  %v2439 = vmin.f32 %v2435, 20.0
  %v2440 = vmul.f32 %v2438, 1.442695
  %v2441 = vpow.pop %v2440
  %v2442 = vmul.f32 %v2439, 1.442695
  %v2443 = vpow.pop %v2442
  %v2444 = vadd.f32 %v2441, 1.0
  %v2445 = vlog2.pop %v2444
  %v2446 = vmul.f32 %v2445, 0.6931472
  %v2447 = vmul.f32 -0.5, %v2441
  %v2448 = vadd.f32 %v2447, 1.0
  %v2449 = vmul.f32 %v2448, %v2441
  %v2450 = vand.u32 2147483647, %v2441
  %vm2451 = vcmp.lt.f32.partialorder %v2450, 0.0004427343
  %v2452 = vsel %vm2451, %v2449, %v2446
  %v2453 = vadd.f32 %v2443, 1.0
  %v2454 = vlog2.pop %v2453
  %v2455 = vmul.f32 %v2454, 0.6931472
  %v2456 = vmul.f32 -0.5, %v2443
  %v2457 = vadd.f32 %v2456, 1.0
  %v2458 = vmul.f32 %v2457, %v2443
  %v2459 = vand.u32 2147483647, %v2443
  %vm2460 = vcmp.lt.f32.partialorder %v2459, 0.0004427343
  %v2461 = vsel %vm2460, %v2458, %v2455
  %v2462 = vsel %vm2436, %v2433, %v2452
  %v2463 = vsel %vm2437, %v2435, %v2461
  %v2465 = vsel %vm669, %v2462, 0
  %v2468 = vsel %vm669, %v2463, 0
  %2470 = vmatprep.subr.mxu0 0.0
  %2471 = vmatpush1.msra.mxu0 0.0
  %2472 = vmatprep.subr.mxu0 0.0
  %2473 = vmatpush1.msra.mxu0 0.0
  %2474 = vmatprep.subr.mxu0 0.0
  %2475 = vmatpush1.msra.mxu0 0.0
  %2476 = vmatprep.subr.mxu0 0.0
  %2477 = vmatpush1.msra.mxu0 0.0
  %2478 = vmatprep.subr.mxu0 0.0
  %2479 = vmatpush1.msra.mxu0 0.0
  %2480 = vmatprep.subr.mxu0 0.0
  %2481 = vmatpush1.msra.mxu0 0.0
  %2482 = vmatprep.subr.mxu0 0.0
  %2483 = vmatpush1.msra.mxu0 0.0
  %2484 = vmatprep.subr.mxu0 0.0
  %2485 = vmatpush1.msra.mxu0 0.0
  %2486 = vmatprep.subr.mxu0 0.0
  %2487 = vmatpush1.msra.mxu0 0.0
  %2488 = vmatprep.subr.mxu0 0.0
  %2489 = vmatpush1.msra.mxu0 0.0
  %2490 = vmatprep.subr.mxu0 0.0
  %2491 = vmatpush1.msra.mxu0 0.0
  %2492 = vmatprep.subr.mxu0 0.0
  %2493 = vmatpush1.msra.mxu0 0.0
  %2494 = vmatprep.subr.mxu0 0.0
  %2495 = vmatpush1.msra.mxu0 %v1345
  %2496 = vmatprep.subr.mxu0 0.0
  %2497 = vmatpush1.msra.mxu0 %v1344
  %2498 = vmatprep.subr.mxu0 0.0
  %2499 = vmatpush1.msra.mxu0 %v1343
  %2500 = vmatprep.subr.mxu0 0.0
  %2501 = vmatpush1.msra.mxu0 %v1342
  %2502 = vmatprep.subr.mxu0 0.0
  %2503 = vmatpush2.msra.mxu0 0.0
  %2504 = vmatprep.subr.mxu0 0.0
  %2505 = vmatpush2.msra.mxu0 0.0
  %2506 = vmatprep.subr.mxu0 0.0
  %2507 = vmatpush2.msra.mxu0 0.0
  %2508 = vmatprep.subr.mxu0 0.0
  %2509 = vmatpush2.msra.mxu0 0.0
  %2510 = vmatprep.subr.mxu0 0.0
  %2511 = vmatpush2.msra.mxu0 0.0
  %2512 = vmatprep.subr.mxu0 0.0
  %2513 = vmatpush2.msra.mxu0 0.0
  %2514 = vmatprep.subr.mxu0 0.0
  %2515 = vmatpush2.msra.mxu0 0.0
  %2516 = vmatprep.subr.mxu0 0.0
  %2517 = vmatpush2.msra.mxu0 0.0
  %2518 = vmatprep.subr.mxu0 0.0
  %2519 = vmatpush2.msra.mxu0 0.0
  %2520 = vmatprep.subr.mxu0 0.0
  %2521 = vmatpush2.msra.mxu0 0.0
  %2522 = vmatprep.subr.mxu0 0.0
  %2523 = vmatpush2.msra.mxu0 0.0
  %2524 = vmatprep.subr.mxu0 0.0
  %2525 = vmatpush2.msra.mxu0 0.0
  %2526 = vmatprep.subr.mxu0 0.0
  %2527 = vmatpush2.msra.mxu0 0.0
  %2528 = vmatprep.subr.mxu0 0.0
  %2529 = vmatpush2.msra.mxu0 0.0
  %2530 = vmatprep.subr.mxu0 0.0
  %2531 = vmatpush2.msra.mxu0 0.0
  %2532 = vmatprep.subr.mxu0 0.0
  %2533 = vmatpush2.msra.mxu0 0.0
  %2534 = vmatprep.mubr.f32.mxu0 0.0
  %2535 = vmatmul.mubr.f32.gmra.mxu0 %v2465
  %v2536 = vpop.f32.mrf.mxu0
  %v2537 = vadd.f32 %v1635, %v2536
  %v2538 = vpop.f32.mrf.mxu0
  %2539 = vmatprep.mubr.f32.mxu0 0.0
  %2540 = vmatmul.mubr.f32.gmra.mxu0 %v2468
  %v2541 = vpop.f32.mrf.mxu0
  %v2542 = vadd.f32 %v1635, %v2541
  %v2543 = vpop.f32.mrf.mxu0
  %2544 = vdwg.mxu0
  %v2545 = vxor.u32 %v2537, 2147483648
  %v2546 = vxor.u32 %v2542, 2147483648
  %v2547 = vmul.f32 %v2545, 1.442695
  %v2548 = vpow.pop %v2547
  %v2549 = vmul.f32 %v2546, 1.442695
  %v2550 = vpow.pop %v2549
  %v2551 = vadd.f32 %v2548, 1.0
  %v2552 = vadd.f32 %v2550, 1.0
  %v2553 = vrcp.pop %v2551
  %v2554 = vmul.f32 1.0, %v2553
  %v2555 = vrcp.pop %v2552
  %v2556 = vmul.f32 1.0, %v2555
  %v2557 = vmax.f32 %v2537, 0.0
  %v2558 = vmax.f32 %v2542, 0.0
  %v2559 = vmul.f32 %v2554, %v2169
  %v2560 = vmul.f32 %v2556, %v2170
  %2563 = vrot.lane.b32.xlu0 %v2557, 80
  %v2564 = vpop.permute.xlu0 %2563
  %2565 = vrot.lane.b32.xlu0 %v2558, 80
  %v2566 = vpop.permute.xlu0 %2565
  %v2569 = vmul.f32 %v2554, %v2564
  %v2570 = vmul.f32 %v2556, %v2566
  %2573 = vrot.lane.b32.xlu0 %v2569, 16
  %v2574 = vpop.permute.xlu0 %2573
  %2575 = vrot.lane.b32.xlu0 %v2570, 16
  %v2576 = vpop.permute.xlu0 %2575
  %v2579 = vadd.f32 %v2559, %v2574
  %v2580 = vadd.f32 %v2560, %v2576
  %v2581 = vtanh.pop %v2579
  %v2582 = vtanh.pop %v2580
  %2585 = vrot.lane.b32.xlu0 %v2581, 16
  %v2586 = vpop.permute.xlu0 %2585
  %2587 = vrot.lane.b32.xlu0 %v2582, 16
  %v2588 = vpop.permute.xlu0 %2587
  %v2591 = vmul.f32 %v2554, %v2586
  %v2592 = vmul.f32 %v2556, %v2588
  %v2593 = vld [vmem:[#allocation2 + $0x30] sm:$0xff]
  %v2594 = vld [vmem:[#allocation2 + $0x38] sm:$0xff]
  %v2595 = vld [vmem:[#allocation4 + $0x30] sm:$0xff]
  %v2596 = vld [vmem:[#allocation4 + $0x38] sm:$0xff]
  %2599 = vrot.lane.b32.xlu0 %v2591, 96
  %v2600 = vpop.permute.xlu0 %2599
  %2601 = vrot.lane.b32.xlu0 %v2592, 96
  %v2602 = vpop.permute.xlu0 %2601
  %v2603 = vsel %vm1012, %v2600, 0
  %v2605 = vsel %vm1012, %v2602, 0
  %2607 = vmatprep.subr.mxu0 0.0
  %2608 = vmatpush1.msra.mxu0 0.0
  %2609 = vmatprep.subr.mxu0 0.0
  %2610 = vmatpush1.msra.mxu0 0.0
  %2611 = vmatprep.subr.mxu0 0.0
  %2612 = vmatpush1.msra.mxu0 0.0
  %2613 = vmatprep.subr.mxu0 0.0
  %2614 = vmatpush1.msra.mxu0 0.0
  %2615 = vmatprep.subr.mxu0 0.0
  %2616 = vmatpush1.msra.mxu0 0.0
  %2617 = vmatprep.subr.mxu0 0.0
  %2618 = vmatpush1.msra.mxu0 0.0
  %2619 = vmatprep.subr.mxu0 0.0
  %2620 = vmatpush1.msra.mxu0 0.0
  %2621 = vmatprep.subr.mxu0 0.0
  %2622 = vmatpush1.msra.mxu0 0.0
  %2623 = vmatprep.subr.mxu0 0.0
  %2624 = vmatpush1.msra.mxu0 0.0
  %2625 = vmatprep.subr.mxu0 0.0
  %2626 = vmatpush1.msra.mxu0 0.0
  %2627 = vmatprep.subr.mxu0 0.0
  %2628 = vmatpush1.msra.mxu0 0.0
  %2629 = vmatprep.subr.mxu0 0.0
  %2630 = vmatpush1.msra.mxu0 0.0
  %2631 = vmatprep.subr.mxu0 0.0
  %2632 = vmatpush1.msra.mxu0 0.0
  %2633 = vmatprep.subr.mxu0 0.0
  %2634 = vmatpush1.msra.mxu0 0.0
  %2635 = vmatprep.subr.mxu0 0.0
  %2636 = vmatpush1.msra.mxu0 %v1337
  %2637 = vmatprep.subr.mxu0 0.0
  %2638 = vmatpush1.msra.mxu0 %v1336
  %2639 = vmatprep.subr.mxu0 0.0
  %2640 = vmatpush2.msra.mxu0 0.0
  %2641 = vmatprep.subr.mxu0 0.0
  %2642 = vmatpush2.msra.mxu0 0.0
  %2643 = vmatprep.subr.mxu0 0.0
  %2644 = vmatpush2.msra.mxu0 0.0
  %2645 = vmatprep.subr.mxu0 0.0
  %2646 = vmatpush2.msra.mxu0 0.0
  %2647 = vmatprep.subr.mxu0 0.0
  %2648 = vmatpush2.msra.mxu0 0.0
  %2649 = vmatprep.subr.mxu0 0.0
  %2650 = vmatpush2.msra.mxu0 0.0
  %2651 = vmatprep.subr.mxu0 0.0
  %2652 = vmatpush2.msra.mxu0 0.0
  %2653 = vmatprep.subr.mxu0 0.0
  %2654 = vmatpush2.msra.mxu0 0.0
  %2655 = vmatprep.subr.mxu0 0.0
  %2656 = vmatpush2.msra.mxu0 0.0
  %2657 = vmatprep.subr.mxu0 0.0
  %2658 = vmatpush2.msra.mxu0 0.0
  %2659 = vmatprep.subr.mxu0 0.0
  %2660 = vmatpush2.msra.mxu0 0.0
  %2661 = vmatprep.subr.mxu0 0.0
  %2662 = vmatpush2.msra.mxu0 0.0
  %2663 = vmatprep.subr.mxu0 0.0
  %2664 = vmatpush2.msra.mxu0 0.0
  %2665 = vmatprep.subr.mxu0 0.0
  %2666 = vmatpush2.msra.mxu0 0.0
  %2667 = vmatprep.subr.mxu0 0.0
  %2668 = vmatpush2.msra.mxu0 0.0
  %2669 = vmatprep.subr.mxu0 0.0
  %2670 = vmatpush2.msra.mxu0 0.0
  %2671 = vmatprep.mubr.f32.mxu0 0.0
  %2672 = vmatmul.mubr.f32.gmra.mxu0 %v2603
  %v2673 = vpop.f32.mrf.mxu0
  %v2674 = vadd.f32 0.0, %v2673
  %v2675 = vpop.f32.mrf.mxu0
  %2676 = vmatprep.mubr.f32.mxu0 0.0
  %2677 = vmatmul.mubr.f32.gmra.mxu0 %v2605
  %v2678 = vpop.f32.mrf.mxu0
  %v2679 = vadd.f32 0.0, %v2678
  %v2680 = vpop.f32.mrf.mxu0
  %2681 = vdwg.mxu0
  %v2682 = vadd.f32 %v2595, %v2674
  %v2683 = vadd.f32 %v2596, %v2679
  %v2685 = vsel %vm1012, %v2593, 0
  %v2688 = vsel %vm1012, %v2594, 0
  %2690 = vmatprep.subr.mxu0 0.0
  %2691 = vmatpush1.msra.mxu0 0.0
  %2692 = vmatprep.subr.mxu0 0.0
  %2693 = vmatpush1.msra.mxu0 0.0
  %2694 = vmatprep.subr.mxu0 0.0
  %2695 = vmatpush1.msra.mxu0 0.0
  %2696 = vmatprep.subr.mxu0 0.0
  %2697 = vmatpush1.msra.mxu0 0.0
  %2698 = vmatprep.subr.mxu0 0.0
  %2699 = vmatpush1.msra.mxu0 0.0
  %2700 = vmatprep.subr.mxu0 0.0
  %2701 = vmatpush1.msra.mxu0 0.0
  %2702 = vmatprep.subr.mxu0 0.0
  %2703 = vmatpush1.msra.mxu0 0.0
  %2704 = vmatprep.subr.mxu0 0.0
  %2705 = vmatpush1.msra.mxu0 0.0
  %2706 = vmatprep.subr.mxu0 0.0
  %2707 = vmatpush1.msra.mxu0 0.0
  %2708 = vmatprep.subr.mxu0 0.0
  %2709 = vmatpush1.msra.mxu0 0.0
  %2710 = vmatprep.subr.mxu0 0.0
  %2711 = vmatpush1.msra.mxu0 0.0
  %2712 = vmatprep.subr.mxu0 0.0
  %2713 = vmatpush1.msra.mxu0 0.0
  %2714 = vmatprep.subr.mxu0 0.0
  %2715 = vmatpush1.msra.mxu0 0.0
  %2716 = vmatprep.subr.mxu0 0.0
  %2717 = vmatpush1.msra.mxu0 0.0
  %2718 = vmatprep.subr.mxu0 0.0
  %2719 = vmatpush1.msra.mxu0 %v2683
  %2720 = vmatprep.subr.mxu0 0.0
  %2721 = vmatpush1.msra.mxu0 %v2682
  %2722 = vmatprep.subr.mxu0 0.0
  %2723 = vmatpush2.msra.mxu0 0.0
  %2724 = vmatprep.subr.mxu0 0.0
  %2725 = vmatpush2.msra.mxu0 0.0
  %2726 = vmatprep.subr.mxu0 0.0
  %2727 = vmatpush2.msra.mxu0 0.0
  %2728 = vmatprep.subr.mxu0 0.0
  %2729 = vmatpush2.msra.mxu0 0.0
  %2730 = vmatprep.subr.mxu0 0.0
  %2731 = vmatpush2.msra.mxu0 0.0
  %2732 = vmatprep.subr.mxu0 0.0
  %2733 = vmatpush2.msra.mxu0 0.0
  %2734 = vmatprep.subr.mxu0 0.0
  %2735 = vmatpush2.msra.mxu0 0.0
  %2736 = vmatprep.subr.mxu0 0.0
  %2737 = vmatpush2.msra.mxu0 0.0
  %2738 = vmatprep.subr.mxu0 0.0
  %2739 = vmatpush2.msra.mxu0 0.0
  %2740 = vmatprep.subr.mxu0 0.0
  %2741 = vmatpush2.msra.mxu0 0.0
  %2742 = vmatprep.subr.mxu0 0.0
  %2743 = vmatpush2.msra.mxu0 0.0
  %2744 = vmatprep.subr.mxu0 0.0
  %2745 = vmatpush2.msra.mxu0 0.0
  %2746 = vmatprep.subr.mxu0 0.0
  %2747 = vmatpush2.msra.mxu0 0.0
  %2748 = vmatprep.subr.mxu0 0.0
  %2749 = vmatpush2.msra.mxu0 0.0
  %2750 = vmatprep.subr.mxu0 0.0
  %2751 = vmatpush2.msra.mxu0 0.0
  %2752 = vmatprep.subr.mxu0 0.0
  %2753 = vmatpush2.msra.mxu0 0.0
  %2754 = vmatprep.mubr.f32.mxu0 0.0
  %2755 = vmatmul.mubr.f32.gmra.mxu0 %v2685
  %v2756 = vpop.f32.mrf.mxu0
  %v2757 = vadd.f32 0.0, %v2756
  %v2758 = vpop.f32.mrf.mxu0
  %2759 = vmatprep.mubr.f32.mxu0 0.0
  %2760 = vmatmul.mubr.f32.gmra.mxu0 %v2688
  %v2761 = vpop.f32.mrf.mxu0
  %v2762 = vadd.f32 0.0, %v2761
  %v2763 = vpop.f32.mrf.mxu0
  %2764 = vdwg.mxu0
  %v2765 = vmax.f32 %v2757, 0.0
  %v2766 = vmax.f32 %v2762, 0.0
  %2767 = vmatprep.subr.mxu0 0.0
  %2768 = vmatpush1.msra.mxu0 0.0
  %2769 = vmatprep.subr.mxu0 0.0
  %2770 = vmatpush1.msra.mxu0 0.0
  %2771 = vmatprep.subr.mxu0 0.0
  %2772 = vmatpush1.msra.mxu0 0.0
  %2773 = vmatprep.subr.mxu0 0.0
  %2774 = vmatpush1.msra.mxu0 0.0
  %2775 = vmatprep.subr.mxu0 0.0
  %2776 = vmatpush1.msra.mxu0 0.0
  %2777 = vmatprep.subr.mxu0 0.0
  %2778 = vmatpush1.msra.mxu0 0.0
  %2779 = vmatprep.subr.mxu0 0.0
  %2780 = vmatpush1.msra.mxu0 0.0
  %2781 = vmatprep.subr.mxu0 0.0
  %2782 = vmatpush1.msra.mxu0 0.0
  %2783 = vmatprep.subr.mxu0 0.0
  %2784 = vmatpush1.msra.mxu0 0.0
  %2785 = vmatprep.subr.mxu0 0.0
  %2786 = vmatpush1.msra.mxu0 0.0
  %2787 = vmatprep.subr.mxu0 0.0
  %2788 = vmatpush1.msra.mxu0 0.0
  %2789 = vmatprep.subr.mxu0 0.0
  %2790 = vmatpush1.msra.mxu0 0.0
  %2791 = vmatprep.subr.mxu0 0.0
  %2792 = vmatpush1.msra.mxu0 0.0
  %2793 = vmatprep.subr.mxu0 0.0
  %2794 = vmatpush1.msra.mxu0 0.0
  %2795 = vmatprep.subr.mxu0 0.0
  %2796 = vmatpush1.msra.mxu0 %v2766
  %2797 = vmatprep.subr.mxu0 0.0
  %2798 = vmatpush1.msra.mxu0 %v2765
  %2799 = vmatprep.subr.mxu0 0.0
  %2800 = vmatpush2.msra.mxu0 0.0
  %2801 = vmatprep.subr.mxu0 0.0
  %2802 = vmatpush2.msra.mxu0 0.0
  %2803 = vmatprep.subr.mxu0 0.0
  %2804 = vmatpush2.msra.mxu0 0.0
  %2805 = vmatprep.subr.mxu0 0.0
  %2806 = vmatpush2.msra.mxu0 0.0
  %2807 = vmatprep.subr.mxu0 0.0
  %2808 = vmatpush2.msra.mxu0 0.0
  %2809 = vmatprep.subr.mxu0 0.0
  %2810 = vmatpush2.msra.mxu0 0.0
  %2811 = vmatprep.subr.mxu0 0.0
  %2812 = vmatpush2.msra.mxu0 0.0
  %2813 = vmatprep.subr.mxu0 0.0
  %2814 = vmatpush2.msra.mxu0 0.0
  %2815 = vmatprep.subr.mxu0 0.0
  %2816 = vmatpush2.msra.mxu0 0.0
  %2817 = vmatprep.subr.mxu0 0.0
  %2818 = vmatpush2.msra.mxu0 0.0
  %2819 = vmatprep.subr.mxu0 0.0
  %2820 = vmatpush2.msra.mxu0 0.0
  %2821 = vmatprep.subr.mxu0 0.0
  %2822 = vmatpush2.msra.mxu0 0.0
  %2823 = vmatprep.subr.mxu0 0.0
  %2824 = vmatpush2.msra.mxu0 0.0
  %2825 = vmatprep.subr.mxu0 0.0
  %2826 = vmatpush2.msra.mxu0 0.0
  %2827 = vmatprep.subr.mxu0 0.0
  %2828 = vmatpush2.msra.mxu0 0.0
  %2829 = vmatprep.subr.mxu0 0.0
  %2830 = vmatpush2.msra.mxu0 0.0
  %2831 = vmatprep.mubr.f32.mxu0 0.0
  %2832 = vmatmul.mubr.f32.gmra.mxu0 %v1520
  %v2833 = vpop.f32.mrf.mxu0
  %v2834 = vadd.f32 1e-06, %v2833
  %v2835 = vpop.f32.mrf.mxu0
  %2836 = vmatprep.mubr.f32.mxu0 0.0
  %2837 = vmatmul.mubr.f32.gmra.mxu0 %v1523
  %v2838 = vpop.f32.mrf.mxu0
  %v2839 = vadd.f32 1e-06, %v2838
  %v2840 = vpop.f32.mrf.mxu0
  %2841 = vdwg.mxu0
  %v2842 = vrcp.pop %v2834
  %v2843 = vmul.f32 %v2765, %v2842
  %v2844 = vrcp.pop %v2839
  %v2845 = vmul.f32 %v2766, %v2844
  %vm2846 = vcmp.gt.f32.partialorder %v2843, 20.0
  %vm2847 = vcmp.gt.f32.partialorder %v2845, 20.0
  %v2848 = vmin.f32 %v2843, 20.0
  %v2849 = vmin.f32 %v2845, 20.0
  %v2850 = vmul.f32 %v2848, 1.442695
  %v2851 = vpow.pop %v2850
  %v2852 = vmul.f32 %v2849, 1.442695
  %v2853 = vpow.pop %v2852
  %v2854 = vadd.f32 %v2851, 1.0
  %v2855 = vlog2.pop %v2854
  %v2856 = vmul.f32 %v2855, 0.6931472
  %v2857 = vmul.f32 -0.5, %v2851
  %v2858 = vadd.f32 %v2857, 1.0
  %v2859 = vmul.f32 %v2858, %v2851
  %v2860 = vand.u32 2147483647, %v2851
  %vm2861 = vcmp.lt.f32.partialorder %v2860, 0.0004427343
  %v2862 = vsel %vm2861, %v2859, %v2856
  %v2863 = vadd.f32 %v2853, 1.0
  %v2864 = vlog2.pop %v2863
  %v2865 = vmul.f32 %v2864, 0.6931472
  %v2866 = vmul.f32 -0.5, %v2853
  %v2867 = vadd.f32 %v2866, 1.0
  %v2868 = vmul.f32 %v2867, %v2853
  %v2869 = vand.u32 2147483647, %v2853
  %vm2870 = vcmp.lt.f32.partialorder %v2869, 0.0004427343
  %v2871 = vsel %vm2870, %v2868, %v2865
  %v2872 = vsel %vm2846, %v2843, %v2862
  %v2873 = vsel %vm2847, %v2845, %v2871
  %v2875 = vsel %vm669, %v2872, 0
  %v2878 = vsel %vm669, %v2873, 0
  %2880 = vmatprep.subr.mxu0 0.0
  %2881 = vmatpush1.msra.mxu0 0.0
  %2882 = vmatprep.subr.mxu0 0.0
  %2883 = vmatpush1.msra.mxu0 0.0
  %2884 = vmatprep.subr.mxu0 0.0
  %2885 = vmatpush1.msra.mxu0 0.0
  %2886 = vmatprep.subr.mxu0 0.0
  %2887 = vmatpush1.msra.mxu0 0.0
  %2888 = vmatprep.subr.mxu0 0.0
  %2889 = vmatpush1.msra.mxu0 0.0
  %2890 = vmatprep.subr.mxu0 0.0
  %2891 = vmatpush1.msra.mxu0 0.0
  %2892 = vmatprep.subr.mxu0 0.0
  %2893 = vmatpush1.msra.mxu0 0.0
  %2894 = vmatprep.subr.mxu0 0.0
  %2895 = vmatpush1.msra.mxu0 0.0
  %2896 = vmatprep.subr.mxu0 0.0
  %2897 = vmatpush1.msra.mxu0 0.0
  %2898 = vmatprep.subr.mxu0 0.0
  %2899 = vmatpush1.msra.mxu0 0.0
  %2900 = vmatprep.subr.mxu0 0.0
  %2901 = vmatpush1.msra.mxu0 0.0
  %2902 = vmatprep.subr.mxu0 0.0
  %2903 = vmatpush1.msra.mxu0 0.0
  %2904 = vmatprep.subr.mxu0 0.0
  %2905 = vmatpush1.msra.mxu0 %v1345
  %2906 = vmatprep.subr.mxu0 0.0
  %2907 = vmatpush1.msra.mxu0 %v1344
  %2908 = vmatprep.subr.mxu0 0.0
  %2909 = vmatpush1.msra.mxu0 %v1343
  %2910 = vmatprep.subr.mxu0 0.0
  %2911 = vmatpush1.msra.mxu0 %v1342
  %2912 = vmatprep.subr.mxu0 0.0
  %2913 = vmatpush2.msra.mxu0 0.0
  %2914 = vmatprep.subr.mxu0 0.0
  %2915 = vmatpush2.msra.mxu0 0.0
  %2916 = vmatprep.subr.mxu0 0.0
  %2917 = vmatpush2.msra.mxu0 0.0
  %2918 = vmatprep.subr.mxu0 0.0
  %2919 = vmatpush2.msra.mxu0 0.0
  %2920 = vmatprep.subr.mxu0 0.0
  %2921 = vmatpush2.msra.mxu0 0.0
  %2922 = vmatprep.subr.mxu0 0.0
  %2923 = vmatpush2.msra.mxu0 0.0
  %2924 = vmatprep.subr.mxu0 0.0
  %2925 = vmatpush2.msra.mxu0 0.0
  %2926 = vmatprep.subr.mxu0 0.0
  %2927 = vmatpush2.msra.mxu0 0.0
  %2928 = vmatprep.subr.mxu0 0.0
  %2929 = vmatpush2.msra.mxu0 0.0
  %2930 = vmatprep.subr.mxu0 0.0
  %2931 = vmatpush2.msra.mxu0 0.0
  %2932 = vmatprep.subr.mxu0 0.0
  %2933 = vmatpush2.msra.mxu0 0.0
  %2934 = vmatprep.subr.mxu0 0.0
  %2935 = vmatpush2.msra.mxu0 0.0
  %2936 = vmatprep.subr.mxu0 0.0
  %2937 = vmatpush2.msra.mxu0 0.0
  %2938 = vmatprep.subr.mxu0 0.0
  %2939 = vmatpush2.msra.mxu0 0.0
  %2940 = vmatprep.subr.mxu0 0.0
  %2941 = vmatpush2.msra.mxu0 0.0
  %2942 = vmatprep.subr.mxu0 0.0
  %2943 = vmatpush2.msra.mxu0 0.0
  %2944 = vmatprep.mubr.f32.mxu0 0.0
  %2945 = vmatmul.mubr.f32.gmra.mxu0 %v2875
  %v2946 = vpop.f32.mrf.mxu0
  %v2947 = vadd.f32 %v1635, %v2946
  %v2948 = vpop.f32.mrf.mxu0
  %2949 = vmatprep.mubr.f32.mxu0 0.0
  %2950 = vmatmul.mubr.f32.gmra.mxu0 %v2878
  %v2951 = vpop.f32.mrf.mxu0
  %v2952 = vadd.f32 %v1635, %v2951
  %v2953 = vpop.f32.mrf.mxu0
  %2954 = vdwg.mxu0
  %v2955 = vxor.u32 %v2947, 2147483648
  %v2956 = vxor.u32 %v2952, 2147483648
  %v2957 = vmul.f32 %v2955, 1.442695
  %v2958 = vpow.pop %v2957
  %v2959 = vmul.f32 %v2956, 1.442695
  %v2960 = vpow.pop %v2959
  %v2961 = vadd.f32 %v2958, 1.0
  %v2962 = vadd.f32 %v2960, 1.0
  %v2963 = vrcp.pop %v2961
  %v2964 = vmul.f32 1.0, %v2963
  %v2965 = vrcp.pop %v2962
  %v2966 = vmul.f32 1.0, %v2965
  %v2967 = vmax.f32 %v2947, 0.0
  %v2968 = vmax.f32 %v2952, 0.0
  %v2969 = vmul.f32 %v2964, %v2579
  %v2970 = vmul.f32 %v2966, %v2580
  %2973 = vrot.lane.b32.xlu0 %v2967, 80
  %v2974 = vpop.permute.xlu0 %2973
  %2975 = vrot.lane.b32.xlu0 %v2968, 80
  %v2976 = vpop.permute.xlu0 %2975
  %v2979 = vmul.f32 %v2964, %v2974
  %v2980 = vmul.f32 %v2966, %v2976
  %2983 = vrot.lane.b32.xlu0 %v2979, 16
  %v2984 = vpop.permute.xlu0 %2983
  %2985 = vrot.lane.b32.xlu0 %v2980, 16
  %v2986 = vpop.permute.xlu0 %2985
  %v2989 = vadd.f32 %v2969, %v2984
  %v2990 = vadd.f32 %v2970, %v2986
  %v2991 = vtanh.pop %v2989
  %v2992 = vtanh.pop %v2990
  %2995 = vrot.lane.b32.xlu0 %v2991, 16
  %v2996 = vpop.permute.xlu0 %2995
  %2997 = vrot.lane.b32.xlu0 %v2992, 16
  %v2998 = vpop.permute.xlu0 %2997
  %v3001 = vmul.f32 %v2964, %v2996
  %v3002 = vmul.f32 %v2966, %v2998
  %v3003 = vld [vmem:[%s2 + $0x20] sm:$0xff]
  %v3004 = vld [vmem:[%s2 + $0x28] sm:$0xff]
  %v3005 = vld [vmem:[%s2 + $0x30] sm:$0xff]
  %v3006 = vld [vmem:[%s2 + $0x38] sm:$0xff]
  %v3007 = vld [vmem:[%s2 + $0x40] sm:$0xff]
  %v3008 = vld [vmem:[%s2 + $0x48] sm:$0xff]
  %v3009 = vld [vmem:[%s2 + $0x50] sm:$0xff]
  %v3010 = vld [vmem:[%s2 + $0x58] sm:$0xff]
  %v3011 = vld [vmem:[%s3 + $0x210] sm:$0xff]
  %v3012 = vld [vmem:[%s3 + $0x218] sm:$0xff]
  %v3013 = vld [vmem:[%s3 + $0x220] sm:$0xff]
  %v3014 = vld [vmem:[%s3 + $0x228] sm:$0xff]
  %v3015 = vld [vmem:[%s3 + $0x230] sm:$0x1]
  %v3016 = vld [vmem:[%s3 + $0x280] sm:$0xff]
  %v3017 = vld [vmem:[%s3 + $0x288] sm:$0xff]
  %v3018 = vld [vmem:[%s3 + $0x290] sm:$0xff]
  %v3019 = vld [vmem:[%s3 + $0x298] sm:$0xff]
  %v3020 = vld [vmem:[#allocation3] sm:$0xff]
  %v3021 = vld [vmem:[#allocation3 + $0x8] sm:$0xff]
  %v3022 = vld [vmem:[#allocation3 + $0x10] sm:$0xff]
  %v3023 = vld [vmem:[#allocation3 + $0x18] sm:$0xff]
  %v3024 = vld [vmem:[#allocation4] sm:$0xff]
  %v3025 = vld [vmem:[#allocation4 + $0x8] sm:$0xff]
  %v3027 = vsel %vm1012, %v3003, 0
  %v3030 = vsel %vm1012, %v3004, 0
  %v3033 = vsel %vm1012, %v3005, 0
  %v3036 = vsel %vm1012, %v3006, 0
  %3038 = vmatprep.subr.mxu0 0.0
  %3039 = vmatpush1.msra.mxu0 0.0
  %3040 = vmatprep.subr.mxu0 0.0
  %3041 = vmatpush1.msra.mxu0 0.0
  %3042 = vmatprep.subr.mxu0 0.0
  %3043 = vmatpush1.msra.mxu0 0.0
  %3044 = vmatprep.subr.mxu0 0.0
  %3045 = vmatpush1.msra.mxu0 0.0
  %3046 = vmatprep.subr.mxu0 0.0
  %3047 = vmatpush1.msra.mxu0 0.0
  %3048 = vmatprep.subr.mxu0 0.0
  %3049 = vmatpush1.msra.mxu0 0.0
  %3050 = vmatprep.subr.mxu0 0.0
  %3051 = vmatpush1.msra.mxu0 0.0
  %3052 = vmatprep.subr.mxu0 0.0
  %3053 = vmatpush1.msra.mxu0 0.0
  %3054 = vmatprep.subr.mxu0 0.0
  %3055 = vmatpush1.msra.mxu0 0.0
  %3056 = vmatprep.subr.mxu0 0.0
  %3057 = vmatpush1.msra.mxu0 0.0
  %3058 = vmatprep.subr.mxu0 0.0
  %3059 = vmatpush1.msra.mxu0 0.0
  %3060 = vmatprep.subr.mxu0 0.0
  %3061 = vmatpush1.msra.mxu0 0.0
  %3062 = vmatprep.subr.mxu0 0.0
  %3063 = vmatpush1.msra.mxu0 0.0
  %3064 = vmatprep.subr.mxu0 0.0
  %3065 = vmatpush1.msra.mxu0 0.0
  %3066 = vmatprep.subr.mxu0 0.0
  %3067 = vmatpush1.msra.mxu0 %v1337
  %3068 = vmatprep.subr.mxu0 0.0
  %3069 = vmatpush1.msra.mxu0 %v1336
  %3070 = vmatprep.subr.mxu0 0.0
  %3071 = vmatpush2.msra.mxu0 0.0
  %3072 = vmatprep.subr.mxu0 0.0
  %3073 = vmatpush2.msra.mxu0 0.0
  %3074 = vmatprep.subr.mxu0 0.0
  %3075 = vmatpush2.msra.mxu0 0.0
  %3076 = vmatprep.subr.mxu0 0.0
  %3077 = vmatpush2.msra.mxu0 0.0
  %3078 = vmatprep.subr.mxu0 0.0
  %3079 = vmatpush2.msra.mxu0 0.0
  %3080 = vmatprep.subr.mxu0 0.0
  %3081 = vmatpush2.msra.mxu0 0.0
  %3082 = vmatprep.subr.mxu0 0.0
  %3083 = vmatpush2.msra.mxu0 0.0
  %3084 = vmatprep.subr.mxu0 0.0
  %3085 = vmatpush2.msra.mxu0 0.0
  %3086 = vmatprep.subr.mxu0 0.0
  %3087 = vmatpush2.msra.mxu0 0.0
  %3088 = vmatprep.subr.mxu0 0.0
  %3089 = vmatpush2.msra.mxu0 0.0
  %3090 = vmatprep.subr.mxu0 0.0
  %3091 = vmatpush2.msra.mxu0 0.0
  %3092 = vmatprep.subr.mxu0 0.0
  %3093 = vmatpush2.msra.mxu0 0.0
  %3094 = vmatprep.subr.mxu0 0.0
  %3095 = vmatpush2.msra.mxu0 0.0
  %3096 = vmatprep.subr.mxu0 0.0
  %3097 = vmatpush2.msra.mxu0 0.0
  %3098 = vmatprep.subr.mxu0 0.0
  %3099 = vmatpush2.msra.mxu0 0.0
  %3100 = vmatprep.subr.mxu0 0.0
  %3101 = vmatpush2.msra.mxu0 0.0
  %3102 = vmatprep.mubr.f32.mxu0 0.0
  %3103 = vmatmul.mubr.f32.gmra.mxu0 %v3027
  %v3104 = vpop.f32.mrf.mxu0
  %v3105 = vadd.f32 0.0, %v3104
  %v3106 = vpop.f32.mrf.mxu0
  %3107 = vmatprep.mubr.f32.mxu0 0.0
  %3108 = vmatmul.mubr.f32.gmra.mxu0 %v3030
  %v3109 = vpop.f32.mrf.mxu0
  %v3110 = vadd.f32 0.0, %v3109
  %v3111 = vpop.f32.mrf.mxu0
  %3112 = vmatprep.mubr.f32.mxu0 0.0
  %3113 = vmatmul.mubr.f32.gmra.mxu0 %v3033
  %v3114 = vpop.f32.mrf.mxu0
  %v3115 = vadd.f32 0.0, %v3114
  %v3116 = vpop.f32.mrf.mxu0
  %3117 = vmatprep.mubr.f32.mxu0 0.0
  %3118 = vmatmul.mubr.f32.gmra.mxu0 %v3036
  %v3119 = vpop.f32.mrf.mxu0
  %v3120 = vadd.f32 0.0, %v3119
  %v3121 = vpop.f32.mrf.mxu0
  %3122 = vdwg.mxu0
  %v3123 = vadd.f32 %v3024, %v3105
  %v3124 = vadd.f32 %v3025, %v3110
  %v3125 = vadd.f32 %v1775, %v3115
  %v3126 = vadd.f32 %v1776, %v3120
  %v3128 = vsel %vm669, %v3020, 0
  %v3131 = vsel %vm669, %v3021, 0
  %v3134 = vsel %vm669, %v3022, 0
  %v3137 = vsel %vm669, %v3023, 0
  %3139 = vmatprep.subr.mxu0 0.0
  %3140 = vmatpush1.msra.mxu0 0.0
  %3141 = vmatprep.subr.mxu0 0.0
  %3142 = vmatpush1.msra.mxu0 0.0
  %3143 = vmatprep.subr.mxu0 0.0
  %3144 = vmatpush1.msra.mxu0 0.0
  %3145 = vmatprep.subr.mxu0 0.0
  %3146 = vmatpush1.msra.mxu0 0.0
  %3147 = vmatprep.subr.mxu0 0.0
  %3148 = vmatpush1.msra.mxu0 0.0
  %3149 = vmatprep.subr.mxu0 0.0
  %3150 = vmatpush1.msra.mxu0 0.0
  %3151 = vmatprep.subr.mxu0 0.0
  %3152 = vmatpush1.msra.mxu0 0.0
  %3153 = vmatprep.subr.mxu0 0.0
  %3154 = vmatpush1.msra.mxu0 0.0
  %3155 = vmatprep.subr.mxu0 0.0
  %3156 = vmatpush1.msra.mxu0 0.0
  %3157 = vmatprep.subr.mxu0 0.0
  %3158 = vmatpush1.msra.mxu0 0.0
  %3159 = vmatprep.subr.mxu0 0.0
  %3160 = vmatpush1.msra.mxu0 0.0
  %3161 = vmatprep.subr.mxu0 0.0
  %3162 = vmatpush1.msra.mxu0 0.0
  %3163 = vmatprep.subr.mxu0 0.0
  %3164 = vmatpush1.msra.mxu0 %v3126
  %3165 = vmatprep.subr.mxu0 0.0
  %3166 = vmatpush1.msra.mxu0 %v3125
  %3167 = vmatprep.subr.mxu0 0.0
  %3168 = vmatpush1.msra.mxu0 %v3124
  %3169 = vmatprep.subr.mxu0 0.0
  %3170 = vmatpush1.msra.mxu0 %v3123
  %3171 = vmatprep.subr.mxu0 0.0
  %3172 = vmatpush2.msra.mxu0 0.0
  %3173 = vmatprep.subr.mxu0 0.0
  %3174 = vmatpush2.msra.mxu0 0.0
  %3175 = vmatprep.subr.mxu0 0.0
  %3176 = vmatpush2.msra.mxu0 0.0
  %3177 = vmatprep.subr.mxu0 0.0
  %3178 = vmatpush2.msra.mxu0 0.0
  %3179 = vmatprep.subr.mxu0 0.0
  %3180 = vmatpush2.msra.mxu0 0.0
  %3181 = vmatprep.subr.mxu0 0.0
  %3182 = vmatpush2.msra.mxu0 0.0
  %3183 = vmatprep.subr.mxu0 0.0
  %3184 = vmatpush2.msra.mxu0 0.0
  %3185 = vmatprep.subr.mxu0 0.0
  %3186 = vmatpush2.msra.mxu0 0.0
  %3187 = vmatprep.subr.mxu0 0.0
  %3188 = vmatpush2.msra.mxu0 0.0
  %3189 = vmatprep.subr.mxu0 0.0
  %3190 = vmatpush2.msra.mxu0 0.0
  %3191 = vmatprep.subr.mxu0 0.0
  %3192 = vmatpush2.msra.mxu0 0.0
  %3193 = vmatprep.subr.mxu0 0.0
  %3194 = vmatpush2.msra.mxu0 0.0
  %3195 = vmatprep.subr.mxu0 0.0
  %3196 = vmatpush2.msra.mxu0 0.0
  %3197 = vmatprep.subr.mxu0 0.0
  %3198 = vmatpush2.msra.mxu0 0.0
  %3199 = vmatprep.subr.mxu0 0.0
  %3200 = vmatpush2.msra.mxu0 0.0
  %3201 = vmatprep.subr.mxu0 0.0
  %3202 = vmatpush2.msra.mxu0 0.0
  %3203 = vmatprep.mubr.f32.mxu0 0.0
  %3204 = vmatmul.mubr.f32.gmra.mxu0 %v3128
  %v3205 = vpop.f32.mrf.mxu0
  %v3206 = vadd.f32 0.0, %v3205
  %v3207 = vpop.f32.mrf.mxu0
  %3208 = vmatprep.mubr.f32.mxu0 0.0
  %3209 = vmatmul.mubr.f32.gmra.mxu0 %v3131
  %v3210 = vpop.f32.mrf.mxu0
  %v3211 = vadd.f32 0.0, %v3210
  %v3212 = vpop.f32.mrf.mxu0
  %3213 = vmatprep.mubr.f32.mxu0 0.0
  %3214 = vmatmul.mubr.f32.gmra.mxu0 %v3134
  %v3215 = vpop.f32.mrf.mxu0
  %v3216 = vadd.f32 0.0, %v3215
  %v3217 = vpop.f32.mrf.mxu0
  %3218 = vmatprep.mubr.f32.mxu0 0.0
  %3219 = vmatmul.mubr.f32.gmra.mxu0 %v3137
  %v3220 = vpop.f32.mrf.mxu0
  %v3221 = vadd.f32 0.0, %v3220
  %v3222 = vpop.f32.mrf.mxu0
  %3223 = vdwg.mxu0
  %v3224 = vmax.f32 %v3206, 0.0
  %v3225 = vmax.f32 %v3211, 0.0
  %v3226 = vmax.f32 %v3216, 0.0
  %v3227 = vmax.f32 %v3221, 0.0
  %v3229 = vsel %vm669, %v3016, 0
  %v3232 = vsel %vm669, %v3017, 0
  %v3235 = vsel %vm669, %v3018, 0
  %v3238 = vsel %vm669, %v3019, 0
  %3240 = vmatprep.subr.mxu0 0.0
  %3241 = vmatpush1.msra.mxu0 0.0
  %3242 = vmatprep.subr.mxu0 0.0
  %3243 = vmatpush1.msra.mxu0 0.0
  %3244 = vmatprep.subr.mxu0 0.0
  %3245 = vmatpush1.msra.mxu0 0.0
  %3246 = vmatprep.subr.mxu0 0.0
  %3247 = vmatpush1.msra.mxu0 0.0
  %3248 = vmatprep.subr.mxu0 0.0
  %3249 = vmatpush1.msra.mxu0 0.0
  %3250 = vmatprep.subr.mxu0 0.0
  %3251 = vmatpush1.msra.mxu0 0.0
  %3252 = vmatprep.subr.mxu0 0.0
  %3253 = vmatpush1.msra.mxu0 0.0
  %3254 = vmatprep.subr.mxu0 0.0
  %3255 = vmatpush1.msra.mxu0 0.0
  %3256 = vmatprep.subr.mxu0 0.0
  %3257 = vmatpush1.msra.mxu0 0.0
  %3258 = vmatprep.subr.mxu0 0.0
  %3259 = vmatpush1.msra.mxu0 0.0
  %3260 = vmatprep.subr.mxu0 0.0
  %3261 = vmatpush1.msra.mxu0 0.0
  %3262 = vmatprep.subr.mxu0 0.0
  %3263 = vmatpush1.msra.mxu0 0.0
  %3264 = vmatprep.subr.mxu0 0.0
  %3265 = vmatpush1.msra.mxu0 %v3227
  %3266 = vmatprep.subr.mxu0 0.0
  %3267 = vmatpush1.msra.mxu0 %v3226
  %3268 = vmatprep.subr.mxu0 0.0
  %3269 = vmatpush1.msra.mxu0 %v3225
  %3270 = vmatprep.subr.mxu0 0.0
  %3271 = vmatpush1.msra.mxu0 %v3224
  %3272 = vmatprep.subr.mxu0 0.0
  %3273 = vmatpush2.msra.mxu0 0.0
  %3274 = vmatprep.subr.mxu0 0.0
  %3275 = vmatpush2.msra.mxu0 0.0
  %3276 = vmatprep.subr.mxu0 0.0
  %3277 = vmatpush2.msra.mxu0 0.0
  %3278 = vmatprep.subr.mxu0 0.0
  %3279 = vmatpush2.msra.mxu0 0.0
  %3280 = vmatprep.subr.mxu0 0.0
  %3281 = vmatpush2.msra.mxu0 0.0
  %3282 = vmatprep.subr.mxu0 0.0
  %3283 = vmatpush2.msra.mxu0 0.0
  %3284 = vmatprep.subr.mxu0 0.0
  %3285 = vmatpush2.msra.mxu0 0.0
  %3286 = vmatprep.subr.mxu0 0.0
  %3287 = vmatpush2.msra.mxu0 0.0
  %3288 = vmatprep.subr.mxu0 0.0
  %3289 = vmatpush2.msra.mxu0 0.0
  %3290 = vmatprep.subr.mxu0 0.0
  %3291 = vmatpush2.msra.mxu0 0.0
  %3292 = vmatprep.subr.mxu0 0.0
  %3293 = vmatpush2.msra.mxu0 0.0
  %3294 = vmatprep.subr.mxu0 0.0
  %3295 = vmatpush2.msra.mxu0 0.0
  %3296 = vmatprep.subr.mxu0 0.0
  %3297 = vmatpush2.msra.mxu0 0.0
  %3298 = vmatprep.subr.mxu0 0.0
  %3299 = vmatpush2.msra.mxu0 0.0
  %3300 = vmatprep.subr.mxu0 0.0
  %3301 = vmatpush2.msra.mxu0 0.0
  %3302 = vmatprep.subr.mxu0 0.0
  %3303 = vmatpush2.msra.mxu0 0.0
  %3304 = vmatprep.mubr.f32.mxu0 0.0
  %3305 = vmatmul.mubr.f32.gmra.mxu0 %v3229
  %v3306 = vpop.f32.mrf.mxu0
  %v3307 = vadd.f32 1e-06, %v3306
  %v3308 = vpop.f32.mrf.mxu0
  %3309 = vmatprep.mubr.f32.mxu0 0.0
  %3310 = vmatmul.mubr.f32.gmra.mxu0 %v3232
  %v3311 = vpop.f32.mrf.mxu0
  %v3312 = vadd.f32 1e-06, %v3311
  %v3313 = vpop.f32.mrf.mxu0
  %3314 = vmatprep.mubr.f32.mxu0 0.0
  %3315 = vmatmul.mubr.f32.gmra.mxu0 %v3235
  %v3316 = vpop.f32.mrf.mxu0
  %v3317 = vadd.f32 1e-06, %v3316
  %v3318 = vpop.f32.mrf.mxu0
  %3319 = vmatprep.mubr.f32.mxu0 0.0
  %3320 = vmatmul.mubr.f32.gmra.mxu0 %v3238
  %v3321 = vpop.f32.mrf.mxu0
  %v3322 = vadd.f32 1e-06, %v3321
  %v3323 = vpop.f32.mrf.mxu0
  %3324 = vdwg.mxu0
  %v3325 = vrcp.pop %v3307
  %v3326 = vmul.f32 %v3224, %v3325
  %v3327 = vrcp.pop %v3312
  %v3328 = vmul.f32 %v3225, %v3327
  %v3329 = vrcp.pop %v3317
  %v3330 = vmul.f32 %v3226, %v3329
  %v3331 = vrcp.pop %v3322
  %v3332 = vmul.f32 %v3227, %v3331
  %vm3333 = vcmp.gt.f32.partialorder %v3326, 20.0
  %vm3334 = vcmp.gt.f32.partialorder %v3328, 20.0
  %vm3335 = vcmp.gt.f32.partialorder %v3330, 20.0
  %vm3336 = vcmp.gt.f32.partialorder %v3332, 20.0
  %v3337 = vmin.f32 %v3326, 20.0
  %v3338 = vmin.f32 %v3328, 20.0
  %v3339 = vmin.f32 %v3330, 20.0
  %v3340 = vmin.f32 %v3332, 20.0
  %v3341 = vmul.f32 %v3337, 1.442695
  %v3342 = vpow.pop %v3341
  %v3343 = vmul.f32 %v3338, 1.442695
  %v3344 = vpow.pop %v3343
  %v3345 = vmul.f32 %v3339, 1.442695
  %v3346 = vpow.pop %v3345
  %v3347 = vmul.f32 %v3340, 1.442695
  %v3348 = vpow.pop %v3347
  %v3349 = vadd.f32 %v3342, 1.0
  %v3350 = vlog2.pop %v3349
  %v3351 = vmul.f32 %v3350, 0.6931472
  %v3352 = vmul.f32 -0.5, %v3342
  %v3353 = vadd.f32 %v3352, 1.0
  %v3354 = vmul.f32 %v3353, %v3342
  %v3355 = vand.u32 2147483647, %v3342
  %vm3356 = vcmp.lt.f32.partialorder %v3355, 0.0004427343
  %v3357 = vsel %vm3356, %v3354, %v3351
  %v3358 = vadd.f32 %v3344, 1.0
  %v3359 = vlog2.pop %v3358
  %v3360 = vmul.f32 %v3359, 0.6931472
  %v3361 = vmul.f32 -0.5, %v3344
  %v3362 = vadd.f32 %v3361, 1.0
  %v3363 = vmul.f32 %v3362, %v3344
  %v3364 = vand.u32 2147483647, %v3344
  %vm3365 = vcmp.lt.f32.partialorder %v3364, 0.0004427343
  %v3366 = vsel %vm3365, %v3363, %v3360
  %v3367 = vadd.f32 %v3346, 1.0
  %v3368 = vlog2.pop %v3367
  %v3369 = vmul.f32 %v3368, 0.6931472
  %v3370 = vmul.f32 -0.5, %v3346
  %v3371 = vadd.f32 %v3370, 1.0
  %v3372 = vmul.f32 %v3371, %v3346
  %v3373 = vand.u32 2147483647, %v3346
  %vm3374 = vcmp.lt.f32.partialorder %v3373, 0.0004427343
  %v3375 = vsel %vm3374, %v3372, %v3369
  %v3376 = vadd.f32 %v3348, 1.0
  %v3377 = vlog2.pop %v3376
  %v3378 = vmul.f32 %v3377, 0.6931472
  %v3379 = vmul.f32 -0.5, %v3348
  %v3380 = vadd.f32 %v3379, 1.0
  %v3381 = vmul.f32 %v3380, %v3348
  %v3382 = vand.u32 2147483647, %v3348
  %vm3383 = vcmp.lt.f32.partialorder %v3382, 0.0004427343
  %v3384 = vsel %vm3383, %v3381, %v3378
  %v3385 = vsel %vm3333, %v3326, %v3357
  %v3386 = vsel %vm3334, %v3328, %v3366
  %v3387 = vsel %vm3335, %v3330, %v3375
  %v3388 = vsel %vm3336, %v3332, %v3384
  %v3389 = vlaneseq
  %v3390 = vshrl.u32 %v3389, 7
  %v3391 = vsub.s32 0, %v3390
  %v3392 = vrot.slane %v3015, %v3391
  %v3394 = vsel %vm669, %v3385, 0
  %v3397 = vsel %vm669, %v3386, 0
  %v3400 = vsel %vm669, %v3387, 0
  %v3403 = vsel %vm669, %v3388, 0
  %3405 = vmatprep.subr.mxu0 0.0
  %3406 = vmatpush1.msra.mxu0 0.0
  %3407 = vmatprep.subr.mxu0 0.0
  %3408 = vmatpush1.msra.mxu0 0.0
  %3409 = vmatprep.subr.mxu0 0.0
  %3410 = vmatpush1.msra.mxu0 0.0
  %3411 = vmatprep.subr.mxu0 0.0
  %3412 = vmatpush1.msra.mxu0 0.0
  %3413 = vmatprep.subr.mxu0 0.0
  %3414 = vmatpush1.msra.mxu0 0.0
  %3415 = vmatprep.subr.mxu0 0.0
  %3416 = vmatpush1.msra.mxu0 0.0
  %3417 = vmatprep.subr.mxu0 0.0
  %3418 = vmatpush1.msra.mxu0 0.0
  %3419 = vmatprep.subr.mxu0 0.0
  %3420 = vmatpush1.msra.mxu0 0.0
  %3421 = vmatprep.subr.mxu0 0.0
  %3422 = vmatpush1.msra.mxu0 0.0
  %3423 = vmatprep.subr.mxu0 0.0
  %3424 = vmatpush1.msra.mxu0 0.0
  %3425 = vmatprep.subr.mxu0 0.0
  %3426 = vmatpush1.msra.mxu0 0.0
  %3427 = vmatprep.subr.mxu0 0.0
  %3428 = vmatpush1.msra.mxu0 0.0
  %3429 = vmatprep.subr.mxu0 0.0
  %3430 = vmatpush1.msra.mxu0 %v3014
  %3431 = vmatprep.subr.mxu0 0.0
  %3432 = vmatpush1.msra.mxu0 %v3013
  %3433 = vmatprep.subr.mxu0 0.0
  %3434 = vmatpush1.msra.mxu0 %v3012
  %3435 = vmatprep.subr.mxu0 0.0
  %3436 = vmatpush1.msra.mxu0 %v3011
  %3437 = vmatprep.subr.mxu0 0.0
  %3438 = vmatpush2.msra.mxu0 0.0
  %3439 = vmatprep.subr.mxu0 0.0
  %3440 = vmatpush2.msra.mxu0 0.0
  %3441 = vmatprep.subr.mxu0 0.0
  %3442 = vmatpush2.msra.mxu0 0.0
  %3443 = vmatprep.subr.mxu0 0.0
  %3444 = vmatpush2.msra.mxu0 0.0
  %3445 = vmatprep.subr.mxu0 0.0
  %3446 = vmatpush2.msra.mxu0 0.0
  %3447 = vmatprep.subr.mxu0 0.0
  %3448 = vmatpush2.msra.mxu0 0.0
  %3449 = vmatprep.subr.mxu0 0.0
  %3450 = vmatpush2.msra.mxu0 0.0
  %3451 = vmatprep.subr.mxu0 0.0
  %3452 = vmatpush2.msra.mxu0 0.0
  %3453 = vmatprep.subr.mxu0 0.0
  %3454 = vmatpush2.msra.mxu0 0.0
  %3455 = vmatprep.subr.mxu0 0.0
  %3456 = vmatpush2.msra.mxu0 0.0
  %3457 = vmatprep.subr.mxu0 0.0
  %3458 = vmatpush2.msra.mxu0 0.0
  %3459 = vmatprep.subr.mxu0 0.0
  %3460 = vmatpush2.msra.mxu0 0.0
  %3461 = vmatprep.subr.mxu0 0.0
  %3462 = vmatpush2.msra.mxu0 0.0
  %3463 = vmatprep.subr.mxu0 0.0
  %3464 = vmatpush2.msra.mxu0 0.0
  %3465 = vmatprep.subr.mxu0 0.0
  %3466 = vmatpush2.msra.mxu0 0.0
  %3467 = vmatprep.subr.mxu0 0.0
  %3468 = vmatpush2.msra.mxu0 0.0
  %3469 = vmatprep.mubr.f32.mxu0 0.0
  %3470 = vmatmul.mubr.f32.gmra.mxu0 %v3394
  %v3471 = vpop.f32.mrf.mxu0
  %v3472 = vadd.f32 %v3392, %v3471
  %v3473 = vpop.f32.mrf.mxu0
  %3474 = vmatprep.mubr.f32.mxu0 0.0
  %3475 = vmatmul.mubr.f32.gmra.mxu0 %v3397
  %v3476 = vpop.f32.mrf.mxu0
  %v3477 = vadd.f32 %v3392, %v3476
  %v3478 = vpop.f32.mrf.mxu0
  %3479 = vmatprep.mubr.f32.mxu0 0.0
  %3480 = vmatmul.mubr.f32.gmra.mxu0 %v3400
  %v3481 = vpop.f32.mrf.mxu0
  %v3482 = vadd.f32 %v3392, %v3481
  %v3483 = vpop.f32.mrf.mxu0
  %3484 = vmatprep.mubr.f32.mxu0 0.0
  %3485 = vmatmul.mubr.f32.gmra.mxu0 %v3403
  %v3486 = vpop.f32.mrf.mxu0
  %v3487 = vadd.f32 %v3392, %v3486
  %v3488 = vpop.f32.mrf.mxu0
  %3489 = vdwg.mxu0
  %v3490 = vxor.u32 %v3472, 2147483648
  %v3491 = vxor.u32 %v3477, 2147483648
  %v3492 = vxor.u32 %v3482, 2147483648
  %v3493 = vxor.u32 %v3487, 2147483648
  %v3494 = vmul.f32 %v3490, 1.442695
  %v3495 = vpow.pop %v3494
  %v3496 = vmul.f32 %v3491, 1.442695
  %v3497 = vpow.pop %v3496
  %v3498 = vmul.f32 %v3492, 1.442695
  %v3499 = vpow.pop %v3498
  %v3500 = vmul.f32 %v3493, 1.442695
  %v3501 = vpow.pop %v3500
  %v3502 = vadd.f32 %v3495, 1.0
  %v3503 = vadd.f32 %v3497, 1.0
  %v3504 = vadd.f32 %v3499, 1.0
  %v3505 = vadd.f32 %v3501, 1.0
  %v3506 = vrcp.pop %v3502
  %v3507 = vmul.f32 1.0, %v3506
  %v3508 = vrcp.pop %v3503
  %v3509 = vmul.f32 1.0, %v3508
  %v3510 = vrcp.pop %v3504
  %v3511 = vmul.f32 1.0, %v3510
  %v3512 = vrcp.pop %v3505
  %v3513 = vmul.f32 1.0, %v3512
  %v3514 = vmax.f32 %v3472, 0.0
  %v3515 = vmax.f32 %v3477, 0.0
  %v3516 = vmax.f32 %v3482, 0.0
  %v3517 = vmax.f32 %v3487, 0.0
  %3522 = vrot.lane.b32.xlu0 %v3007, 16
  %v3523 = vpop.permute.xlu0 %3522
  %3524 = vrot.lane.b32.xlu0 %v3008, 16
  %v3525 = vpop.permute.xlu0 %3524
  %3526 = vrot.lane.b32.xlu0 %v3009, 16
  %v3527 = vpop.permute.xlu0 %3526
  %3528 = vrot.lane.b32.xlu0 %v3010, 16
  %v3529 = vpop.permute.xlu0 %3528
  %v3534 = vmul.f32 %v3507, %v3523
  %v3535 = vmul.f32 %v3509, %v3525
  %v3536 = vmul.f32 %v3511, %v3527
  %v3537 = vmul.f32 %v3513, %v3529
  %3542 = vrot.lane.b32.xlu0 %v3514, 80
  %v3543 = vpop.permute.xlu0 %3542
  %3544 = vrot.lane.b32.xlu0 %v3515, 80
  %v3545 = vpop.permute.xlu0 %3544
  %3546 = vrot.lane.b32.xlu0 %v3516, 80
  %v3547 = vpop.permute.xlu0 %3546
  %3548 = vrot.lane.b32.xlu0 %v3517, 80
  %v3549 = vpop.permute.xlu0 %3548
  %v3554 = vmul.f32 %v3507, %v3543
  %v3555 = vmul.f32 %v3509, %v3545
  %v3556 = vmul.f32 %v3511, %v3547
  %v3557 = vmul.f32 %v3513, %v3549
  %3562 = vrot.lane.b32.xlu0 %v3554, 16
  %v3563 = vpop.permute.xlu0 %3562
  %3564 = vrot.lane.b32.xlu0 %v3555, 16
  %v3565 = vpop.permute.xlu0 %3564
  %3566 = vrot.lane.b32.xlu0 %v3556, 16
  %v3567 = vpop.permute.xlu0 %3566
  %3568 = vrot.lane.b32.xlu0 %v3557, 16
  %v3569 = vpop.permute.xlu0 %3568
  %v3574 = vadd.f32 %v3534, %v3563
  %v3575 = vadd.f32 %v3535, %v3565
  %v3576 = vadd.f32 %v3536, %v3567
  %v3577 = vadd.f32 %v3537, %v3569
  %v3578 = vtanh.pop %v3574
  %v3579 = vtanh.pop %v3575
  %v3580 = vtanh.pop %v3576
  %v3581 = vtanh.pop %v3577
  %3586 = vrot.lane.b32.xlu0 %v3578, 16
  %v3587 = vpop.permute.xlu0 %3586
  %3588 = vrot.lane.b32.xlu0 %v3579, 16
  %v3589 = vpop.permute.xlu0 %3588
  %3590 = vrot.lane.b32.xlu0 %v3580, 16
  %v3591 = vpop.permute.xlu0 %3590
  %3592 = vrot.lane.b32.xlu0 %v3581, 16
  %v3593 = vpop.permute.xlu0 %3592
  %v3598 = vmul.f32 %v3507, %v3587
  %v3599 = vmul.f32 %v3509, %v3589
  %v3600 = vmul.f32 %v3511, %v3591
  %v3601 = vmul.f32 %v3513, %v3593
  %v3602 = vld [vmem:[#allocation3 + $0x20] sm:$0xff]
  %v3603 = vld [vmem:[#allocation3 + $0x28] sm:$0xff]
  %v3604 = vld [vmem:[#allocation3 + $0x30] sm:$0xff]
  %v3605 = vld [vmem:[#allocation3 + $0x38] sm:$0xff]
  %v3606 = vld [vmem:[#allocation4 + $0x20] sm:$0xff]
  %v3607 = vld [vmem:[#allocation4 + $0x28] sm:$0xff]
  %3612 = vrot.lane.b32.xlu0 %v3598, 96
  %v3613 = vpop.permute.xlu0 %3612
  %3614 = vrot.lane.b32.xlu0 %v3599, 96
  %v3615 = vpop.permute.xlu0 %3614
  %3616 = vrot.lane.b32.xlu0 %v3600, 96
  %v3617 = vpop.permute.xlu0 %3616
  %3618 = vrot.lane.b32.xlu0 %v3601, 96
  %v3619 = vpop.permute.xlu0 %3618
  %v3620 = vsel %vm1012, %v3613, 0
  %v3622 = vsel %vm1012, %v3615, 0
  %v3624 = vsel %vm1012, %v3617, 0
  %v3626 = vsel %vm1012, %v3619, 0
  %3628 = vmatprep.subr.mxu0 0.0
  %3629 = vmatpush1.msra.mxu0 0.0
  %3630 = vmatprep.subr.mxu0 0.0
  %3631 = vmatpush1.msra.mxu0 0.0
  %3632 = vmatprep.subr.mxu0 0.0
  %3633 = vmatpush1.msra.mxu0 0.0
  %3634 = vmatprep.subr.mxu0 0.0
  %3635 = vmatpush1.msra.mxu0 0.0
  %3636 = vmatprep.subr.mxu0 0.0
  %3637 = vmatpush1.msra.mxu0 0.0
  %3638 = vmatprep.subr.mxu0 0.0
  %3639 = vmatpush1.msra.mxu0 0.0
  %3640 = vmatprep.subr.mxu0 0.0
  %3641 = vmatpush1.msra.mxu0 0.0
  %3642 = vmatprep.subr.mxu0 0.0
  %3643 = vmatpush1.msra.mxu0 0.0
  %3644 = vmatprep.subr.mxu0 0.0
  %3645 = vmatpush1.msra.mxu0 0.0
  %3646 = vmatprep.subr.mxu0 0.0
  %3647 = vmatpush1.msra.mxu0 0.0
  %3648 = vmatprep.subr.mxu0 0.0
  %3649 = vmatpush1.msra.mxu0 0.0
  %3650 = vmatprep.subr.mxu0 0.0
  %3651 = vmatpush1.msra.mxu0 0.0
  %3652 = vmatprep.subr.mxu0 0.0
  %3653 = vmatpush1.msra.mxu0 0.0
  %3654 = vmatprep.subr.mxu0 0.0
  %3655 = vmatpush1.msra.mxu0 0.0
  %3656 = vmatprep.subr.mxu0 0.0
  %3657 = vmatpush1.msra.mxu0 %v1337
  %3658 = vmatprep.subr.mxu0 0.0
  %3659 = vmatpush1.msra.mxu0 %v1336
  %3660 = vmatprep.subr.mxu0 0.0
  %3661 = vmatpush2.msra.mxu0 0.0
  %3662 = vmatprep.subr.mxu0 0.0
  %3663 = vmatpush2.msra.mxu0 0.0
  %3664 = vmatprep.subr.mxu0 0.0
  %3665 = vmatpush2.msra.mxu0 0.0
  %3666 = vmatprep.subr.mxu0 0.0
  %3667 = vmatpush2.msra.mxu0 0.0
  %3668 = vmatprep.subr.mxu0 0.0
  %3669 = vmatpush2.msra.mxu0 0.0
  %3670 = vmatprep.subr.mxu0 0.0
  %3671 = vmatpush2.msra.mxu0 0.0
  %3672 = vmatprep.subr.mxu0 0.0
  %3673 = vmatpush2.msra.mxu0 0.0
  %3674 = vmatprep.subr.mxu0 0.0
  %3675 = vmatpush2.msra.mxu0 0.0
  %3676 = vmatprep.subr.mxu0 0.0
  %3677 = vmatpush2.msra.mxu0 0.0
  %3678 = vmatprep.subr.mxu0 0.0
  %3679 = vmatpush2.msra.mxu0 0.0
  %3680 = vmatprep.subr.mxu0 0.0
  %3681 = vmatpush2.msra.mxu0 0.0
  %3682 = vmatprep.subr.mxu0 0.0
  %3683 = vmatpush2.msra.mxu0 0.0
  %3684 = vmatprep.subr.mxu0 0.0
  %3685 = vmatpush2.msra.mxu0 0.0
  %3686 = vmatprep.subr.mxu0 0.0
  %3687 = vmatpush2.msra.mxu0 0.0
  %3688 = vmatprep.subr.mxu0 0.0
  %3689 = vmatpush2.msra.mxu0 0.0
  %3690 = vmatprep.subr.mxu0 0.0
  %3691 = vmatpush2.msra.mxu0 0.0
  %3692 = vmatprep.mubr.f32.mxu0 0.0
  %3693 = vmatmul.mubr.f32.gmra.mxu0 %v3620
  %v3694 = vpop.f32.mrf.mxu0
  %v3695 = vadd.f32 0.0, %v3694
  %v3696 = vpop.f32.mrf.mxu0
  %3697 = vmatprep.mubr.f32.mxu0 0.0
  %3698 = vmatmul.mubr.f32.gmra.mxu0 %v3622
  %v3699 = vpop.f32.mrf.mxu0
  %v3700 = vadd.f32 0.0, %v3699
  %v3701 = vpop.f32.mrf.mxu0
  %3702 = vmatprep.mubr.f32.mxu0 0.0
  %3703 = vmatmul.mubr.f32.gmra.mxu0 %v3624
  %v3704 = vpop.f32.mrf.mxu0
  %v3705 = vadd.f32 0.0, %v3704
  %v3706 = vpop.f32.mrf.mxu0
  %3707 = vmatprep.mubr.f32.mxu0 0.0
  %3708 = vmatmul.mubr.f32.gmra.mxu0 %v3626
  %v3709 = vpop.f32.mrf.mxu0
  %v3710 = vadd.f32 0.0, %v3709
  %v3711 = vpop.f32.mrf.mxu0
  %3712 = vdwg.mxu0
  %v3713 = vadd.f32 %v3606, %v3695
  %v3714 = vadd.f32 %v3607, %v3700
  %v3715 = vadd.f32 %v2595, %v3705
  %v3716 = vadd.f32 %v2596, %v3710
  %v3718 = vsel %vm669, %v3602, 0
  %v3721 = vsel %vm669, %v3603, 0
  %v3724 = vsel %vm669, %v3604, 0
  %v3727 = vsel %vm669, %v3605, 0
  %3729 = vmatprep.subr.mxu0 0.0
  %3730 = vmatpush1.msra.mxu0 0.0
  %3731 = vmatprep.subr.mxu0 0.0
  %3732 = vmatpush1.msra.mxu0 0.0
  %3733 = vmatprep.subr.mxu0 0.0
  %3734 = vmatpush1.msra.mxu0 0.0
  %3735 = vmatprep.subr.mxu0 0.0
  %3736 = vmatpush1.msra.mxu0 0.0
  %3737 = vmatprep.subr.mxu0 0.0
  %3738 = vmatpush1.msra.mxu0 0.0
  %3739 = vmatprep.subr.mxu0 0.0
  %3740 = vmatpush1.msra.mxu0 0.0
  %3741 = vmatprep.subr.mxu0 0.0
  %3742 = vmatpush1.msra.mxu0 0.0
  %3743 = vmatprep.subr.mxu0 0.0
  %3744 = vmatpush1.msra.mxu0 0.0
  %3745 = vmatprep.subr.mxu0 0.0
  %3746 = vmatpush1.msra.mxu0 0.0
  %3747 = vmatprep.subr.mxu0 0.0
  %3748 = vmatpush1.msra.mxu0 0.0
  %3749 = vmatprep.subr.mxu0 0.0
  %3750 = vmatpush1.msra.mxu0 0.0
  %3751 = vmatprep.subr.mxu0 0.0
  %3752 = vmatpush1.msra.mxu0 0.0
  %3753 = vmatprep.subr.mxu0 0.0
  %3754 = vmatpush1.msra.mxu0 %v3716
  %3755 = vmatprep.subr.mxu0 0.0
  %3756 = vmatpush1.msra.mxu0 %v3715
  %3757 = vmatprep.subr.mxu0 0.0
  %3758 = vmatpush1.msra.mxu0 %v3714
  %3759 = vmatprep.subr.mxu0 0.0
  %3760 = vmatpush1.msra.mxu0 %v3713
  %3761 = vmatprep.subr.mxu0 0.0
  %3762 = vmatpush2.msra.mxu0 0.0
  %3763 = vmatprep.subr.mxu0 0.0
  %3764 = vmatpush2.msra.mxu0 0.0
  %3765 = vmatprep.subr.mxu0 0.0
  %3766 = vmatpush2.msra.mxu0 0.0
  %3767 = vmatprep.subr.mxu0 0.0
  %3768 = vmatpush2.msra.mxu0 0.0
  %3769 = vmatprep.subr.mxu0 0.0
  %3770 = vmatpush2.msra.mxu0 0.0
  %3771 = vmatprep.subr.mxu0 0.0
  %3772 = vmatpush2.msra.mxu0 0.0
  %3773 = vmatprep.subr.mxu0 0.0
  %3774 = vmatpush2.msra.mxu0 0.0
  %3775 = vmatprep.subr.mxu0 0.0
  %3776 = vmatpush2.msra.mxu0 0.0
  %3777 = vmatprep.subr.mxu0 0.0
  %3778 = vmatpush2.msra.mxu0 0.0
  %3779 = vmatprep.subr.mxu0 0.0
  %3780 = vmatpush2.msra.mxu0 0.0
  %3781 = vmatprep.subr.mxu0 0.0
  %3782 = vmatpush2.msra.mxu0 0.0
  %3783 = vmatprep.subr.mxu0 0.0
  %3784 = vmatpush2.msra.mxu0 0.0
  %3785 = vmatprep.subr.mxu0 0.0
  %3786 = vmatpush2.msra.mxu0 0.0
  %3787 = vmatprep.subr.mxu0 0.0
  %3788 = vmatpush2.msra.mxu0 0.0
  %3789 = vmatprep.subr.mxu0 0.0
  %3790 = vmatpush2.msra.mxu0 0.0
  %3791 = vmatprep.subr.mxu0 0.0
  %3792 = vmatpush2.msra.mxu0 0.0
  %3793 = vmatprep.mubr.f32.mxu0 0.0
  %3794 = vmatmul.mubr.f32.gmra.mxu0 %v3718
  %v3795 = vpop.f32.mrf.mxu0
  %v3796 = vadd.f32 0.0, %v3795
  %v3797 = vpop.f32.mrf.mxu0
  %3798 = vmatprep.mubr.f32.mxu0 0.0
  %3799 = vmatmul.mubr.f32.gmra.mxu0 %v3721
  %v3800 = vpop.f32.mrf.mxu0
  %v3801 = vadd.f32 0.0, %v3800
  %v3802 = vpop.f32.mrf.mxu0
  %3803 = vmatprep.mubr.f32.mxu0 0.0
  %3804 = vmatmul.mubr.f32.gmra.mxu0 %v3724
  %v3805 = vpop.f32.mrf.mxu0
  %v3806 = vadd.f32 0.0, %v3805
  %v3807 = vpop.f32.mrf.mxu0
  %3808 = vmatprep.mubr.f32.mxu0 0.0
  %3809 = vmatmul.mubr.f32.gmra.mxu0 %v3727
  %v3810 = vpop.f32.mrf.mxu0
  %v3811 = vadd.f32 0.0, %v3810
  %v3812 = vpop.f32.mrf.mxu0
  %3813 = vdwg.mxu0
  %v3814 = vmax.f32 %v3796, 0.0
  %v3815 = vmax.f32 %v3801, 0.0
  %v3816 = vmax.f32 %v3806, 0.0
  %v3817 = vmax.f32 %v3811, 0.0
  %3818 = vmatprep.subr.mxu0 0.0
  %3819 = vmatpush1.msra.mxu0 0.0
  %3820 = vmatprep.subr.mxu0 0.0
  %3821 = vmatpush1.msra.mxu0 0.0
  %3822 = vmatprep.subr.mxu0 0.0
  %3823 = vmatpush1.msra.mxu0 0.0
  %3824 = vmatprep.subr.mxu0 0.0
  %3825 = vmatpush1.msra.mxu0 0.0
  %3826 = vmatprep.subr.mxu0 0.0
  %3827 = vmatpush1.msra.mxu0 0.0
  %3828 = vmatprep.subr.mxu0 0.0
  %3829 = vmatpush1.msra.mxu0 0.0
  %3830 = vmatprep.subr.mxu0 0.0
  %3831 = vmatpush1.msra.mxu0 0.0
  %3832 = vmatprep.subr.mxu0 0.0
  %3833 = vmatpush1.msra.mxu0 0.0
  %3834 = vmatprep.subr.mxu0 0.0
  %3835 = vmatpush1.msra.mxu0 0.0
  %3836 = vmatprep.subr.mxu0 0.0
  %3837 = vmatpush1.msra.mxu0 0.0
  %3838 = vmatprep.subr.mxu0 0.0
  %3839 = vmatpush1.msra.mxu0 0.0
  %3840 = vmatprep.subr.mxu0 0.0
  %3841 = vmatpush1.msra.mxu0 0.0
  %3842 = vmatprep.subr.mxu0 0.0
  %3843 = vmatpush1.msra.mxu0 %v3817
  %3844 = vmatprep.subr.mxu0 0.0
  %3845 = vmatpush1.msra.mxu0 %v3816
  %3846 = vmatprep.subr.mxu0 0.0
  %3847 = vmatpush1.msra.mxu0 %v3815
  %3848 = vmatprep.subr.mxu0 0.0
  %3849 = vmatpush1.msra.mxu0 %v3814
  %3850 = vmatprep.subr.mxu0 0.0
  %3851 = vmatpush2.msra.mxu0 0.0
  %3852 = vmatprep.subr.mxu0 0.0
  %3853 = vmatpush2.msra.mxu0 0.0
  %3854 = vmatprep.subr.mxu0 0.0
  %3855 = vmatpush2.msra.mxu0 0.0
  %3856 = vmatprep.subr.mxu0 0.0
  %3857 = vmatpush2.msra.mxu0 0.0
  %3858 = vmatprep.subr.mxu0 0.0
  %3859 = vmatpush2.msra.mxu0 0.0
  %3860 = vmatprep.subr.mxu0 0.0
  %3861 = vmatpush2.msra.mxu0 0.0
  %3862 = vmatprep.subr.mxu0 0.0
  %3863 = vmatpush2.msra.mxu0 0.0
  %3864 = vmatprep.subr.mxu0 0.0
  %3865 = vmatpush2.msra.mxu0 0.0
  %3866 = vmatprep.subr.mxu0 0.0
  %3867 = vmatpush2.msra.mxu0 0.0
  %3868 = vmatprep.subr.mxu0 0.0
  %3869 = vmatpush2.msra.mxu0 0.0
  %3870 = vmatprep.subr.mxu0 0.0
  %3871 = vmatpush2.msra.mxu0 0.0
  %3872 = vmatprep.subr.mxu0 0.0
  %3873 = vmatpush2.msra.mxu0 0.0
  %3874 = vmatprep.subr.mxu0 0.0
  %3875 = vmatpush2.msra.mxu0 0.0
  %3876 = vmatprep.subr.mxu0 0.0
  %3877 = vmatpush2.msra.mxu0 0.0
  %3878 = vmatprep.subr.mxu0 0.0
  %3879 = vmatpush2.msra.mxu0 0.0
  %3880 = vmatprep.subr.mxu0 0.0
  %3881 = vmatpush2.msra.mxu0 0.0
  %3882 = vmatprep.mubr.f32.mxu0 0.0
  %3883 = vmatmul.mubr.f32.gmra.mxu0 %v3229
  %v3884 = vpop.f32.mrf.mxu0
  %v3885 = vadd.f32 1e-06, %v3884
  %v3886 = vpop.f32.mrf.mxu0
  %3887 = vmatprep.mubr.f32.mxu0 0.0
  %3888 = vmatmul.mubr.f32.gmra.mxu0 %v3232
  %v3889 = vpop.f32.mrf.mxu0
  %v3890 = vadd.f32 1e-06, %v3889
  %v3891 = vpop.f32.mrf.mxu0
  %3892 = vmatprep.mubr.f32.mxu0 0.0
  %3893 = vmatmul.mubr.f32.gmra.mxu0 %v3235
  %v3894 = vpop.f32.mrf.mxu0
  %v3895 = vadd.f32 1e-06, %v3894
  %v3896 = vpop.f32.mrf.mxu0
  %3897 = vmatprep.mubr.f32.mxu0 0.0
  %3898 = vmatmul.mubr.f32.gmra.mxu0 %v3238
  %v3899 = vpop.f32.mrf.mxu0
  %v3900 = vadd.f32 1e-06, %v3899
  %v3901 = vpop.f32.mrf.mxu0
  %3902 = vdwg.mxu0
  %v3903 = vrcp.pop %v3885
  %v3904 = vmul.f32 %v3814, %v3903
  %v3905 = vrcp.pop %v3890
  %v3906 = vmul.f32 %v3815, %v3905
  %v3907 = vrcp.pop %v3895
  %v3908 = vmul.f32 %v3816, %v3907
  %v3909 = vrcp.pop %v3900
  %v3910 = vmul.f32 %v3817, %v3909
  %vm3911 = vcmp.gt.f32.partialorder %v3904, 20.0
  %vm3912 = vcmp.gt.f32.partialorder %v3906, 20.0
  %vm3913 = vcmp.gt.f32.partialorder %v3908, 20.0
  %vm3914 = vcmp.gt.f32.partialorder %v3910, 20.0
  %v3915 = vmin.f32 %v3904, 20.0
  %v3916 = vmin.f32 %v3906, 20.0
  %v3917 = vmin.f32 %v3908, 20.0
  %v3918 = vmin.f32 %v3910, 20.0
  %v3919 = vmul.f32 %v3915, 1.442695
  %v3920 = vpow.pop %v3919
  %v3921 = vmul.f32 %v3916, 1.442695
  %v3922 = vpow.pop %v3921
  %v3923 = vmul.f32 %v3917, 1.442695
  %v3924 = vpow.pop %v3923
  %v3925 = vmul.f32 %v3918, 1.442695
  %v3926 = vpow.pop %v3925
  %v3927 = vadd.f32 %v3920, 1.0
  %v3928 = vlog2.pop %v3927
  %v3929 = vmul.f32 %v3928, 0.6931472
  %v3930 = vmul.f32 -0.5, %v3920
  %v3931 = vadd.f32 %v3930, 1.0
  %v3932 = vmul.f32 %v3931, %v3920
  %v3933 = vand.u32 2147483647, %v3920
  %vm3934 = vcmp.lt.f32.partialorder %v3933, 0.0004427343
  %v3935 = vsel %vm3934, %v3932, %v3929
  %v3936 = vadd.f32 %v3922, 1.0
  %v3937 = vlog2.pop %v3936
  %v3938 = vmul.f32 %v3937, 0.6931472
  %v3939 = vmul.f32 -0.5, %v3922
  %v3940 = vadd.f32 %v3939, 1.0
  %v3941 = vmul.f32 %v3940, %v3922
  %v3942 = vand.u32 2147483647, %v3922
  %vm3943 = vcmp.lt.f32.partialorder %v3942, 0.0004427343
  %v3944 = vsel %vm3943, %v3941, %v3938
  %v3945 = vadd.f32 %v3924, 1.0
  %v3946 = vlog2.pop %v3945
  %v3947 = vmul.f32 %v3946, 0.6931472
  %v3948 = vmul.f32 -0.5, %v3924
  %v3949 = vadd.f32 %v3948, 1.0
  %v3950 = vmul.f32 %v3949, %v3924
  %v3951 = vand.u32 2147483647, %v3924
  %vm3952 = vcmp.lt.f32.partialorder %v3951, 0.0004427343
  %v3953 = vsel %vm3952, %v3950, %v3947
  %v3954 = vadd.f32 %v3926, 1.0
  %v3955 = vlog2.pop %v3954
  %v3956 = vmul.f32 %v3955, 0.6931472
  %v3957 = vmul.f32 -0.5, %v3926
  %v3958 = vadd.f32 %v3957, 1.0
  %v3959 = vmul.f32 %v3958, %v3926
  %v3960 = vand.u32 2147483647, %v3926
  %vm3961 = vcmp.lt.f32.partialorder %v3960, 0.0004427343
  %v3962 = vsel %vm3961, %v3959, %v3956
  %v3963 = vsel %vm3911, %v3904, %v3935
  %v3964 = vsel %vm3912, %v3906, %v3944
  %v3965 = vsel %vm3913, %v3908, %v3953
  %v3966 = vsel %vm3914, %v3910, %v3962
  %v3968 = vsel %vm669, %v3963, 0
  %v3971 = vsel %vm669, %v3964, 0
  %v3974 = vsel %vm669, %v3965, 0
  %v3977 = vsel %vm669, %v3966, 0
  %3979 = vmatprep.subr.mxu0 0.0
  %3980 = vmatpush1.msra.mxu0 0.0
  %3981 = vmatprep.subr.mxu0 0.0
  %3982 = vmatpush1.msra.mxu0 0.0
  %3983 = vmatprep.subr.mxu0 0.0
  %3984 = vmatpush1.msra.mxu0 0.0
  %3985 = vmatprep.subr.mxu0 0.0
  %3986 = vmatpush1.msra.mxu0 0.0
  %3987 = vmatprep.subr.mxu0 0.0
  %3988 = vmatpush1.msra.mxu0 0.0
  %3989 = vmatprep.subr.mxu0 0.0
  %3990 = vmatpush1.msra.mxu0 0.0
  %3991 = vmatprep.subr.mxu0 0.0
  %3992 = vmatpush1.msra.mxu0 0.0
  %3993 = vmatprep.subr.mxu0 0.0
  %3994 = vmatpush1.msra.mxu0 0.0
  %3995 = vmatprep.subr.mxu0 0.0
  %3996 = vmatpush1.msra.mxu0 0.0
  %3997 = vmatprep.subr.mxu0 0.0
  %3998 = vmatpush1.msra.mxu0 0.0
  %3999 = vmatprep.subr.mxu0 0.0
  %4000 = vmatpush1.msra.mxu0 0.0
  %4001 = vmatprep.subr.mxu0 0.0
  %4002 = vmatpush1.msra.mxu0 0.0
  %4003 = vmatprep.subr.mxu0 0.0
  %4004 = vmatpush1.msra.mxu0 %v3014
  %4005 = vmatprep.subr.mxu0 0.0
  %4006 = vmatpush1.msra.mxu0 %v3013
  %4007 = vmatprep.subr.mxu0 0.0
  %4008 = vmatpush1.msra.mxu0 %v3012
  %4009 = vmatprep.subr.mxu0 0.0
  %4010 = vmatpush1.msra.mxu0 %v3011
  %4011 = vmatprep.subr.mxu0 0.0
  %4012 = vmatpush2.msra.mxu0 0.0
  %4013 = vmatprep.subr.mxu0 0.0
  %4014 = vmatpush2.msra.mxu0 0.0
  %4015 = vmatprep.subr.mxu0 0.0
  %4016 = vmatpush2.msra.mxu0 0.0
  %4017 = vmatprep.subr.mxu0 0.0
  %4018 = vmatpush2.msra.mxu0 0.0
  %4019 = vmatprep.subr.mxu0 0.0
  %4020 = vmatpush2.msra.mxu0 0.0
  %4021 = vmatprep.subr.mxu0 0.0
  %4022 = vmatpush2.msra.mxu0 0.0
  %4023 = vmatprep.subr.mxu0 0.0
  %4024 = vmatpush2.msra.mxu0 0.0
  %4025 = vmatprep.subr.mxu0 0.0
  %4026 = vmatpush2.msra.mxu0 0.0
  %4027 = vmatprep.subr.mxu0 0.0
  %4028 = vmatpush2.msra.mxu0 0.0
  %4029 = vmatprep.subr.mxu0 0.0
  %4030 = vmatpush2.msra.mxu0 0.0
  %4031 = vmatprep.subr.mxu0 0.0
  %4032 = vmatpush2.msra.mxu0 0.0
  %4033 = vmatprep.subr.mxu0 0.0
  %4034 = vmatpush2.msra.mxu0 0.0
  %4035 = vmatprep.subr.mxu0 0.0
  %4036 = vmatpush2.msra.mxu0 0.0
  %4037 = vmatprep.subr.mxu0 0.0
  %4038 = vmatpush2.msra.mxu0 0.0
  %4039 = vmatprep.subr.mxu0 0.0
  %4040 = vmatpush2.msra.mxu0 0.0
  %4041 = vmatprep.subr.mxu0 0.0
  %4042 = vmatpush2.msra.mxu0 0.0
  %4043 = vmatprep.mubr.f32.mxu0 0.0
  %4044 = vmatmul.mubr.f32.gmra.mxu0 %v3968
  %v4045 = vpop.f32.mrf.mxu0
  %v4046 = vadd.f32 %v3392, %v4045
  %v4047 = vpop.f32.mrf.mxu0
  %4048 = vmatprep.mubr.f32.mxu0 0.0
  %4049 = vmatmul.mubr.f32.gmra.mxu0 %v3971
  %v4050 = vpop.f32.mrf.mxu0
  %v4051 = vadd.f32 %v3392, %v4050
  %v4052 = vpop.f32.mrf.mxu0
  %4053 = vmatprep.mubr.f32.mxu0 0.0
  %4054 = vmatmul.mubr.f32.gmra.mxu0 %v3974
  %v4055 = vpop.f32.mrf.mxu0
  %v4056 = vadd.f32 %v3392, %v4055
  %v4057 = vpop.f32.mrf.mxu0
  %4058 = vmatprep.mubr.f32.mxu0 0.0
  %4059 = vmatmul.mubr.f32.gmra.mxu0 %v3977
  %v4060 = vpop.f32.mrf.mxu0
  %v4061 = vadd.f32 %v3392, %v4060
  %v4062 = vpop.f32.mrf.mxu0
  %4063 = vdwg.mxu0
  %v4064 = vxor.u32 %v4046, 2147483648
  %v4065 = vxor.u32 %v4051, 2147483648
  %v4066 = vxor.u32 %v4056, 2147483648
  %v4067 = vxor.u32 %v4061, 2147483648
  %v4068 = vmul.f32 %v4064, 1.442695
  %v4069 = vpow.pop %v4068
  %v4070 = vmul.f32 %v4065, 1.442695
  %v4071 = vpow.pop %v4070
  %v4072 = vmul.f32 %v4066, 1.442695
  %v4073 = vpow.pop %v4072
  %v4074 = vmul.f32 %v4067, 1.442695
  %v4075 = vpow.pop %v4074
  %v4076 = vadd.f32 %v4069, 1.0
  %v4077 = vadd.f32 %v4071, 1.0
  %v4078 = vadd.f32 %v4073, 1.0
  %v4079 = vadd.f32 %v4075, 1.0
  %v4080 = vrcp.pop %v4076
  %v4081 = vmul.f32 1.0, %v4080
  %v4082 = vrcp.pop %v4077
  %v4083 = vmul.f32 1.0, %v4082
  %v4084 = vrcp.pop %v4078
  %v4085 = vmul.f32 1.0, %v4084
  %v4086 = vrcp.pop %v4079
  %v4087 = vmul.f32 1.0, %v4086
  %v4088 = vmax.f32 %v4046, 0.0
  %v4089 = vmax.f32 %v4051, 0.0
  %v4090 = vmax.f32 %v4056, 0.0
  %v4091 = vmax.f32 %v4061, 0.0
  %v4092 = vmul.f32 %v4081, %v3574
  %v4093 = vmul.f32 %v4083, %v3575
  %v4094 = vmul.f32 %v4085, %v3576
  %v4095 = vmul.f32 %v4087, %v3577
  %4100 = vrot.lane.b32.xlu0 %v4088, 80
  %v4101 = vpop.permute.xlu0 %4100
  %4102 = vrot.lane.b32.xlu0 %v4089, 80
  %v4103 = vpop.permute.xlu0 %4102
  %4104 = vrot.lane.b32.xlu0 %v4090, 80
  %v4105 = vpop.permute.xlu0 %4104
  %4106 = vrot.lane.b32.xlu0 %v4091, 80
  %v4107 = vpop.permute.xlu0 %4106
  %v4112 = vmul.f32 %v4081, %v4101
  %v4113 = vmul.f32 %v4083, %v4103
  %v4114 = vmul.f32 %v4085, %v4105
  %v4115 = vmul.f32 %v4087, %v4107
  %4120 = vrot.lane.b32.xlu0 %v4112, 16
  %v4121 = vpop.permute.xlu0 %4120
  %4122 = vrot.lane.b32.xlu0 %v4113, 16
  %v4123 = vpop.permute.xlu0 %4122
  %4124 = vrot.lane.b32.xlu0 %v4114, 16
  %v4125 = vpop.permute.xlu0 %4124
  %4126 = vrot.lane.b32.xlu0 %v4115, 16
  %v4127 = vpop.permute.xlu0 %4126
  %v4132 = vadd.f32 %v4092, %v4121
  %v4133 = vadd.f32 %v4093, %v4123
  %v4134 = vadd.f32 %v4094, %v4125
  %v4135 = vadd.f32 %v4095, %v4127
  %v4136 = vtanh.pop %v4132
  %v4137 = vtanh.pop %v4133
  %v4138 = vtanh.pop %v4134
  %v4139 = vtanh.pop %v4135
  %4144 = vrot.lane.b32.xlu0 %v4136, 16
  %v4145 = vpop.permute.xlu0 %4144
  %4146 = vrot.lane.b32.xlu0 %v4137, 16
  %v4147 = vpop.permute.xlu0 %4146
  %4148 = vrot.lane.b32.xlu0 %v4138, 16
  %v4149 = vpop.permute.xlu0 %4148
  %4150 = vrot.lane.b32.xlu0 %v4139, 16
  %v4151 = vpop.permute.xlu0 %4150
  %v4156 = vmul.f32 %v4081, %v4145
  %v4157 = vmul.f32 %v4083, %v4147
  %v4158 = vmul.f32 %v4085, %v4149
  %v4159 = vmul.f32 %v4087, %v4151
  %4162 = vrot.lane.b32.xlu0 %v3001, 96
  %v4163 = vpop.permute.xlu0 %4162
  %4164 = vrot.lane.b32.xlu0 %v3002, 96
  %v4165 = vpop.permute.xlu0 %4164
  %4170 = vrot.lane.b32.xlu0 %v4156, 112
  %v4171 = vpop.permute.xlu0 %4170
  %4172 = vrot.lane.b32.xlu0 %v4157, 112
  %v4173 = vpop.permute.xlu0 %4172
  %v4176 = vsel %vm1012, %v4163, %v4171
  %v4177 = vsel %vm1012, %v4165, %v4173
  %v4178 = vsel %vm669, %v4176, %v4158
  %v4179 = vsel %vm669, %v4177, %v4159
  %v4180 = vld [vmem:[%s3 + $0x238] sm:$0xff]
  %v4181 = vld [vmem:[%s3 + $0x240] sm:$0xff]
  %v4182 = vld [vmem:[%s3 + $0x248] sm:$0xff]
  %v4183 = vld [vmem:[%s3 + $0x250] sm:$0xff]
  %v4184 = vld [vmem:[%s3 + $0x258] sm:$0xff]
  %v4185 = vld [vmem:[%s3 + $0x260] sm:$0xff]
  %v4186 = vld [vmem:[%s3 + $0x268] sm:$0x1]
  %v4187 = vlaneseq
  %v4188 = vshrl.u32 %v4187, 7
  %v4189 = vsub.s32 0, %v4188
  %v4190 = vrot.slane %v4186, %v4189
  %vm4191 = vcmask 392192
  %v4193 = vsel %vm4191, %v4178, 0
  %v4196 = vsel %vm4191, %v4179, 0
  %4198 = vmatprep.subr.mxu0 0.0
  %4199 = vmatpush1.msra.mxu0 0.0
  %4200 = vmatprep.subr.mxu0 0.0
  %4201 = vmatpush1.msra.mxu0 0.0
  %4202 = vmatprep.subr.mxu0 0.0
  %4203 = vmatpush1.msra.mxu0 0.0
  %4204 = vmatprep.subr.mxu0 0.0
  %4205 = vmatpush1.msra.mxu0 0.0
  %4206 = vmatprep.subr.mxu0 0.0
  %4207 = vmatpush1.msra.mxu0 0.0
  %4208 = vmatprep.subr.mxu0 0.0
  %4209 = vmatpush1.msra.mxu0 0.0
  %4210 = vmatprep.subr.mxu0 0.0
  %4211 = vmatpush1.msra.mxu0 0.0
  %4212 = vmatprep.subr.mxu0 0.0
  %4213 = vmatpush1.msra.mxu0 0.0
  %4214 = vmatprep.subr.mxu0 0.0
  %4215 = vmatpush1.msra.mxu0 0.0
  %4216 = vmatprep.subr.mxu0 0.0
  %4217 = vmatpush1.msra.mxu0 0.0
  %4218 = vmatprep.subr.mxu0 0.0
  %4219 = vmatpush1.msra.mxu0 %v4185
  %4220 = vmatprep.subr.mxu0 0.0
  %4221 = vmatpush1.msra.mxu0 %v4184
  %4222 = vmatprep.subr.mxu0 0.0
  %4223 = vmatpush1.msra.mxu0 %v4183
  %4224 = vmatprep.subr.mxu0 0.0
  %4225 = vmatpush1.msra.mxu0 %v4182
  %4226 = vmatprep.subr.mxu0 0.0
  %4227 = vmatpush1.msra.mxu0 %v4181
  %4228 = vmatprep.subr.mxu0 0.0
  %4229 = vmatpush1.msra.mxu0 %v4180
  %4230 = vmatprep.subr.mxu0 0.0
  %4231 = vmatpush2.msra.mxu0 0.0
  %4232 = vmatprep.subr.mxu0 0.0
  %4233 = vmatpush2.msra.mxu0 0.0
  %4234 = vmatprep.subr.mxu0 0.0
  %4235 = vmatpush2.msra.mxu0 0.0
  %4236 = vmatprep.subr.mxu0 0.0
  %4237 = vmatpush2.msra.mxu0 0.0
  %4238 = vmatprep.subr.mxu0 0.0
  %4239 = vmatpush2.msra.mxu0 0.0
  %4240 = vmatprep.subr.mxu0 0.0
  %4241 = vmatpush2.msra.mxu0 0.0
  %4242 = vmatprep.subr.mxu0 0.0
  %4243 = vmatpush2.msra.mxu0 0.0
  %4244 = vmatprep.subr.mxu0 0.0
  %4245 = vmatpush2.msra.mxu0 0.0
  %4246 = vmatprep.subr.mxu0 0.0
  %4247 = vmatpush2.msra.mxu0 0.0
  %4248 = vmatprep.subr.mxu0 0.0
  %4249 = vmatpush2.msra.mxu0 0.0
  %4250 = vmatprep.subr.mxu0 0.0
  %4251 = vmatpush2.msra.mxu0 0.0
  %4252 = vmatprep.subr.mxu0 0.0
  %4253 = vmatpush2.msra.mxu0 0.0
  %4254 = vmatprep.subr.mxu0 0.0
  %4255 = vmatpush2.msra.mxu0 0.0
  %4256 = vmatprep.subr.mxu0 0.0
  %4257 = vmatpush2.msra.mxu0 0.0
  %4258 = vmatprep.subr.mxu0 0.0
  %4259 = vmatpush2.msra.mxu0 0.0
  %4260 = vmatprep.subr.mxu0 0.0
  %4261 = vmatpush2.msra.mxu0 0.0
  %4262 = vmatprep.mubr.f32.mxu0 0.0
  %4263 = vmatmul.mubr.f32.gmra.mxu0 %v4193
  %v4264 = vpop.f32.mrf.mxu0
  %v4265 = vadd.f32 %v4190, %v4264
  %v4266 = vpop.f32.mrf.mxu0
  %4267 = vmatprep.mubr.f32.mxu0 0.0
  %4268 = vmatmul.mubr.f32.gmra.mxu0 %v4196
  %v4269 = vpop.f32.mrf.mxu0
  %v4270 = vadd.f32 %v4190, %v4269
  %v4271 = vpop.f32.mrf.mxu0
  %4272 = vdwg.mxu0
  %4273 = vst [vmem:[%s4] sm:$0xff] %v4265
  %4274 = vst [vmem:[%s4 + $0x8] sm:$0xff] %v4270
  // Predicated region
  $region18: #{forward.1} parent=0 // pred_check
    _
  $region19: #{forward.1} parent=0 // pred_check_branch
    %4276 = sbr.rel (0) target = $region21
  $region20: #{forward.1} parent=0 // pred_region
    _
  $region21: #{forward.1} parent=0 // pred_fallthru
    _
  // Predicated region
  $region22: #{forward.1} parent=0 // pred_check
    _
  $region23: #{forward.1} parent=0 // pred_check_branch
    %4278 = sbr.rel (0) target = $region25
  $region24: #{forward.1} parent=0 // pred_region
    _
  $region25: #{forward.1} parent=0 // pred_fallthru
    _

</llo_original>
